<compile_context>
chip_gen: v5e
topology: v5e:2x2
jax: 0.10.0
libtpu: 0.0.40
codegen_flags: <defaults>
</compile_context>

<pallas_src>
import numpy as np
import jax
import jax.numpy as jnp
from jax.experimental import pallas as pl
from jax.experimental.pallas import tpu as pltpu

EPS = 1e-5

# ---- fixed layer geometry (32x32x3 input, 5x5 convs, 2x2 pools, 1x1 head) ----
CIN, HIN, WIN = 3, 32, 32
KS1, COUT1 = 5, 6
HC1, WC1 = 28, 28          # conv1 output
HP1, WP1 = 14, 14          # after pool1
KS2, COUT2 = 5, 16
HC2, WC2 = 10, 10          # conv2 output
HP2, WP2 = 5, 5            # after pool2

LIN = WIN * CIN            # 96   input row-slab lanes   (channels fastest)
LC1 = WC1 * COUT1          # 168  conv1 row-slab lanes
LP1 = WP1 * COUT1          # 84   pooled-1 row-slab lanes
LC2 = WC2 * COUT2          # 160  conv2 row-slab lanes
LP2 = WP2 * COUT2          # 80   pooled-2 row-slab lanes

_CPARAMS = pltpu.CompilerParams(
    dimension_semantics=("parallel",),           # batch tiles are independent
    vmem_limit_bytes=48 * 1024 * 1024,           # fits v5e/v6e/v7x comfortably
)


# --------------------------------------------------------------------------
# Pallas kernels
# --------------------------------------------------------------------------
def _conv1_kernel(x_ref, wb_ref, b_ref, y_ref, st_ref):
    """conv1 (+bias) on a batch tile.

    x_ref : (Bt, 32, 96)      input rows, lanes = (w, cin) channels fastest
    wb_ref: (5, 96, 168)      banded weights, one slab per kh
    b_ref : (1, 168)          conv bias tiled over the 28 output columns
    y_ref : (Bt*28, 168)      raw conv1 rows, lanes = (j, cout)
    st_ref: (1, 2, 168)       per-tile BN partials: [sum ; centered sum of squares]
    """
    bt = x_ref.shape[0]
    rows = bt * HC1
    x = x_ref[...]
    acc = jnp.zeros((rows, LC1), jnp.float32)
    for kh in range(KS1):                                    # static unroll (5)
        xs = x[:, kh:kh + HC1, :].reshape(rows, LIN)
        acc = acc + jnp.dot(xs, wb_ref[kh], preferred_element_type=jnp.float32)
    y = acc + b_ref[...]
    y_ref[...] = y
    s = jnp.sum(y, axis=0, keepdims=True)                    # (1, 168)
    m = s * (1.0 / rows)
    q = jnp.sum((y - m) ** 2, axis=0, keepdims=True)         # centered (robust var)
    st_ref[...] = jnp.concatenate([s, q], axis=0).reshape(1, 2, LC1)


def _bn1_pool_conv2_kernel(y1_ref, sc_ref, sh_ref, se_ref, so_ref,
                           wb_ref, b_ref, y2_ref, st_ref):
    """BN1 (precomputed scale/shift) + ReLU + 2x2 maxpool + conv2 (+bias)."""
    bt = y1_ref.shape[0] // HC1
    a = jnp.maximum(y1_ref[...] * sc_ref[...] + sh_ref[...], 0.0)   # (Bt*28, 168)
    # W-direction pool half: gather even/odd column groups with exact 0/1
    # selection matmuls and take the elementwise max -> (Bt*28, 84)
    aw = jnp.maximum(
        jnp.dot(a, se_ref[...], preferred_element_type=jnp.float32),
        jnp.dot(a, so_ref[...], preferred_element_type=jnp.float32))
    # H-direction pool half: pairs of conv rows (lane dim unchanged)
    aw = aw.reshape(bt, HP1, 2, LP1)
    x2 = jnp.maximum(aw[:, :, 0, :], aw[:, :, 1, :])                # (Bt, 14, 84)

    rows = bt * HC2
    acc = jnp.zeros((rows, LC2), jnp.float32)
    for kh in range(KS2):                                    # static unroll (5)
        xs = x2[:, kh:kh + HC2, :].reshape(rows, LP1)
        acc = acc + jnp.dot(xs, wb_ref[kh], preferred_element_type=jnp.float32)
    y = acc + b_ref[...]
    y2_ref[...] = y
    s = jnp.sum(y, axis=0, keepdims=True)
    m = s * (1.0 / rows)
    q = jnp.sum((y - m) ** 2, axis=0, keepdims=True)
    st_ref[...] = jnp.concatenate([s, q], axis=0).reshape(1, 2, LC2)


def _bn2_pool_head_kernel(y2_ref, sc_ref, sh_ref, se_ref, so_ref,
                          w3b_ref, b3_ref, fold_ref, o_ref):
    """BN2 + ReLU + 2x2 maxpool + 1x1 conv3 + ReLU + global average pool."""
    bt = y2_ref.shape[0] // HC2
    nc = fold_ref.shape[1]
    a = jnp.maximum(y2_ref[...] * sc_ref[...] + sh_ref[...], 0.0)   # (Bt*10, 160)
    aw = jnp.maximum(
        jnp.dot(a, se_ref[...], preferred_element_type=jnp.float32),
        jnp.dot(a, so_ref[...], preferred_element_type=jnp.float32))  # (Bt*10, 80)
    aw = aw.reshape(bt, HP2, 2, LP2)
    xp = jnp.maximum(aw[:, :, 0, :], aw[:, :, 1, :])                # (Bt, 5, 80)
    xr = xp.reshape(bt * HP2, LP2)                                  # (Bt*5, 80)
    # block-diagonal 1x1 conv: lanes (jp, cin) -> (jp, cout), then ReLU
    z = jnp.maximum(
        jnp.dot(xr, w3b_ref[...], preferred_element_type=jnp.float32) + b3_ref[...],
        0.0)                                                        # (Bt*5, 5*nc)
    # global average pool: sum over the 5 rows / sample and the 5 lane groups
    zs = jnp.sum(z.reshape(bt, HP2, WP2 * nc), axis=1)              # (Bt, 5*nc)
    o_ref[...] = jnp.dot(zs, fold_ref[...],
                         preferred_element_type=jnp.float32) * (1.0 / (HP2 * WP2))


# --------------------------------------------------------------------------
# Constant-matrix builders (tiny, plain JAX / numpy)
# --------------------------------------------------------------------------
def _banded_conv_weight(w, w_out):
    """torch conv weight (Co, Ci, KH, KW) -> (KH, W_in*Ci, W_out*Co) banded slabs:
    slab kh maps an input row (lanes = Ci*r + ci) to a full conv output row
    (lanes = Co*j + co)."""
    co, ci, kh, kw = w.shape
    w_in = w_out + kw - 1
    wp = jnp.transpose(w, (2, 3, 1, 0)).astype(jnp.float32)          # (KH,KW,Ci,Co)
    eye = jnp.stack([jnp.eye(w_in, w_out, k=-k, dtype=jnp.float32)
                     for k in range(kw)], axis=0)                    # (KW,W_in,W_out)
    wb = jnp.einsum("wrj,hwio->hrijo", eye, wp)                      # (KH,W_in,Ci,W_out,Co)
    return wb.reshape(kh, w_in * ci, w_out * co)


def _pool_select_matrices(pairs, c):
    """0/1 matrices (2*pairs*c, pairs*c) gathering the even / odd column groups of
    a row-slab whose lanes are (column, channel) with channel fastest."""
    li, lo = 2 * pairs * c, pairs * c
    ci_col, ci_ch = np.arange(li) // c, np.arange(li) % c
    co_col, co_ch = np.arange(lo) // c, np.arange(lo) % c
    even = ((ci_col[:, None] == 2 * co_col[None, :]) &
            (ci_ch[:, None] == co_ch[None, :])).astype(np.float32)
    odd = ((ci_col[:, None] == 2 * co_col[None, :] + 1) &
           (ci_ch[:, None] == co_ch[None, :])).astype(np.float32)
    return jnp.asarray(even), jnp.asarray(odd)


def _blockdiag_1x1_weight(w3, groups):
    """torch (Co, Ci, 1, 1) -> (groups*Ci, groups*Co) block-diagonal 1x1-conv weight."""
    co, ci = w3.shape[0], w3.shape[1]
    wm = jnp.transpose(w3.reshape(co, ci)).astype(jnp.float32)       # (Ci, Co)
    eye = jnp.eye(groups, dtype=jnp.float32)
    return jnp.einsum("gh,io->giho", eye, wm).reshape(groups * ci, groups * co)


def _group_fold_matrix(groups, c):
    """(groups*c, c) 0/1 matrix summing the `groups` lane-groups channel-wise."""
    return jnp.asarray(np.tile(np.eye(c, dtype=np.float32), (groups, 1)))


def _bn_scale_shift(stats, rows_per_tile, w_out, gamma, beta):
    """Combine per-tile (sum, centered-sumsq) partials exactly (Chan's formula)
    into per-channel BN scale/shift, tiled back onto the row-slab lanes."""
    nt, _, lanes = stats.shape
    c = gamma.shape[0]
    s, q = stats[:, 0, :], stats[:, 1, :]
    n = nt * rows_per_tile * w_out                               # elems per channel
    sum_c = jnp.sum(s.reshape(nt, w_out, c), axis=(0, 1))
    mean_c = sum_c / n
    mean_l = jnp.tile(mean_c, w_out)
    m2 = q + rows_per_tile * (s / rows_per_tile - mean_l[None, :]) ** 2
    var_c = jnp.sum(m2.reshape(nt, w_out, c), axis=(0, 1)) / n   # biased (PyTorch train)
    scale_c = gamma * jax.lax.rsqrt(var_c + EPS)
    shift_c = beta - mean_c * scale_c
    return (jnp.tile(scale_c, w_out).reshape(1, lanes),
            jnp.tile(shift_c, w_out).reshape(1, lanes))


def _pick_batch_tile(b, target=32):
    """Batch tile: single tile for small batches; otherwise a multiple of 8 that
    divides b (keeps every block sublane-aligned)."""
    if b <= target:
        return b
    best = 0
    for t in range(8, target + 1, 8):
        if b % t == 0:
            best = t
    return best if best else b


# --------------------------------------------------------------------------
# Forward pass
# --------------------------------------------------------------------------
def gap_lenet_forward(x, params):
    """x: anything reshapeable to (B, 3, 32, 32), matching the torch view(-1,3,32,32)."""
    x = x.reshape(-1, CIN, HIN, WIN).astype(jnp.float32)
    b = x.shape[0]
    nc = params["w3"].shape[0]
    bt = _pick_batch_tile(b)
    nt = b // bt

    # NCHW -> NHWC -> merge (W, C) into the lane dim (channels fastest).
    xm = jnp.transpose(x, (0, 2, 3, 1)).reshape(b, HIN, LIN)

    wb1 = _banded_conv_weight(params["w1"], WC1)                     # (5, 96, 168)
    wb2 = _banded_conv_weight(params["w2"], WC2)                     # (5, 84, 160)
    b1t = jnp.tile(params["b1"], WC1).reshape(1, LC1)
    b2t = jnp.tile(params["b2"], WC2).reshape(1, LC2)
    se1, so1 = _pool_select_matrices(WP1, COUT1)                     # (168, 84)
    se2, so2 = _pool_select_matrices(WP2, COUT2)                     # (160, 80)
    w3b = _blockdiag_1x1_weight(params["w3"], WP2)                   # (80, 5*nc)
    b3t = jnp.tile(params["b3"], WP2).reshape(1, WP2 * nc)
    fold3 = _group_fold_matrix(WP2, nc)                              # (5*nc, nc)

    # ---- K1: conv1 -> raw rows + per-tile BN1 partials -------------------
    y1, st1 = pl.pallas_call(
        _conv1_kernel,
        grid=(nt,),
        in_specs=[pl.BlockSpec((bt, HIN, LIN), lambda t: (t, 0, 0)),
                  pl.BlockSpec((KS1, LIN, LC1), lambda t: (0, 0, 0)),
                  pl.BlockSpec((1, LC1), lambda t: (0, 0))],
        out_specs=[pl.BlockSpec((bt * HC1, LC1), lambda t: (t, 0)),
                   pl.BlockSpec((1, 2, LC1), lambda t: (t, 0, 0))],
        out_shape=[jax.ShapeDtypeStruct((b * HC1, LC1), jnp.float32),
                   jax.ShapeDtypeStruct((nt, 2, LC1), jnp.float32)],
        compiler_params=_CPARAMS,
    )(xm, wb1, b1t)
    sc1, sh1 = _bn_scale_shift(st1, bt * HC1, WC1, params["g1"], params["be1"])

    # ---- K2: BN1 + ReLU + pool + conv2 -> raw rows + BN2 partials --------
    y2, st2 = pl.pallas_call(
        _bn1_pool_conv2_kernel,
        grid=(nt,),
        in_specs=[pl.BlockSpec((bt * HC1, LC1), lambda t: (t, 0)),
                  pl.BlockSpec((1, LC1), lambda t: (0, 0)),
                  pl.BlockSpec((1, LC1), lambda t: (0, 0)),
                  pl.BlockSpec((LC1, LP1), lambda t: (0, 0)),
                  pl.BlockSpec((LC1, LP1), lambda t: (0, 0)),
                  pl.BlockSpec((KS2, LP1, LC2), lambda t: (0, 0, 0)),
                  pl.BlockSpec((1, LC2), lambda t: (0, 0))],
        out_specs=[pl.BlockSpec((bt * HC2, LC2), lambda t: (t, 0)),
                   pl.BlockSpec((1, 2, LC2), lambda t: (t, 0, 0))],
        out_shape=[jax.ShapeDtypeStruct((b * HC2, LC2), jnp.float32),
                   jax.ShapeDtypeStruct((nt, 2, LC2), jnp.float32)],
        compiler_params=_CPARAMS,
    )(y1, sc1, sh1, se1, so1, wb2, b2t)
    sc2, sh2 = _bn_scale_shift(st2, bt * HC2, WC2, params["g2"], params["be2"])

    # ---- K3: BN2 + ReLU + pool + 1x1 conv + ReLU + GAP -> (B, nc) --------
    out = pl.pallas_call(
        _bn2_pool_head_kernel,
        grid=(nt,),
        in_specs=[pl.BlockSpec((bt * HC2, LC2), lambda t: (t, 0)),
                  pl.BlockSpec((1, LC2), lambda t: (0, 0)),
                  pl.BlockSpec((1, LC2), lambda t: (0, 0)),
                  pl.BlockSpec((LC2, LP2), lambda t: (0, 0)),
                  pl.BlockSpec((LC2, LP2), lambda t: (0, 0)),
                  pl.BlockSpec((LP2, WP2 * nc), lambda t: (0, 0)),
                  pl.BlockSpec((1, WP2 * nc), lambda t: (0, 0)),
                  pl.BlockSpec((WP2 * nc, nc), lambda t: (0, 0))],
        out_specs=pl.BlockSpec((bt, nc), lambda t: (t, 0)),
        out_shape=jax.ShapeDtypeStruct((b, nc), jnp.float32),
        compiler_params=_CPARAMS,
    )(y2, sc2, sh2, se2, so2, w3b, b3t, fold3)
    return out


# --------------------------------------------------------------------------
# Pure-JAX reference (independent path) for a numerical sanity check
# --------------------------------------------------------------------------
def _ref_forward(x, params):
    hi = jax.lax.Precision.HIGHEST

    def conv(x, w, b):
        y = jax.lax.conv_general_dilated(
            x, w, (1, 1), "VALID",
            dimension_numbers=("NCHW", "OIHW", "NCHW"), precision=hi)
        return y + b.reshape(1, -1, 1, 1)

    def bn(x, g, be):
        mean = jnp.mean(x, axis=(0, 2, 3), keepdims=True)
        var = jnp.mean((x - mean) ** 2, axis=(0, 2, 3), keepdims=True)
        xn = (x - mean) * jax.lax.rsqrt(var + EPS)
        return xn * g.reshape(1, -1, 1, 1) + be.reshape(1, -1, 1, 1)

    def maxpool2(x):
        b, c, h, w = x.shape
        return x.reshape(b, c, h // 2, 2, w // 2, 2).max(axis=(3, 5))

    x = x.reshape(-1, 3, 32, 32)
    x = maxpool2(jax.nn.relu(bn(conv(x, params["w1"], params["b1"]),
                                params["g1"], params["be1"])))
    x = maxpool2(jax.nn.relu(bn(conv(x, params["w2"], params["b2"]),
                                params["g2"], params["be2"])))
    x = jax.nn.relu(conv(x, params["w3"], params["b3"]))
    return x.mean(axis=(2, 3))


# --------------------------------------------------------------------------
if __name__ == "__main__":
    batch = 2
    action_size = 10                       # num_classes

    key = jax.random.PRNGKey(0)
    kx, kw1, kb1, kw2, kb2, kw3, kb3 = jax.random.split(key, 7)

    def uinit(k, shape, fan_in):
        bound = 1.0 / float(np.sqrt(fan_in))
        return jax.random.uniform(k, shape, jnp.float32, -bound, bound)

    params = {
        # torch conv-weight layout (Co, Ci, kh, kw)
        "w1": uinit(kw1, (6, 3, 5, 5), 3 * 5 * 5),
        "b1": uinit(kb1, (6,), 3 * 5 * 5),
        "g1": jnp.ones((6,), jnp.float32),
        "be1": jnp.zeros((6,), jnp.float32),
        "w2": uinit(kw2, (16, 6, 5, 5), 6 * 5 * 5),
        "b2": uinit(kb2, (16,), 6 * 5 * 5),
        "g2": jnp.ones((16,), jnp.float32),
        "be2": jnp.zeros((16,), jnp.float32),
        "w3": uinit(kw3, (action_size, 16, 1, 1), 16),
        "b3": uinit(kb3, (action_size,), 16),
    }

    x = jax.random.normal(kx, (batch, 3, 32, 32), jnp.float32)

    out = jax.block_until_ready(jax.jit(gap_lenet_forward)(x, params))
    assert out.shape == (batch, action_size)
    assert bool(jnp.all(jnp.isfinite(out)))

    ref = jax.block_until_ready(_ref_forward(x, params))
    np.testing.assert_allclose(np.asarray(out), np.asarray(ref),
                               rtol=3e-3, atol=3e-3)

    print("KERNEL_OK")
</pallas_src>

<mosaic_0001>
module attributes {stable_mosaic.version = 11 : i64} {
  func.func @_conv1_kernel(%arg0: i32, %arg1: memref<2x32x96xf32, #tpu.memory_space<vmem>>, %arg2: memref<5x96x168xf32, #tpu.memory_space<vmem>>, %arg3: memref<1x168xf32, #tpu.memory_space<vmem>>, %arg4: memref<56x168xf32, #tpu.memory_space<vmem>>, %arg5: memref<1x2x168xf32, #tpu.memory_space<vmem>>) attributes {dimension_semantics = [#tpu.dimension_semantics<parallel>], iteration_bounds = array<i64: 1>, scalar_prefetch = 0 : i64, scratch_operands = 0 : i64, tpu.core_type = #tpu.core_type<tc>, window_params = [{transform_indices = @transform_0, window_bounds = array<i64: 2, 32, 96>}, {pipeline_mode = #tpu.pipeline_mode<synchronous>, transform_indices = @transform_1, window_bounds = array<i64: 5, 96, 168>}, {pipeline_mode = #tpu.pipeline_mode<synchronous>, transform_indices = @transform_2, window_bounds = array<i64: 1, 168>}, {transform_indices = @transform_3, window_bounds = array<i64: 56, 168>}, {transform_indices = @transform_4, window_bounds = array<i64: 1, 2, 168>}]} {
    %c0 = arith.constant 0 : index
    %c0_0 = arith.constant 0 : index
    %c0_1 = arith.constant 0 : index
    %0 = vector.load %arg1[%c0, %c0_0, %c0_1] : memref<2x32x96xf32, #tpu.memory_space<vmem>>, vector<2x32x96xf32>
    %cst = arith.constant 0.000000e+00 : f32
    %1 = vector.broadcast %cst : f32 to vector<56x168xf32>
    %2 = vector.extract_strided_slice %0 {offsets = [0, 0, 0], sizes = [2, 28, 96], strides = [1, 1, 1]} : vector<2x32x96xf32> to vector<2x28x96xf32>
    %3 = vector.shape_cast %2 : vector<2x28x96xf32> to vector<56x96xf32>
    %c0_2 = arith.constant 0 : index
    %c0_3 = arith.constant 0 : index
    %c0_4 = arith.constant 0 : index
    %4 = vector.load %arg2[%c0_2, %c0_3, %c0_4] : memref<5x96x168xf32, #tpu.memory_space<vmem>>, vector<1x96x168xf32>
    %5 = vector.shape_cast %4 : vector<1x96x168xf32> to vector<96x168xf32>
    %cst_5 = arith.constant dense<0.000000e+00> : vector<56x168xf32>
    %6 = tpu.matmul %3, %5, %cst_5 {dimension_numbers = #tpu.dot_dimension_numbers<[1], [0], [0], [1], [0, 0, 1, 1], [], []>} : vector<56x96xf32>, vector<96x168xf32>, vector<56x168xf32> -> vector<56x168xf32>
    %7 = arith.addf %1, %6 : vector<56x168xf32>
    %8 = vector.extract_strided_slice %0 {offsets = [0, 1, 0], sizes = [2, 28, 96], strides = [1, 1, 1]} : vector<2x32x96xf32> to vector<2x28x96xf32>
    %9 = vector.shape_cast %8 : vector<2x28x96xf32> to vector<56x96xf32>
    %c1 = arith.constant 1 : index
    %c0_6 = arith.constant 0 : index
    %c0_7 = arith.constant 0 : index
    %10 = vector.load %arg2[%c1, %c0_6, %c0_7] : memref<5x96x168xf32, #tpu.memory_space<vmem>>, vector<1x96x168xf32>
    %11 = vector.shape_cast %10 : vector<1x96x168xf32> to vector<96x168xf32>
    %cst_8 = arith.constant dense<0.000000e+00> : vector<56x168xf32>
    %12 = tpu.matmul %9, %11, %cst_8 {dimension_numbers = #tpu.dot_dimension_numbers<[1], [0], [0], [1], [0, 0, 1, 1], [], []>} : vector<56x96xf32>, vector<96x168xf32>, vector<56x168xf32> -> vector<56x168xf32>
    %13 = arith.addf %7, %12 : vector<56x168xf32>
    %14 = vector.extract_strided_slice %0 {offsets = [0, 2, 0], sizes = [2, 28, 96], strides = [1, 1, 1]} : vector<2x32x96xf32> to vector<2x28x96xf32>
    %15 = vector.shape_cast %14 : vector<2x28x96xf32> to vector<56x96xf32>
    %c2 = arith.constant 2 : index
    %c0_9 = arith.constant 0 : index
    %c0_10 = arith.constant 0 : index
    %16 = vector.load %arg2[%c2, %c0_9, %c0_10] : memref<5x96x168xf32, #tpu.memory_space<vmem>>, vector<1x96x168xf32>
    %17 = vector.shape_cast %16 : vector<1x96x168xf32> to vector<96x168xf32>
    %cst_11 = arith.constant dense<0.000000e+00> : vector<56x168xf32>
    %18 = tpu.matmul %15, %17, %cst_11 {dimension_numbers = #tpu.dot_dimension_numbers<[1], [0], [0], [1], [0, 0, 1, 1], [], []>} : vector<56x96xf32>, vector<96x168xf32>, vector<56x168xf32> -> vector<56x168xf32>
    %19 = arith.addf %13, %18 : vector<56x168xf32>
    %20 = vector.extract_strided_slice %0 {offsets = [0, 3, 0], sizes = [2, 28, 96], strides = [1, 1, 1]} : vector<2x32x96xf32> to vector<2x28x96xf32>
    %21 = vector.shape_cast %20 : vector<2x28x96xf32> to vector<56x96xf32>
    %c3 = arith.constant 3 : index
    %c0_12 = arith.constant 0 : index
    %c0_13 = arith.constant 0 : index
    %22 = vector.load %arg2[%c3, %c0_12, %c0_13] : memref<5x96x168xf32, #tpu.memory_space<vmem>>, vector<1x96x168xf32>
    %23 = vector.shape_cast %22 : vector<1x96x168xf32> to vector<96x168xf32>
    %cst_14 = arith.constant dense<0.000000e+00> : vector<56x168xf32>
    %24 = tpu.matmul %21, %23, %cst_14 {dimension_numbers = #tpu.dot_dimension_numbers<[1], [0], [0], [1], [0, 0, 1, 1], [], []>} : vector<56x96xf32>, vector<96x168xf32>, vector<56x168xf32> -> vector<56x168xf32>
    %25 = arith.addf %19, %24 : vector<56x168xf32>
    %26 = vector.extract_strided_slice %0 {offsets = [0, 4, 0], sizes = [2, 28, 96], strides = [1, 1, 1]} : vector<2x32x96xf32> to vector<2x28x96xf32>
    %27 = vector.shape_cast %26 : vector<2x28x96xf32> to vector<56x96xf32>
    %c4 = arith.constant 4 : index
    %c0_15 = arith.constant 0 : index
    %c0_16 = arith.constant 0 : index
    %28 = vector.load %arg2[%c4, %c0_15, %c0_16] : memref<5x96x168xf32, #tpu.memory_space<vmem>>, vector<1x96x168xf32>
    %29 = vector.shape_cast %28 : vector<1x96x168xf32> to vector<96x168xf32>
    %cst_17 = arith.constant dense<0.000000e+00> : vector<56x168xf32>
    %30 = tpu.matmul %27, %29, %cst_17 {dimension_numbers = #tpu.dot_dimension_numbers<[1], [0], [0], [1], [0, 0, 1, 1], [], []>} : vector<56x96xf32>, vector<96x168xf32>, vector<56x168xf32> -> vector<56x168xf32>
    %31 = arith.addf %25, %30 : vector<56x168xf32>
    %c0_18 = arith.constant 0 : index
    %c0_19 = arith.constant 0 : index
    %32 = vector.load %arg3[%c0_18, %c0_19] : memref<1x168xf32, #tpu.memory_space<vmem>>, vector<1x168xf32>
    %33 = vector.broadcast %32 : vector<1x168xf32> to vector<56x168xf32>
    %34 = arith.addf %31, %33 : vector<56x168xf32>
    %c0_20 = arith.constant 0 : index
    %c0_21 = arith.constant 0 : index
    %35 = vector.load %arg4[%c0_20, %c0_21] : memref<56x168xf32, #tpu.memory_space<vmem>>, vector<56x168xf32>
    tpu.vector_store %arg4[%c0_20, %c0_21], %34 {strides = array<i32>} : memref<56x168xf32, #tpu.memory_space<vmem>>, vector<56x168xf32>,
    %cst_22 = arith.constant dense<0.000000e+00> : vector<168xf32>
    %36 = vector.multi_reduction <add>, %34, %cst_22 [0] : vector<56x168xf32> to vector<168xf32>
    %37 = vector.shape_cast %36 : vector<168xf32> to vector<1x168xf32>
    %cst_23 = arith.constant 0.0178571437 : f32
    %38 = vector.broadcast %cst_23 : f32 to vector<1x168xf32>
    %39 = arith.mulf %37, %38 : vector<1x168xf32>
    %40 = vector.broadcast %39 : vector<1x168xf32> to vector<56x168xf32>
    %41 = arith.subf %34, %40 : vector<56x168xf32>
    %42 = arith.mulf %41, %41 : vector<56x168xf32>
    %cst_24 = arith.constant dense<0.000000e+00> : vector<168xf32>
    %43 = vector.multi_reduction <add>, %42, %cst_24 [0] : vector<56x168xf32> to vector<168xf32>
    %44 = vector.shape_cast %43 : vector<168xf32> to vector<1x168xf32>
    %45 = tpu.concatenate %37, %44 in 0 : vector<1x168xf32>, vector<1x168xf32> -> vector<2x168xf32>
    %46 = vector.shape_cast %45 : vector<2x168xf32> to vector<1x2x168xf32>
    %c0_25 = arith.constant 0 : index
    %c0_26 = arith.constant 0 : index
    %c0_27 = arith.constant 0 : index
    %47 = vector.load %arg5[%c0_25, %c0_26, %c0_27] : memref<1x2x168xf32, #tpu.memory_space<vmem>>, vector<1x2x168xf32>
    tpu.vector_store %arg5[%c0_25, %c0_26, %c0_27], %46 {strides = array<i32>} : memref<1x2x168xf32, #tpu.memory_space<vmem>>, vector<1x2x168xf32>,
    return
  }
  func.func @transform_0(%arg0: i32) -> (i32, i32, i32) {
    %c0_i32 = arith.constant 0 : i32
    %c0_i32_0 = arith.constant 0 : i32
    %c0_i32_1 = arith.constant 0 : i32
    return %arg0, %c0_i32, %c0_i32_0 : i32, i32, i32
  }
  func.func @transform_1(%arg0: i32) -> (i32, i32, i32) {
    %c0_i32 = arith.constant 0 : i32
    %c0_i32_0 = arith.constant 0 : i32
    %c0_i32_1 = arith.constant 0 : i32
    %c0_i32_2 = arith.constant 0 : i32
    return %c0_i32, %c0_i32_0, %c0_i32_1 : i32, i32, i32
  }
  func.func @transform_2(%arg0: i32) -> (i32, i32) {
    %c0_i32 = arith.constant 0 : i32
    %c0_i32_0 = arith.constant 0 : i32
    %c0_i32_1 = arith.constant 0 : i32
    return %c0_i32, %c0_i32_0 : i32, i32
  }
  func.func @transform_3(%arg0: i32) -> (i32, i32) {
    %c0_i32 = arith.constant 0 : i32
    %c0_i32_0 = arith.constant 0 : i32
    return %arg0, %c0_i32 : i32, i32
  }
  func.func @transform_4(%arg0: i32) -> (i32, i32, i32) {
    %c0_i32 = arith.constant 0 : i32
    %c0_i32_0 = arith.constant 0 : i32
    %c0_i32_1 = arith.constant 0 : i32
    return %arg0, %c0_i32, %c0_i32_0 : i32, i32, i32
  }
}

module attributes {stable_mosaic.version = 11 : i64} {
  func.func @_bn1_pool_conv2_kernel(%arg0: i32, %arg1: memref<56x168xf32, #tpu.memory_space<vmem>>, %arg2: memref<1x168xf32, #tpu.memory_space<vmem>>, %arg3: memref<1x168xf32, #tpu.memory_space<vmem>>, %arg4: memref<168x84xf32, #tpu.memory_space<vmem>>, %arg5: memref<168x84xf32, #tpu.memory_space<vmem>>, %arg6: memref<5x84x160xf32, #tpu.memory_space<vmem>>, %arg7: memref<1x160xf32, #tpu.memory_space<vmem>>, %arg8: memref<20x160xf32, #tpu.memory_space<vmem>>, %arg9: memref<1x2x160xf32, #tpu.memory_space<vmem>>) attributes {dimension_semantics = [#tpu.dimension_semantics<parallel>], iteration_bounds = array<i64: 1>, scalar_prefetch = 0 : i64, scratch_operands = 0 : i64, tpu.core_type = #tpu.core_type<tc>, window_params = [{transform_indices = @transform_0, window_bounds = array<i64: 56, 168>}, {pipeline_mode = #tpu.pipeline_mode<synchronous>, transform_indices = @transform_1, window_bounds = array<i64: 1, 168>}, {pipeline_mode = #tpu.pipeline_mode<synchronous>, transform_indices = @transform_2, window_bounds = array<i64: 1, 168>}, {pipeline_mode = #tpu.pipeline_mode<synchronous>, transform_indices = @transform_3, window_bounds = array<i64: 168, 84>}, {pipeline_mode = #tpu.pipeline_mode<synchronous>, transform_indices = @transform_4, window_bounds = array<i64: 168, 84>}, {pipeline_mode = #tpu.pipeline_mode<synchronous>, transform_indices = @transform_5, window_bounds = array<i64: 5, 84, 160>}, {pipeline_mode = #tpu.pipeline_mode<synchronous>, transform_indices = @transform_6, window_bounds = array<i64: 1, 160>}, {transform_indices = @transform_7, window_bounds = array<i64: 20, 160>}, {transform_indices = @transform_8, window_bounds = array<i64: 1, 2, 160>}]} {
    %c0 = arith.constant 0 : index
    %c0_0 = arith.constant 0 : index
    %0 = vector.load %arg1[%c0, %c0_0] : memref<56x168xf32, #tpu.memory_space<vmem>>, vector<56x168xf32>
    %c0_1 = arith.constant 0 : index
    %c0_2 = arith.constant 0 : index
    %1 = vector.load %arg2[%c0_1, %c0_2] : memref<1x168xf32, #tpu.memory_space<vmem>>, vector<1x168xf32>
    %2 = vector.broadcast %1 : vector<1x168xf32> to vector<56x168xf32>
    %3 = arith.mulf %0, %2 : vector<56x168xf32>
    %c0_3 = arith.constant 0 : index
    %c0_4 = arith.constant 0 : index
    %4 = vector.load %arg3[%c0_3, %c0_4] : memref<1x168xf32, #tpu.memory_space<vmem>>, vector<1x168xf32>
    %5 = vector.broadcast %4 : vector<1x168xf32> to vector<56x168xf32>
    %6 = arith.addf %3, %5 : vector<56x168xf32>
    %cst = arith.constant 0.000000e+00 : f32
    %7 = vector.broadcast %cst : f32 to vector<56x168xf32>
    %8 = arith.maximumf %6, %7 : vector<56x168xf32>
    %c0_5 = arith.constant 0 : index
    %c0_6 = arith.constant 0 : index
    %9 = vector.load %arg4[%c0_5, %c0_6] : memref<168x84xf32, #tpu.memory_space<vmem>>, vector<168x84xf32>
    %cst_7 = arith.constant dense<0.000000e+00> : vector<56x84xf32>
    %10 = tpu.matmul %8, %9, %cst_7 {dimension_numbers = #tpu.dot_dimension_numbers<[1], [0], [0], [1], [0, 0, 1, 1], [], []>} : vector<56x168xf32>, vector<168x84xf32>, vector<56x84xf32> -> vector<56x84xf32>
    %c0_8 = arith.constant 0 : index
    %c0_9 = arith.constant 0 : index
    %11 = vector.load %arg5[%c0_8, %c0_9] : memref<168x84xf32, #tpu.memory_space<vmem>>, vector<168x84xf32>
    %cst_10 = arith.constant dense<0.000000e+00> : vector<56x84xf32>
    %12 = tpu.matmul %8, %11, %cst_10 {dimension_numbers = #tpu.dot_dimension_numbers<[1], [0], [0], [1], [0, 0, 1, 1], [], []>} : vector<56x168xf32>, vector<168x84xf32>, vector<56x84xf32> -> vector<56x84xf32>
    %13 = arith.maximumf %10, %12 : vector<56x84xf32>
    %14 = vector.shape_cast %13 : vector<56x84xf32> to vector<2x14x2x84xf32>
    %15 = vector.extract_strided_slice %14 {offsets = [0, 0, 0, 0], sizes = [2, 14, 1, 84], strides = [1, 1, 1, 1]} : vector<2x14x2x84xf32> to vector<2x14x1x84xf32>
    %16 = vector.shape_cast %15 : vector<2x14x1x84xf32> to vector<2x14x84xf32>
    %17 = vector.extract_strided_slice %14 {offsets = [0, 0, 1, 0], sizes = [2, 14, 1, 84], strides = [1, 1, 1, 1]} : vector<2x14x2x84xf32> to vector<2x14x1x84xf32>
    %18 = vector.shape_cast %17 : vector<2x14x1x84xf32> to vector<2x14x84xf32>
    %19 = arith.maximumf %16, %18 : vector<2x14x84xf32>
    %cst_11 = arith.constant 0.000000e+00 : f32
    %20 = vector.broadcast %cst_11 : f32 to vector<20x160xf32>
    %21 = vector.extract_strided_slice %19 {offsets = [0, 0, 0], sizes = [2, 10, 84], strides = [1, 1, 1]} : vector<2x14x84xf32> to vector<2x10x84xf32>
    %22 = vector.shape_cast %21 : vector<2x10x84xf32> to vector<20x84xf32>
    %c0_12 = arith.constant 0 : index
    %c0_13 = arith.constant 0 : index
    %c0_14 = arith.constant 0 : index
    %23 = vector.load %arg6[%c0_12, %c0_13, %c0_14] : memref<5x84x160xf32, #tpu.memory_space<vmem>>, vector<1x84x160xf32>
    %24 = vector.shape_cast %23 : vector<1x84x160xf32> to vector<84x160xf32>
    %cst_15 = arith.constant dense<0.000000e+00> : vector<20x160xf32>
    %25 = tpu.matmul %22, %24, %cst_15 {dimension_numbers = #tpu.dot_dimension_numbers<[1], [0], [0], [1], [0, 0, 1, 1], [], []>} : vector<20x84xf32>, vector<84x160xf32>, vector<20x160xf32> -> vector<20x160xf32>
    %26 = arith.addf %20, %25 : vector<20x160xf32>
    %27 = vector.extract_strided_slice %19 {offsets = [0, 1, 0], sizes = [2, 10, 84], strides = [1, 1, 1]} : vector<2x14x84xf32> to vector<2x10x84xf32>
    %28 = vector.shape_cast %27 : vector<2x10x84xf32> to vector<20x84xf32>
    %c1 = arith.constant 1 : index
    %c0_16 = arith.constant 0 : index
    %c0_17 = arith.constant 0 : index
    %29 = vector.load %arg6[%c1, %c0_16, %c0_17] : memref<5x84x160xf32, #tpu.memory_space<vmem>>, vector<1x84x160xf32>
    %30 = vector.shape_cast %29 : vector<1x84x160xf32> to vector<84x160xf32>
    %cst_18 = arith.constant dense<0.000000e+00> : vector<20x160xf32>
    %31 = tpu.matmul %28, %30, %cst_18 {dimension_numbers = #tpu.dot_dimension_numbers<[1], [0], [0], [1], [0, 0, 1, 1], [], []>} : vector<20x84xf32>, vector<84x160xf32>, vector<20x160xf32> -> vector<20x160xf32>
    %32 = arith.addf %26, %31 : vector<20x160xf32>
    %33 = vector.extract_strided_slice %19 {offsets = [0, 2, 0], sizes = [2, 10, 84], strides = [1, 1, 1]} : vector<2x14x84xf32> to vector<2x10x84xf32>
    %34 = vector.shape_cast %33 : vector<2x10x84xf32> to vector<20x84xf32>
    %c2 = arith.constant 2 : index
    %c0_19 = arith.constant 0 : index
    %c0_20 = arith.constant 0 : index
    %35 = vector.load %arg6[%c2, %c0_19, %c0_20] : memref<5x84x160xf32, #tpu.memory_space<vmem>>, vector<1x84x160xf32>
    %36 = vector.shape_cast %35 : vector<1x84x160xf32> to vector<84x160xf32>
    %cst_21 = arith.constant dense<0.000000e+00> : vector<20x160xf32>
    %37 = tpu.matmul %34, %36, %cst_21 {dimension_numbers = #tpu.dot_dimension_numbers<[1], [0], [0], [1], [0, 0, 1, 1], [], []>} : vector<20x84xf32>, vector<84x160xf32>, vector<20x160xf32> -> vector<20x160xf32>
    %38 = arith.addf %32, %37 : vector<20x160xf32>
    %39 = vector.extract_strided_slice %19 {offsets = [0, 3, 0], sizes = [2, 10, 84], strides = [1, 1, 1]} : vector<2x14x84xf32> to vector<2x10x84xf32>
    %40 = vector.shape_cast %39 : vector<2x10x84xf32> to vector<20x84xf32>
    %c3 = arith.constant 3 : index
    %c0_22 = arith.constant 0 : index
    %c0_23 = arith.constant 0 : index
    %41 = vector.load %arg6[%c3, %c0_22, %c0_23] : memref<5x84x160xf32, #tpu.memory_space<vmem>>, vector<1x84x160xf32>
    %42 = vector.shape_cast %41 : vector<1x84x160xf32> to vector<84x160xf32>
    %cst_24 = arith.constant dense<0.000000e+00> : vector<20x160xf32>
    %43 = tpu.matmul %40, %42, %cst_24 {dimension_numbers = #tpu.dot_dimension_numbers<[1], [0], [0], [1], [0, 0, 1, 1], [], []>} : vector<20x84xf32>, vector<84x160xf32>, vector<20x160xf32> -> vector<20x160xf32>
    %44 = arith.addf %38, %43 : vector<20x160xf32>
    %45 = vector.extract_strided_slice %19 {offsets = [0, 4, 0], sizes = [2, 10, 84], strides = [1, 1, 1]} : vector<2x14x84xf32> to vector<2x10x84xf32>
    %46 = vector.shape_cast %45 : vector<2x10x84xf32> to vector<20x84xf32>
    %c4 = arith.constant 4 : index
    %c0_25 = arith.constant 0 : index
    %c0_26 = arith.constant 0 : index
    %47 = vector.load %arg6[%c4, %c0_25, %c0_26] : memref<5x84x160xf32, #tpu.memory_space<vmem>>, vector<1x84x160xf32>
    %48 = vector.shape_cast %47 : vector<1x84x160xf32> to vector<84x160xf32>
    %cst_27 = arith.constant dense<0.000000e+00> : vector<20x160xf32>
    %49 = tpu.matmul %46, %48, %cst_27 {dimension_numbers = #tpu.dot_dimension_numbers<[1], [0], [0], [1], [0, 0, 1, 1], [], []>} : vector<20x84xf32>, vector<84x160xf32>, vector<20x160xf32> -> vector<20x160xf32>
    %50 = arith.addf %44, %49 : vector<20x160xf32>
    %c0_28 = arith.constant 0 : index
    %c0_29 = arith.constant 0 : index
    %51 = vector.load %arg7[%c0_28, %c0_29] : memref<1x160xf32, #tpu.memory_space<vmem>>, vector<1x160xf32>
    %52 = vector.broadcast %51 : vector<1x160xf32> to vector<20x160xf32>
    %53 = arith.addf %50, %52 : vector<20x160xf32>
    %c0_30 = arith.constant 0 : index
    %c0_31 = arith.constant 0 : index
    %54 = vector.load %arg8[%c0_30, %c0_31] : memref<20x160xf32, #tpu.memory_space<vmem>>, vector<20x160xf32>
    tpu.vector_store %arg8[%c0_30, %c0_31], %53 {strides = array<i32>} : memref<20x160xf32, #tpu.memory_space<vmem>>, vector<20x160xf32>,
    %cst_32 = arith.constant dense<0.000000e+00> : vector<160xf32>
    %55 = vector.multi_reduction <add>, %53, %cst_32 [0] : vector<20x160xf32> to vector<160xf32>
    %56 = vector.shape_cast %55 : vector<160xf32> to vector<1x160xf32>
    %cst_33 = arith.constant 5.000000e-02 : f32
    %57 = vector.broadcast %cst_33 : f32 to vector<1x160xf32>
    %58 = arith.mulf %56, %57 : vector<1x160xf32>
    %59 = vector.broadcast %58 : vector<1x160xf32> to vector<20x160xf32>
    %60 = arith.subf %53, %59 : vector<20x160xf32>
    %61 = arith.mulf %60, %60 : vector<20x160xf32>
    %cst_34 = arith.constant dense<0.000000e+00> : vector<160xf32>
    %62 = vector.multi_reduction <add>, %61, %cst_34 [0] : vector<20x160xf32> to vector<160xf32>
    %63 = vector.shape_cast %62 : vector<160xf32> to vector<1x160xf32>
    %64 = tpu.concatenate %56, %63 in 0 : vector<1x160xf32>, vector<1x160xf32> -> vector<2x160xf32>
    %65 = vector.shape_cast %64 : vector<2x160xf32> to vector<1x2x160xf32>
    %c0_35 = arith.constant 0 : index
    %c0_36 = arith.constant 0 : index
    %c0_37 = arith.constant 0 : index
    %66 = vector.load %arg9[%c0_35, %c0_36, %c0_37] : memref<1x2x160xf32, #tpu.memory_space<vmem>>, vector<1x2x160xf32>
    tpu.vector_store %arg9[%c0_35, %c0_36, %c0_37], %65 {strides = array<i32>} : memref<1x2x160xf32, #tpu.memory_space<vmem>>, vector<1x2x160xf32>,
    return
  }
  func.func @transform_0(%arg0: i32) -> (i32, i32) {
    %c0_i32 = arith.constant 0 : i32
    %c0_i32_0 = arith.constant 0 : i32
    return %arg0, %c0_i32 : i32, i32
  }
  func.func @transform_1(%arg0: i32) -> (i32, i32) {
    %c0_i32 = arith.constant 0 : i32
    %c0_i32_0 = arith.constant 0 : i32
    %c0_i32_1 = arith.constant 0 : i32
    return %c0_i32, %c0_i32_0 : i32, i32
  }
  func.func @transform_2(%arg0: i32) -> (i32, i32) {
    %c0_i32 = arith.constant 0 : i32
    %c0_i32_0 = arith.constant 0 : i32
    %c0_i32_1 = arith.constant 0 : i32
    return %c0_i32, %c0_i32_0 : i32, i32
  }
  func.func @transform_3(%arg0: i32) -> (i32, i32) {
    %c0_i32 = arith.constant 0 : i32
    %c0_i32_0 = arith.constant 0 : i32
    %c0_i32_1 = arith.constant 0 : i32
    return %c0_i32, %c0_i32_0 : i32, i32
  }
  func.func @transform_4(%arg0: i32) -> (i32, i32) {
    %c0_i32 = arith.constant 0 : i32
    %c0_i32_0 = arith.constant 0 : i32
    %c0_i32_1 = arith.constant 0 : i32
    return %c0_i32, %c0_i32_0 : i32, i32
  }
  func.func @transform_5(%arg0: i32) -> (i32, i32, i32) {
    %c0_i32 = arith.constant 0 : i32
    %c0_i32_0 = arith.constant 0 : i32
    %c0_i32_1 = arith.constant 0 : i32
    %c0_i32_2 = arith.constant 0 : i32
    return %c0_i32, %c0_i32_0, %c0_i32_1 : i32, i32, i32
  }
  func.func @transform_6(%arg0: i32) -> (i32, i32) {
    %c0_i32 = arith.constant 0 : i32
    %c0_i32_0 = arith.constant 0 : i32
    %c0_i32_1 = arith.constant 0 : i32
    return %c0_i32, %c0_i32_0 : i32, i32
  }
  func.func @transform_7(%arg0: i32) -> (i32, i32) {
    %c0_i32 = arith.constant 0 : i32
    %c0_i32_0 = arith.constant 0 : i32
    return %arg0, %c0_i32 : i32, i32
  }
  func.func @transform_8(%arg0: i32) -> (i32, i32, i32) {
    %c0_i32 = arith.constant 0 : i32
    %c0_i32_0 = arith.constant 0 : i32
    %c0_i32_1 = arith.constant 0 : i32
    return %arg0, %c0_i32, %c0_i32_0 : i32, i32, i32
  }
}

module attributes {stable_mosaic.version = 11 : i64} {
  func.func @_bn2_pool_head_kernel(%arg0: i32, %arg1: memref<20x160xf32, #tpu.memory_space<vmem>>, %arg2: memref<1x160xf32, #tpu.memory_space<vmem>>, %arg3: memref<1x160xf32, #tpu.memory_space<vmem>>, %arg4: memref<160x80xf32, #tpu.memory_space<vmem>>, %arg5: memref<160x80xf32, #tpu.memory_space<vmem>>, %arg6: memref<80x50xf32, #tpu.memory_space<vmem>>, %arg7: memref<1x50xf32, #tpu.memory_space<vmem>>, %arg8: memref<50x10xf32, #tpu.memory_space<vmem>>, %arg9: memref<2x10xf32, #tpu.memory_space<vmem>>) attributes {dimension_semantics = [#tpu.dimension_semantics<parallel>], iteration_bounds = array<i64: 1>, scalar_prefetch = 0 : i64, scratch_operands = 0 : i64, tpu.core_type = #tpu.core_type<tc>, window_params = [{transform_indices = @transform_0, window_bounds = array<i64: 20, 160>}, {pipeline_mode = #tpu.pipeline_mode<synchronous>, transform_indices = @transform_1, window_bounds = array<i64: 1, 160>}, {pipeline_mode = #tpu.pipeline_mode<synchronous>, transform_indices = @transform_2, window_bounds = array<i64: 1, 160>}, {pipeline_mode = #tpu.pipeline_mode<synchronous>, transform_indices = @transform_3, window_bounds = array<i64: 160, 80>}, {pipeline_mode = #tpu.pipeline_mode<synchronous>, transform_indices = @transform_4, window_bounds = array<i64: 160, 80>}, {pipeline_mode = #tpu.pipeline_mode<synchronous>, transform_indices = @transform_5, window_bounds = array<i64: 80, 50>}, {pipeline_mode = #tpu.pipeline_mode<synchronous>, transform_indices = @transform_6, window_bounds = array<i64: 1, 50>}, {pipeline_mode = #tpu.pipeline_mode<synchronous>, transform_indices = @transform_7, window_bounds = array<i64: 50, 10>}, {transform_indices = @transform_8, window_bounds = array<i64: 2, 10>}]} {
    %c0 = arith.constant 0 : index
    %c0_0 = arith.constant 0 : index
    %0 = vector.load %arg1[%c0, %c0_0] : memref<20x160xf32, #tpu.memory_space<vmem>>, vector<20x160xf32>
    %c0_1 = arith.constant 0 : index
    %c0_2 = arith.constant 0 : index
    %1 = vector.load %arg2[%c0_1, %c0_2] : memref<1x160xf32, #tpu.memory_space<vmem>>, vector<1x160xf32>
    %2 = vector.broadcast %1 : vector<1x160xf32> to vector<20x160xf32>
    %3 = arith.mulf %0, %2 : vector<20x160xf32>
    %c0_3 = arith.constant 0 : index
    %c0_4 = arith.constant 0 : index
    %4 = vector.load %arg3[%c0_3, %c0_4] : memref<1x160xf32, #tpu.memory_space<vmem>>, vector<1x160xf32>
    %5 = vector.broadcast %4 : vector<1x160xf32> to vector<20x160xf32>
    %6 = arith.addf %3, %5 : vector<20x160xf32>
    %cst = arith.constant 0.000000e+00 : f32
    %7 = vector.broadcast %cst : f32 to vector<20x160xf32>
    %8 = arith.maximumf %6, %7 : vector<20x160xf32>
    %c0_5 = arith.constant 0 : index
    %c0_6 = arith.constant 0 : index
    %9 = vector.load %arg4[%c0_5, %c0_6] : memref<160x80xf32, #tpu.memory_space<vmem>>, vector<160x80xf32>
    %cst_7 = arith.constant dense<0.000000e+00> : vector<20x80xf32>
    %10 = tpu.matmul %8, %9, %cst_7 {dimension_numbers = #tpu.dot_dimension_numbers<[1], [0], [0], [1], [0, 0, 1, 1], [], []>} : vector<20x160xf32>, vector<160x80xf32>, vector<20x80xf32> -> vector<20x80xf32>
    %c0_8 = arith.constant 0 : index
    %c0_9 = arith.constant 0 : index
    %11 = vector.load %arg5[%c0_8, %c0_9] : memref<160x80xf32, #tpu.memory_space<vmem>>, vector<160x80xf32>
    %cst_10 = arith.constant dense<0.000000e+00> : vector<20x80xf32>
    %12 = tpu.matmul %8, %11, %cst_10 {dimension_numbers = #tpu.dot_dimension_numbers<[1], [0], [0], [1], [0, 0, 1, 1], [], []>} : vector<20x160xf32>, vector<160x80xf32>, vector<20x80xf32> -> vector<20x80xf32>
    %13 = arith.maximumf %10, %12 : vector<20x80xf32>
    %14 = vector.shape_cast %13 : vector<20x80xf32> to vector<2x5x2x80xf32>
    %15 = vector.extract_strided_slice %14 {offsets = [0, 0, 0, 0], sizes = [2, 5, 1, 80], strides = [1, 1, 1, 1]} : vector<2x5x2x80xf32> to vector<2x5x1x80xf32>
    %16 = vector.shape_cast %15 : vector<2x5x1x80xf32> to vector<2x5x80xf32>
    %17 = vector.extract_strided_slice %14 {offsets = [0, 0, 1, 0], sizes = [2, 5, 1, 80], strides = [1, 1, 1, 1]} : vector<2x5x2x80xf32> to vector<2x5x1x80xf32>
    %18 = vector.shape_cast %17 : vector<2x5x1x80xf32> to vector<2x5x80xf32>
    %19 = arith.maximumf %16, %18 : vector<2x5x80xf32>
    %20 = vector.shape_cast %19 : vector<2x5x80xf32> to vector<10x80xf32>
    %c0_11 = arith.constant 0 : index
    %c0_12 = arith.constant 0 : index
    %21 = vector.load %arg6[%c0_11, %c0_12] : memref<80x50xf32, #tpu.memory_space<vmem>>, vector<80x50xf32>
    %cst_13 = arith.constant dense<0.000000e+00> : vector<10x50xf32>
    %22 = tpu.matmul %20, %21, %cst_13 {dimension_numbers = #tpu.dot_dimension_numbers<[1], [0], [0], [1], [0, 0, 1, 1], [], []>} : vector<10x80xf32>, vector<80x50xf32>, vector<10x50xf32> -> vector<10x50xf32>
    %c0_14 = arith.constant 0 : index
    %c0_15 = arith.constant 0 : index
    %23 = vector.load %arg7[%c0_14, %c0_15] : memref<1x50xf32, #tpu.memory_space<vmem>>, vector<1x50xf32>
    %24 = vector.broadcast %23 : vector<1x50xf32> to vector<10x50xf32>
    %25 = arith.addf %22, %24 : vector<10x50xf32>
    %cst_16 = arith.constant 0.000000e+00 : f32
    %26 = vector.broadcast %cst_16 : f32 to vector<10x50xf32>
    %27 = arith.maximumf %25, %26 : vector<10x50xf32>
    %28 = vector.shape_cast %27 : vector<10x50xf32> to vector<2x5x50xf32>
    %cst_17 = arith.constant dense<0.000000e+00> : vector<2x50xf32>
    %29 = vector.multi_reduction <add>, %28, %cst_17 [1] : vector<2x5x50xf32> to vector<2x50xf32>
    %c0_18 = arith.constant 0 : index
    %c0_19 = arith.constant 0 : index
    %30 = vector.load %arg8[%c0_18, %c0_19] : memref<50x10xf32, #tpu.memory_space<vmem>>, vector<50x10xf32>
    %cst_20 = arith.constant dense<0.000000e+00> : vector<2x10xf32>
    %31 = tpu.matmul %29, %30, %cst_20 {dimension_numbers = #tpu.dot_dimension_numbers<[1], [0], [0], [1], [0, 0, 1, 1], [], []>} : vector<2x50xf32>, vector<50x10xf32>, vector<2x10xf32> -> vector<2x10xf32>
    %cst_21 = arith.constant 4.000000e-02 : f32
    %32 = vector.broadcast %cst_21 : f32 to vector<2x10xf32>
    %33 = arith.mulf %31, %32 : vector<2x10xf32>
    %c0_22 = arith.constant 0 : index
    %c0_23 = arith.constant 0 : index
    %34 = vector.load %arg9[%c0_22, %c0_23] : memref<2x10xf32, #tpu.memory_space<vmem>>, vector<2x10xf32>
    tpu.vector_store %arg9[%c0_22, %c0_23], %33 {strides = array<i32>} : memref<2x10xf32, #tpu.memory_space<vmem>>, vector<2x10xf32>,
    return
  }
  func.func @transform_0(%arg0: i32) -> (i32, i32) {
    %c0_i32 = arith.constant 0 : i32
    %c0_i32_0 = arith.constant 0 : i32
    return %arg0, %c0_i32 : i32, i32
  }
  func.func @transform_1(%arg0: i32) -> (i32, i32) {
    %c0_i32 = arith.constant 0 : i32
    %c0_i32_0 = arith.constant 0 : i32
    %c0_i32_1 = arith.constant 0 : i32
    return %c0_i32, %c0_i32_0 : i32, i32
  }
  func.func @transform_2(%arg0: i32) -> (i32, i32) {
    %c0_i32 = arith.constant 0 : i32
    %c0_i32_0 = arith.constant 0 : i32
    %c0_i32_1 = arith.constant 0 : i32
    return %c0_i32, %c0_i32_0 : i32, i32
  }
  func.func @transform_3(%arg0: i32) -> (i32, i32) {
    %c0_i32 = arith.constant 0 : i32
    %c0_i32_0 = arith.constant 0 : i32
    %c0_i32_1 = arith.constant 0 : i32
    return %c0_i32, %c0_i32_0 : i32, i32
  }
  func.func @transform_4(%arg0: i32) -> (i32, i32) {
    %c0_i32 = arith.constant 0 : i32
    %c0_i32_0 = arith.constant 0 : i32
    %c0_i32_1 = arith.constant 0 : i32
    return %c0_i32, %c0_i32_0 : i32, i32
  }
  func.func @transform_5(%arg0: i32) -> (i32, i32) {
    %c0_i32 = arith.constant 0 : i32
    %c0_i32_0 = arith.constant 0 : i32
    %c0_i32_1 = arith.constant 0 : i32
    return %c0_i32, %c0_i32_0 : i32, i32
  }
  func.func @transform_6(%arg0: i32) -> (i32, i32) {
    %c0_i32 = arith.constant 0 : i32
    %c0_i32_0 = arith.constant 0 : i32
    %c0_i32_1 = arith.constant 0 : i32
    return %c0_i32, %c0_i32_0 : i32, i32
  }
  func.func @transform_7(%arg0: i32) -> (i32, i32) {
    %c0_i32 = arith.constant 0 : i32
    %c0_i32_0 = arith.constant 0 : i32
    %c0_i32_1 = arith.constant 0 : i32
    return %c0_i32, %c0_i32_0 : i32, i32
  }
  func.func @transform_8(%arg0: i32) -> (i32, i32) {
    %c0_i32 = arith.constant 0 : i32
    %c0_i32_0 = arith.constant 0 : i32
    return %arg0, %c0_i32 : i32, i32
  }
}

</mosaic_0001>

<llo_original>
// kernel: tile.48
$region0: #{tile.48}
  #allocation0 [shape = 's32[1]{0}', space=sflag, size = 0x4, scoped, tag = 'scoped memory for tile.48']
  %s0 = inlined_call_operand.vmem [shape: f32[6], index: 0, kind: input, shape index: {}]
  %s1 = inlined_call_operand.vmem [shape: f32[28,6], index: 1, kind: output, shape index: {}]
  // Predicated region
  $region2: #{tile.48} parent=0 // pred_check
    _
  $region3: #{tile.48} parent=0 // pred_check_branch
    %3 = sbr.rel (0) target = $region5
  $region4: #{tile.48} parent=0 // pred_region
    _
  $region5: #{tile.48} parent=0 // pred_fallthru
    _
  %v4 = vld [vmem:[%s0] ss:$0 sm:$0xff]
  %5 = vst [vmem:[%s1] sm:$0xff] %v4
  %s6 = scalar_lea.vmem %s1, 8
  %7 = vst [vmem:[%s6] sm:$0xff] %v4
  %s8 = scalar_lea.vmem %s1, 16
  %9 = vst [vmem:[%s8] sm:$0xff] %v4
  %s10 = scalar_lea.vmem %s1, 24
  %11 = vst [vmem:[%s10] sm:$0xff] %v4

// kernel: tile.49
$region0: #{tile.49}
  %s0 = inlined_call_operand.vmem [shape: f32[28,6], index: 0, kind: input, shape index: {}]
  %s1 = inlined_call_operand.vmem [shape: f32[1,168], index: 1, kind: output, shape index: {}]
  $region1: #{tile.49} parent=0
    #allocation0 [shape = 'u8[8192]{0}', space=vmem, size = 0x2000, scoped, tag = 'scoped mem for output reshape']
    %v2 = vld [vmem:[%s0] sm:$0x1]
    %vm3 = vcmask 48128
    %4 = vst.msk [vmem:[#allocation0] sm:$0x1] %vm3, %v2
    %s5 = scalar_lea.vmem %s0, 21
    %v6 = vld [vmem:[%s5] sm:$0x1]
    %s7 = scalar_lea.vmem %s0, 21
    %v8 = vld [vmem:[%s7] sm:$0x1]
    %vm9 = vcmask 15360
    %v10 = vsel %vm9, %v8, %v6
    %11 = vrot.lane.b32.xlu0 %v10, 126
    %v12 = vpop.permute.xlu0 %11
    %vm13 = vcmask 31744
    %s14 = scalar_lea.vmem [#allocation0], 8
    %15 = vst.msk [vmem:[%s14] sm:$0x1] %vm13, %v12
    %vm16 = vcmask 1048560
    %17 = vst.msk [vmem:[#allocation0] sm:$0x1] %vm16, %v12
    %s18 = scalar_lea.vmem %s0, 20
    %v19 = vld [vmem:[%s18] sm:$0x1]
    %20 = vrot.lane.b32.xlu0 %v19, 120
    %v21 = vpop.permute.xlu0 %20
    %vm22 = vcmask 1032128
    %23 = vst.msk [vmem:[#allocation0] sm:$0x1] %vm22, %v21
    %s24 = scalar_lea.vmem %s0, 19
    %v25 = vld [vmem:[%s24] sm:$0x1]
    %26 = vrot.lane.b32.xlu0 %v25, 114
    %v27 = vpop.permute.xlu0 %26
    %vm28 = vcmask 982928
    %29 = vst.msk [vmem:[#allocation0] sm:$0x1] %vm28, %v27
    %s30 = scalar_lea.vmem %s0, 18
    %v31 = vld [vmem:[%s30] sm:$0x1]
    %32 = vrot.lane.b32.xlu0 %v31, 108
    %v33 = vpop.permute.xlu0 %32
    %vm34 = vcmask 933728
    %35 = vst.msk [vmem:[#allocation0] sm:$0x1] %vm34, %v33
    %s36 = scalar_lea.vmem %s0, 17
    %v37 = vld [vmem:[%s36] sm:$0x1]
    %38 = vrot.lane.b32.xlu0 %v37, 102
    %v39 = vpop.permute.xlu0 %38
    %vm40 = vcmask 884528
    %41 = vst.msk [vmem:[#allocation0] sm:$0x1] %vm40, %v39
    %s42 = scalar_lea.vmem %s0, 16
    %v43 = vld [vmem:[%s42] sm:$0x1]
    %44 = vrot.lane.b32.xlu0 %v43, 96
    %v45 = vpop.permute.xlu0 %44
    %vm46 = vcmask 835328
    %47 = vst.msk [vmem:[#allocation0] sm:$0x1] %vm46, %v45
    %s48 = scalar_lea.vmem %s0, 15
    %v49 = vld [vmem:[%s48] sm:$0x1]
    %50 = vrot.lane.b32.xlu0 %v49, 90
    %v51 = vpop.permute.xlu0 %50
    %vm52 = vcmask 786128
    %53 = vst.msk [vmem:[#allocation0] sm:$0x1] %vm52, %v51
    %s54 = scalar_lea.vmem %s0, 14
    %v55 = vld [vmem:[%s54] sm:$0x1]
    %56 = vrot.lane.b32.xlu0 %v55, 84
    %v57 = vpop.permute.xlu0 %56
    %vm58 = vcmask 736928
    %59 = vst.msk [vmem:[#allocation0] sm:$0x1] %vm58, %v57
    %s60 = scalar_lea.vmem %s0, 13
    %v61 = vld [vmem:[%s60] sm:$0x1]
    %62 = vrot.lane.b32.xlu0 %v61, 78
    %v63 = vpop.permute.xlu0 %62
    %vm64 = vcmask 687728
    %65 = vst.msk [vmem:[#allocation0] sm:$0x1] %vm64, %v63
    %s66 = scalar_lea.vmem %s0, 12
    %v67 = vld [vmem:[%s66] sm:$0x1]
    %68 = vrot.lane.b32.xlu0 %v67, 72
    %v69 = vpop.permute.xlu0 %68
    %vm70 = vcmask 638528
    %71 = vst.msk [vmem:[#allocation0] sm:$0x1] %vm70, %v69
    %s72 = scalar_lea.vmem %s0, 11
    %v73 = vld [vmem:[%s72] sm:$0x1]
    %74 = vrot.lane.b32.xlu0 %v73, 66
    %v75 = vpop.permute.xlu0 %74
    %vm76 = vcmask 589328
    %77 = vst.msk [vmem:[#allocation0] sm:$0x1] %vm76, %v75
    %s78 = scalar_lea.vmem %s0, 10
    %v79 = vld [vmem:[%s78] sm:$0x1]
    %80 = vrot.lane.b32.xlu0 %v79, 60
    %v81 = vpop.permute.xlu0 %80
    %vm82 = vcmask 540128
    %83 = vst.msk [vmem:[#allocation0] sm:$0x1] %vm82, %v81
    %s84 = scalar_lea.vmem %s0, 9
    %v85 = vld [vmem:[%s84] sm:$0x1]
    %86 = vrot.lane.b32.xlu0 %v85, 54
    %v87 = vpop.permute.xlu0 %86
    %vm88 = vcmask 490928
    %89 = vst.msk [vmem:[#allocation0] sm:$0x1] %vm88, %v87
    %s90 = scalar_lea.vmem %s0, 8
    %v91 = vld [vmem:[%s90] sm:$0x1]
    %92 = vrot.lane.b32.xlu0 %v91, 48
    %v93 = vpop.permute.xlu0 %92
    %vm94 = vcmask 441728
    %95 = vst.msk [vmem:[#allocation0] sm:$0x1] %vm94, %v93
    %s96 = scalar_lea.vmem %s0, 7
    %v97 = vld [vmem:[%s96] sm:$0x1]
    %98 = vrot.lane.b32.xlu0 %v97, 42
    %v99 = vpop.permute.xlu0 %98
    %vm100 = vcmask 392528
    %101 = vst.msk [vmem:[#allocation0] sm:$0x1] %vm100, %v99
    %s102 = scalar_lea.vmem %s0, 6
    %v103 = vld [vmem:[%s102] sm:$0x1]
    %104 = vrot.lane.b32.xlu0 %v103, 36
    %v105 = vpop.permute.xlu0 %104
    %vm106 = vcmask 343328
    %107 = vst.msk [vmem:[#allocation0] sm:$0x1] %vm106, %v105
    %s108 = scalar_lea.vmem %s0, 27
    %v109 = vld [vmem:[%s108] sm:$0x1]
    %110 = vrot.lane.b32.xlu0 %v109, 34
    %v111 = vpop.permute.xlu0 %110
    %vm112 = vcmask 326928
    %s113 = scalar_lea.vmem [#allocation0], 8
    %114 = vst.msk [vmem:[%s113] sm:$0x1] %vm112, %v111
    %s115 = scalar_lea.vmem %s0, 5
    %v116 = vld [vmem:[%s115] sm:$0x1]
    %117 = vrot.lane.b32.xlu0 %v116, 30
    %v118 = vpop.permute.xlu0 %117
    %vm119 = vcmask 294128
    %120 = vst.msk [vmem:[#allocation0] sm:$0x1] %vm119, %v118
    %s121 = scalar_lea.vmem %s0, 26
    %v122 = vld [vmem:[%s121] sm:$0x1]
    %123 = vrot.lane.b32.xlu0 %v122, 28
    %v124 = vpop.permute.xlu0 %123
    %vm125 = vcmask 277728
    %s126 = scalar_lea.vmem [#allocation0], 8
    %127 = vst.msk [vmem:[%s126] sm:$0x1] %vm125, %v124
    %s128 = scalar_lea.vmem %s0, 4
    %v129 = vld [vmem:[%s128] sm:$0x1]
    %130 = vrot.lane.b32.xlu0 %v129, 24
    %v131 = vpop.permute.xlu0 %130
    %vm132 = vcmask 244928
    %133 = vst.msk [vmem:[#allocation0] sm:$0x1] %vm132, %v131
    %s134 = scalar_lea.vmem %s0, 25
    %v135 = vld [vmem:[%s134] sm:$0x1]
    %136 = vrot.lane.b32.xlu0 %v135, 22
    %v137 = vpop.permute.xlu0 %136
    %vm138 = vcmask 228528
    %s139 = scalar_lea.vmem [#allocation0], 8
    %140 = vst.msk [vmem:[%s139] sm:$0x1] %vm138, %v137
    %s141 = scalar_lea.vmem %s0, 3
    %v142 = vld [vmem:[%s141] sm:$0x1]
    %143 = vrot.lane.b32.xlu0 %v142, 18
    %v144 = vpop.permute.xlu0 %143
    %vm145 = vcmask 195728
    %146 = vst.msk [vmem:[#allocation0] sm:$0x1] %vm145, %v144
    %s147 = scalar_lea.vmem %s0, 24
    %v148 = vld [vmem:[%s147] sm:$0x1]
    %149 = vrot.lane.b32.xlu0 %v148, 16
    %v150 = vpop.permute.xlu0 %149
    %vm151 = vcmask 179328
    %s152 = scalar_lea.vmem [#allocation0], 8
    %153 = vst.msk [vmem:[%s152] sm:$0x1] %vm151, %v150
    %s154 = scalar_lea.vmem %s0, 2
    %v155 = vld [vmem:[%s154] sm:$0x1]
    %156 = vrot.lane.b32.xlu0 %v155, 12
    %v157 = vpop.permute.xlu0 %156
    %vm158 = vcmask 146528
    %159 = vst.msk [vmem:[#allocation0] sm:$0x1] %vm158, %v157
    %s160 = scalar_lea.vmem %s0, 23
    %v161 = vld [vmem:[%s160] sm:$0x1]
    %162 = vrot.lane.b32.xlu0 %v161, 10
    %v163 = vpop.permute.xlu0 %162
    %vm164 = vcmask 130128
    %s165 = scalar_lea.vmem [#allocation0], 8
    %166 = vst.msk [vmem:[%s165] sm:$0x1] %vm164, %v163
    %s167 = scalar_lea.vmem %s0, 1
    %v168 = vld [vmem:[%s167] sm:$0x1]
    %169 = vrot.lane.b32.xlu0 %v168, 6
    %v170 = vpop.permute.xlu0 %169
    %vm171 = vcmask 97328
    %172 = vst.msk [vmem:[#allocation0] sm:$0x1] %vm171, %v170
    %s173 = scalar_lea.vmem %s0, 22
    %v174 = vld [vmem:[%s173] sm:$0x1]
    %175 = vrot.lane.b32.xlu0 %v174, 4
    %v176 = vpop.permute.xlu0 %175
    %vm177 = vcmask 80928
    %s178 = scalar_lea.vmem [#allocation0], 8
    %179 = vst.msk [vmem:[%s178] sm:$0x1] %vm177, %v176
    %s181 = ssub.s32 2, 1
    %v182 = vld [vmem:[#allocation0] sm:%s181]
    %s184 = ssub.s32 2, 1
    %185 = vst [vmem:[%s1] sm:%s184] %v182
    %s186 = scalar_lea.vmem [#allocation0], 8
    %v187 = vld [vmem:[%s186] sm:%s181]
    %s189 = ssub.s32 2, 1
    %s190 = scalar_lea.vmem %s1, 1
    %191 = vst [vmem:[%s190] sm:%s189] %v187

// kernel: squeeze.8
$region0: #{squeeze.8}
  %s0 = inlined_call_operand.vmem [shape: f32[168], index: 0, kind: input, shape index: {}]
  %s1 = inlined_call_operand.vmem [shape: f32[28,6], index: 1, kind: output, shape index: {}]
  $region1: #{squeeze.8} parent=0
    #allocation0 [shape = 'u8[4096]{0}', space=vmem, size = 0x1000, scoped, tag = 'scoped mem for input reshape']
    %s3 = ssub.s32 4, 1
    %v4 = vld [vmem:[%s0] sm:%s3]
    %5 = vst [vmem:[#allocation0] sm:%s3] %v4
    %v6 = vld [vmem:[#allocation0] sm:$0x1]
    %vm7 = vcmask 48128
    %8 = vst.msk [vmem:[%s1] sm:$0x1] %vm7, %v6
    %s9 = scalar_lea.vmem [#allocation0], 1
    %v10 = vld [vmem:[%s9] sm:$0x1]
    %11 = vrot.lane.b32.xlu0 %v10, 124
    %v12 = vpop.permute.xlu0 %11
    %vm13 = vcmask 48128
    %s14 = scalar_lea.vmem %s1, 22
    %15 = vst.msk [vmem:[%s14] sm:$0x1] %vm13, %v12
    %v16 = vld [vmem:[#allocation0] sm:$0x1]
    %17 = vrot.lane.b32.xlu0 %v16, 122
    %v18 = vpop.permute.xlu0 %17
    %vm19 = vcmask 48128
    %s20 = scalar_lea.vmem %s1, 1
    %21 = vst.msk [vmem:[%s20] sm:$0x1] %vm19, %v18
    %s22 = scalar_lea.vmem [#allocation0], 1
    %v23 = vld [vmem:[%s22] sm:$0x1]
    %24 = vrot.lane.b32.xlu0 %v23, 118
    %v25 = vpop.permute.xlu0 %24
    %vm26 = vcmask 48128
    %s27 = scalar_lea.vmem %s1, 23
    %28 = vst.msk [vmem:[%s27] sm:$0x1] %vm26, %v25
    %v29 = vld [vmem:[#allocation0] sm:$0x1]
    %30 = vrot.lane.b32.xlu0 %v29, 116
    %v31 = vpop.permute.xlu0 %30
    %vm32 = vcmask 48128
    %s33 = scalar_lea.vmem %s1, 2
    %34 = vst.msk [vmem:[%s33] sm:$0x1] %vm32, %v31
    %s35 = scalar_lea.vmem [#allocation0], 1
    %v36 = vld [vmem:[%s35] sm:$0x1]
    %37 = vrot.lane.b32.xlu0 %v36, 112
    %v38 = vpop.permute.xlu0 %37
    %vm39 = vcmask 48128
    %s40 = scalar_lea.vmem %s1, 24
    %41 = vst.msk [vmem:[%s40] sm:$0x1] %vm39, %v38
    %v42 = vld [vmem:[#allocation0] sm:$0x1]
    %43 = vrot.lane.b32.xlu0 %v42, 110
    %v44 = vpop.permute.xlu0 %43
    %vm45 = vcmask 48128
    %s46 = scalar_lea.vmem %s1, 3
    %47 = vst.msk [vmem:[%s46] sm:$0x1] %vm45, %v44
    %s48 = scalar_lea.vmem [#allocation0], 1
    %v49 = vld [vmem:[%s48] sm:$0x1]
    %50 = vrot.lane.b32.xlu0 %v49, 106
    %v51 = vpop.permute.xlu0 %50
    %vm52 = vcmask 48128
    %s53 = scalar_lea.vmem %s1, 25
    %54 = vst.msk [vmem:[%s53] sm:$0x1] %vm52, %v51
    %v55 = vld [vmem:[#allocation0] sm:$0x1]
    %56 = vrot.lane.b32.xlu0 %v55, 104
    %v57 = vpop.permute.xlu0 %56
    %vm58 = vcmask 48128
    %s59 = scalar_lea.vmem %s1, 4
    %60 = vst.msk [vmem:[%s59] sm:$0x1] %vm58, %v57
    %s61 = scalar_lea.vmem [#allocation0], 1
    %v62 = vld [vmem:[%s61] sm:$0x1]
    %63 = vrot.lane.b32.xlu0 %v62, 100
    %v64 = vpop.permute.xlu0 %63
    %vm65 = vcmask 48128
    %s66 = scalar_lea.vmem %s1, 26
    %67 = vst.msk [vmem:[%s66] sm:$0x1] %vm65, %v64
    %v68 = vld [vmem:[#allocation0] sm:$0x1]
    %69 = vrot.lane.b32.xlu0 %v68, 98
    %v70 = vpop.permute.xlu0 %69
    %vm71 = vcmask 48128
    %s72 = scalar_lea.vmem %s1, 5
    %73 = vst.msk [vmem:[%s72] sm:$0x1] %vm71, %v70
    %s74 = scalar_lea.vmem [#allocation0], 1
    %v75 = vld [vmem:[%s74] sm:$0x1]
    %76 = vrot.lane.b32.xlu0 %v75, 94
    %v77 = vpop.permute.xlu0 %76
    %vm78 = vcmask 48128
    %s79 = scalar_lea.vmem %s1, 27
    %80 = vst.msk [vmem:[%s79] sm:$0x1] %vm78, %v77
    %v81 = vld [vmem:[#allocation0] sm:$0x1]
    %82 = vrot.lane.b32.xlu0 %v81, 92
    %v83 = vpop.permute.xlu0 %82
    %vm84 = vcmask 48128
    %s85 = scalar_lea.vmem %s1, 6
    %86 = vst.msk [vmem:[%s85] sm:$0x1] %vm84, %v83
    %v87 = vld [vmem:[#allocation0] sm:$0x1]
    %88 = vrot.lane.b32.xlu0 %v87, 86
    %v89 = vpop.permute.xlu0 %88
    %vm90 = vcmask 48128
    %s91 = scalar_lea.vmem %s1, 7
    %92 = vst.msk [vmem:[%s91] sm:$0x1] %vm90, %v89
    %v93 = vld [vmem:[#allocation0] sm:$0x1]
    %94 = vrot.lane.b32.xlu0 %v93, 80
    %v95 = vpop.permute.xlu0 %94
    %vm96 = vcmask 48128
    %s97 = scalar_lea.vmem %s1, 8
    %98 = vst.msk [vmem:[%s97] sm:$0x1] %vm96, %v95
    %v99 = vld [vmem:[#allocation0] sm:$0x1]
    %100 = vrot.lane.b32.xlu0 %v99, 74
    %v101 = vpop.permute.xlu0 %100
    %vm102 = vcmask 48128
    %s103 = scalar_lea.vmem %s1, 9
    %104 = vst.msk [vmem:[%s103] sm:$0x1] %vm102, %v101
    %v105 = vld [vmem:[#allocation0] sm:$0x1]
    %106 = vrot.lane.b32.xlu0 %v105, 68
    %v107 = vpop.permute.xlu0 %106
    %vm108 = vcmask 48128
    %s109 = scalar_lea.vmem %s1, 10
    %110 = vst.msk [vmem:[%s109] sm:$0x1] %vm108, %v107
    %v111 = vld [vmem:[#allocation0] sm:$0x1]
    %112 = vrot.lane.b32.xlu0 %v111, 62
    %v113 = vpop.permute.xlu0 %112
    %vm114 = vcmask 48128
    %s115 = scalar_lea.vmem %s1, 11
    %116 = vst.msk [vmem:[%s115] sm:$0x1] %vm114, %v113
    %v117 = vld [vmem:[#allocation0] sm:$0x1]
    %118 = vrot.lane.b32.xlu0 %v117, 56
    %v119 = vpop.permute.xlu0 %118
    %vm120 = vcmask 48128
    %s121 = scalar_lea.vmem %s1, 12
    %122 = vst.msk [vmem:[%s121] sm:$0x1] %vm120, %v119
    %v123 = vld [vmem:[#allocation0] sm:$0x1]
    %124 = vrot.lane.b32.xlu0 %v123, 50
    %v125 = vpop.permute.xlu0 %124
    %vm126 = vcmask 48128
    %s127 = scalar_lea.vmem %s1, 13
    %128 = vst.msk [vmem:[%s127] sm:$0x1] %vm126, %v125
    %v129 = vld [vmem:[#allocation0] sm:$0x1]
    %130 = vrot.lane.b32.xlu0 %v129, 44
    %v131 = vpop.permute.xlu0 %130
    %vm132 = vcmask 48128
    %s133 = scalar_lea.vmem %s1, 14
    %134 = vst.msk [vmem:[%s133] sm:$0x1] %vm132, %v131
    %v135 = vld [vmem:[#allocation0] sm:$0x1]
    %136 = vrot.lane.b32.xlu0 %v135, 38
    %v137 = vpop.permute.xlu0 %136
    %vm138 = vcmask 48128
    %s139 = scalar_lea.vmem %s1, 15
    %140 = vst.msk [vmem:[%s139] sm:$0x1] %vm138, %v137
    %v141 = vld [vmem:[#allocation0] sm:$0x1]
    %142 = vrot.lane.b32.xlu0 %v141, 32
    %v143 = vpop.permute.xlu0 %142
    %vm144 = vcmask 48128
    %s145 = scalar_lea.vmem %s1, 16
    %146 = vst.msk [vmem:[%s145] sm:$0x1] %vm144, %v143
    %v147 = vld [vmem:[#allocation0] sm:$0x1]
    %148 = vrot.lane.b32.xlu0 %v147, 26
    %v149 = vpop.permute.xlu0 %148
    %vm150 = vcmask 48128
    %s151 = scalar_lea.vmem %s1, 17
    %152 = vst.msk [vmem:[%s151] sm:$0x1] %vm150, %v149
    %v153 = vld [vmem:[#allocation0] sm:$0x1]
    %154 = vrot.lane.b32.xlu0 %v153, 20
    %v155 = vpop.permute.xlu0 %154
    %vm156 = vcmask 48128
    %s157 = scalar_lea.vmem %s1, 18
    %158 = vst.msk [vmem:[%s157] sm:$0x1] %vm156, %v155
    %v159 = vld [vmem:[#allocation0] sm:$0x1]
    %160 = vrot.lane.b32.xlu0 %v159, 14
    %v161 = vpop.permute.xlu0 %160
    %vm162 = vcmask 48128
    %s163 = scalar_lea.vmem %s1, 19
    %164 = vst.msk [vmem:[%s163] sm:$0x1] %vm162, %v161
    %v165 = vld [vmem:[#allocation0] sm:$0x1]
    %166 = vrot.lane.b32.xlu0 %v165, 8
    %v167 = vpop.permute.xlu0 %166
    %vm168 = vcmask 48128
    %s169 = scalar_lea.vmem %s1, 20
    %170 = vst.msk [vmem:[%s169] sm:$0x1] %vm168, %v167
    %v171 = vld [vmem:[#allocation0] sm:$0x1]
    %s172 = scalar_lea.vmem [#allocation0], 1
    %v173 = vld [vmem:[%s172] sm:$0x1]
    %vm174 = vcmask 1031168
    %v175 = vsel %vm174, %v173, %v171
    %176 = vrot.lane.b32.xlu0 %v175, 2
    %v177 = vpop.permute.xlu0 %176
    %vm178 = vcmask 15360
    %s179 = scalar_lea.vmem %s1, 21
    %180 = vst.msk [vmem:[%s179] sm:$0x1] %vm178, %v177
    %vm181 = vcmask 48144
    %s182 = scalar_lea.vmem %s1, 21
    %183 = vst.msk [vmem:[%s182] sm:$0x1] %vm181, %v177

// kernel: gap_lenet_forward.3
$region0: #{gap_lenet_forward.3}
  #allocation0 [shape = 'u32[]', space=smem, size = 0x4, offset = 0x4, fixed_abs, tag = 'smem constant byte address 0x4 - core index']
  #allocation1 [shape = 'u32[72,128]{1,0:T(1,128)}', space=vmem, size = 0x9000, scoped, tag = 'internal scratch']
  %s0 = inlined_call_operand.vmem [shape: f32[2,32,96], index: 0, kind: input, shape index: {}]
  %s1 = inlined_call_operand.vmem [shape: f32[5,96,168], index: 1, kind: input, shape index: {}]
  %s2 = inlined_call_operand.vmem [shape: f32[1,168], index: 2, kind: input, shape index: {}]
  %s3 = inlined_call_operand.vmem [shape: f32[56,168], index: 3, kind: output, shape index: {0}]
  %s4 = inlined_call_operand.vmem [shape: f32[1,2,168], index: 4, kind: output, shape index: {1}]
  %5 = xla_tuple %s3, %s4
  %s6 = sld [smem:[#allocation0]]
  $region30: #{gap_lenet_forward.3} parent=0
    _
  %s8 = ssub.s32 1, %s6
  %s9 = scalar_select 0, %s8, %s6
  // Predicated region
  $region2: #{gap_lenet_forward.3} parent=0 // pred_check
    _
  $region3: #{gap_lenet_forward.3} parent=0 // pred_check_branch
    %11 = sbr.rel (0) target = $region5
  $region4: #{gap_lenet_forward.3} parent=0 // pred_region
    _
  $region5: #{gap_lenet_forward.3} parent=0 // pred_fallthru
    _
  // Predicated region
  $region6: #{gap_lenet_forward.3} parent=0 // pred_check
    _
  $region7: #{gap_lenet_forward.3} parent=0 // pred_check_branch
    %13 = sbr.rel (0) target = $region9
  $region8: #{gap_lenet_forward.3} parent=0 // pred_region
    _
  $region9: #{gap_lenet_forward.3} parent=0 // pred_fallthru
    _
  // Predicated region
  $region10: #{gap_lenet_forward.3} parent=0 // pred_check
    _
  $region11: #{gap_lenet_forward.3} parent=0 // pred_check_branch
    %15 = sbr.rel (0) target = $region13
  $region12: #{gap_lenet_forward.3} parent=0 // pred_region
    _
  $region13: #{gap_lenet_forward.3} parent=0 // pred_fallthru
    _
  %v16 = vld [vmem:[%s0] sm:$0xff]
  %v17 = vld [vmem:[%s0 + $0x8] sm:$0xff]
  %v18 = vld [vmem:[%s0 + $0x10] sm:$0xff]
  %v19 = vld [vmem:[%s0 + $0x18] sm:$0xff]
  %v20 = vld [vmem:[%s0 + $0x20] sm:$0xff]
  %v21 = vld [vmem:[%s0 + $0x28] sm:$0xff]
  %v22 = vld [vmem:[%s0 + $0x30] sm:$0xff]
  %v23 = vld [vmem:[%s0 + $0x38] sm:$0xff]
  %v32 = vrot.slane %v16, 4
  %v33 = vrot.slane %v17, 4
  %v34 = vrot.slane %v18, 4
  %v35 = vrot.slane %v20, 4
  %v36 = vrot.slane %v21, 4
  %v37 = vrot.slane %v22, 4
  %v38 = vld [vmem:[%s1] sm:$0xff]
  %v39 = vld [vmem:[%s1 + $0x8] sm:$0xff]
  %v40 = vld [vmem:[%s1 + $0x10] sm:$0xff]
  %v41 = vld [vmem:[%s1 + $0x18] sm:$0xff]
  %v42 = vld [vmem:[%s1 + $0x20] sm:$0xff]
  %v43 = vld [vmem:[%s1 + $0x28] sm:$0xff]
  %v44 = vld [vmem:[%s1 + $0x30] sm:$0xff]
  %v45 = vld [vmem:[%s1 + $0x38] sm:$0xff]
  %v46 = vld [vmem:[%s1 + $0x40] sm:$0xff]
  %v47 = vld [vmem:[%s1 + $0x48] sm:$0xff]
  %v48 = vld [vmem:[%s1 + $0x50] sm:$0xff]
  %v49 = vld [vmem:[%s1 + $0x58] sm:$0xff]
  %v50 = vld [vmem:[%s1 + $0x60] sm:$0xff]
  %v51 = vld [vmem:[%s1 + $0x68] sm:$0xff]
  %v52 = vld [vmem:[%s1 + $0x70] sm:$0xff]
  %v53 = vld [vmem:[%s1 + $0x78] sm:$0xff]
  %v54 = vld [vmem:[%s1 + $0x80] sm:$0xff]
  %v55 = vld [vmem:[%s1 + $0x88] sm:$0xff]
  %v56 = vld [vmem:[%s1 + $0x90] sm:$0xff]
  %v57 = vld [vmem:[%s1 + $0x98] sm:$0xff]
  %v58 = vld [vmem:[%s1 + $0xa0] sm:$0xff]
  %v59 = vld [vmem:[%s1 + $0xa8] sm:$0xff]
  %v60 = vld [vmem:[%s1 + $0xb0] sm:$0xff]
  %v61 = vld [vmem:[%s1 + $0xb8] sm:$0xff]
  %v62 = vrot.slane %v19, 4
  %v63 = vrot.slane %v23, 4
  %vm64 = vcmask 1042432
  %vm65 = vcmask 1046532
  %vm66 = vmor %vm64, %vm65
  %v67 = vrot.slane %v16, 5
  %v68 = vrot.slane %v67, 4
  %v69 = vrot.slane %v32, 5
  %v70 = vsel %vm66, %v68, %v69
  %v71 = vrot.slane %v69, 4
  %v72 = vrot.slane %v17, 5
  %v73 = vsel %vm66, %v71, %v72
  %v74 = vrot.slane %v72, 4
  %v75 = vrot.slane %v33, 5
  %v76 = vsel %vm66, %v74, %v75
  %v77 = vrot.slane %v75, 4
  %v78 = vrot.slane %v18, 5
  %v79 = vsel %vm66, %v77, %v78
  %v80 = vrot.slane %v78, 4
  %v81 = vrot.slane %v34, 5
  %v82 = vsel %vm66, %v80, %v81
  %v83 = vrot.slane %v81, 4
  %v84 = vrot.slane %v19, 5
  %v85 = vsel %vm66, %v83, %v84
  %v86 = vrot.slane %v84, 4
  %v87 = vrot.slane %v62, 5
  %v88 = vsel %vm66, %v86, %v87
  %v89 = vrot.slane %v20, 5
  %v90 = vrot.slane %v89, 4
  %v91 = vrot.slane %v35, 5
  %v92 = vsel %vm66, %v90, %v91
  %v93 = vrot.slane %v91, 4
  %v94 = vrot.slane %v21, 5
  %v95 = vsel %vm66, %v93, %v94
  %v96 = vrot.slane %v94, 4
  %v97 = vrot.slane %v36, 5
  %v98 = vsel %vm66, %v96, %v97
  %v99 = vrot.slane %v97, 4
  %v100 = vrot.slane %v22, 5
  %v101 = vsel %vm66, %v99, %v100
  %v102 = vrot.slane %v100, 4
  %v103 = vrot.slane %v37, 5
  %v104 = vsel %vm66, %v102, %v103
  %v105 = vrot.slane %v103, 4
  %v106 = vrot.slane %v23, 5
  %v107 = vsel %vm66, %v105, %v106
  %v108 = vrot.slane %v106, 4
  %v109 = vrot.slane %v63, 5
  %v110 = vsel %vm66, %v108, %v109
  %s111 = scalar_lea.vmem %s1, 192
  %v112 = vld [vmem:[%s111] sm:$0xff]
  %v113 = vld [vmem:[%s111 + $0x8] sm:$0xff]
  %v114 = vld [vmem:[%s111 + $0x10] sm:$0xff]
  %v115 = vld [vmem:[%s111 + $0x18] sm:$0xff]
  %v116 = vld [vmem:[%s111 + $0x20] sm:$0xff]
  %v117 = vld [vmem:[%s111 + $0x28] sm:$0xff]
  %v118 = vld [vmem:[%s111 + $0x30] sm:$0xff]
  %v119 = vld [vmem:[%s111 + $0x38] sm:$0xff]
  %v120 = vld [vmem:[%s111 + $0x40] sm:$0xff]
  %v121 = vld [vmem:[%s111 + $0x48] sm:$0xff]
  %v122 = vld [vmem:[%s111 + $0x50] sm:$0xff]
  %v123 = vld [vmem:[%s111 + $0x58] sm:$0xff]
  %v124 = vld [vmem:[%s111 + $0x60] sm:$0xff]
  %v125 = vld [vmem:[%s111 + $0x68] sm:$0xff]
  %v126 = vld [vmem:[%s111 + $0x70] sm:$0xff]
  %v127 = vld [vmem:[%s111 + $0x78] sm:$0xff]
  %v128 = vld [vmem:[%s111 + $0x80] sm:$0xff]
  %v129 = vld [vmem:[%s111 + $0x88] sm:$0xff]
  %v130 = vld [vmem:[%s111 + $0x90] sm:$0xff]
  %v131 = vld [vmem:[%s111 + $0x98] sm:$0xff]
  %v132 = vld [vmem:[%s111 + $0xa0] sm:$0xff]
  %v133 = vld [vmem:[%s111 + $0xa8] sm:$0xff]
  %v134 = vld [vmem:[%s111 + $0xb0] sm:$0xff]
  %v135 = vld [vmem:[%s111 + $0xb8] sm:$0xff]
  %136 = vst [vmem:[#allocation1] ss:$2 sm:$0xff] %v70
  %s137 = scalar_lea.vmem [#allocation1], 1
  %138 = vst [vmem:[%s137] ss:$2 sm:$0xff] %v73
  %s139 = scalar_lea.vmem [#allocation1], 16
  %140 = vst [vmem:[%s139] ss:$2 sm:$0xff] %v76
  %s141 = scalar_lea.vmem [#allocation1], 17
  %142 = vst [vmem:[%s141] ss:$2 sm:$0xff] %v79
  %s143 = scalar_lea.vmem [#allocation1], 32
  %144 = vst [vmem:[%s143] ss:$2 sm:$0xff] %v82
  %s145 = scalar_lea.vmem [#allocation1], 33
  %146 = vst [vmem:[%s145] ss:$2 sm:$0xff] %v85
  %s147 = scalar_lea.vmem [#allocation1], 48
  %148 = vst [vmem:[%s147] ss:$2 sm:$0xff] %v88
  %s149 = scalar_lea.vmem [#allocation1], 49
  %150 = vst [vmem:[%s149] ss:$2 sm:$0xff] %v92
  %v151 = vld.sshfl [vmem:[#allocation1] sm:$0xff pattern:$0x75316420]
  %v152 = vld.sshfl [vmem:[#allocation1 + $0x10] sm:$0xff pattern:$0x75316420]
  %v153 = vld.sshfl [vmem:[#allocation1 + $0x20] sm:$0xff pattern:$0x75316420]
  %v154 = vld.sshfl [vmem:[#allocation1 + $0x30] sm:$0xff pattern:$0x75316420]
  %155 = vst [vmem:[#allocation1] ss:$2 sm:$0xff] %v95
  %156 = vst [vmem:[%s137] ss:$2 sm:$0xff] %v98
  %157 = vst [vmem:[%s139] ss:$2 sm:$0xff] %v101
  %158 = vst [vmem:[%s141] ss:$2 sm:$0xff] %v104
  %159 = vst [vmem:[%s143] ss:$2 sm:$0xff] %v107
  %160 = vst [vmem:[%s145] ss:$2 sm:$0xff] %v110
  %v161 = vld.sshfl [vmem:[#allocation1] sm:$0xff pattern:$0x75316420]
  %v162 = vld.sshfl [vmem:[#allocation1 + $0x10] sm:$0xff pattern:$0x75316420]
  %v163 = vld.sshfl [vmem:[#allocation1 + $0x20] sm:$0xff pattern:$0x75316420]
  %vm164 = vcmask 785408
  %v165 = vsel %vm164, %v151, 0
  %v167 = vsel %vm164, %v152, 0
  %v169 = vsel %vm164, %v153, 0
  %v171 = vsel %vm164, %v154, 0
  %v173 = vsel %vm164, %v161, 0
  %v175 = vsel %vm164, %v162, 0
  %v177 = vsel %vm164, %v163, 0
  %179 = vmatpush.msra.mxu0 0.0
  %180 = vmatpush.msra.mxu0 0.0
  %181 = vmatpush.msra.mxu0 0.0
  %182 = vmatpush.msra.mxu0 0.0
  %183 = vmatpush.msra.mxu0 %v134
  %184 = vmatpush.msra.mxu0 %v132
  %185 = vmatpush.msra.mxu0 %v130
  %186 = vmatpush.msra.mxu0 %v128
  %187 = vmatpush.msra.mxu0 %v126
  %188 = vmatpush.msra.mxu0 %v124
  %189 = vmatpush.msra.mxu0 %v122
  %190 = vmatpush.msra.mxu0 %v120
  %191 = vmatpush.msra.mxu0 %v118
  %192 = vmatpush.msra.mxu0 %v116
  %193 = vmatpush.msra.mxu0 %v114
  %194 = vmatpush.msra.mxu0 %v112
  %195 = vmatmul.f32.gmra.mxu0 %v165
  %v196 = vpop.f32.mrf.mxu0
  %v197 = vadd.f32 0.0, %v196
  %198 = vmatmul.f32.gmra.mxu0 %v167
  %v199 = vpop.f32.mrf.mxu0
  %v200 = vadd.f32 0.0, %v199
  %201 = vmatmul.f32.gmra.mxu0 %v169
  %v202 = vpop.f32.mrf.mxu0
  %v203 = vadd.f32 0.0, %v202
  %204 = vmatmul.f32.gmra.mxu0 %v171
  %v205 = vpop.f32.mrf.mxu0
  %v206 = vadd.f32 0.0, %v205
  %207 = vmatmul.f32.gmra.mxu0 %v173
  %v208 = vpop.f32.mrf.mxu0
  %v209 = vadd.f32 0.0, %v208
  %210 = vmatmul.f32.gmra.mxu0 %v175
  %v211 = vpop.f32.mrf.mxu0
  %v212 = vadd.f32 0.0, %v211
  %213 = vmatmul.f32.gmra.mxu0 %v177
  %v214 = vpop.f32.mrf.mxu0
  %v215 = vadd.f32 0.0, %v214
  %216 = vdwg.mxu0
  %217 = vmatpush.msra.mxu0 0.0
  %218 = vmatpush.msra.mxu0 0.0
  %219 = vmatpush.msra.mxu0 0.0
  %220 = vmatpush.msra.mxu0 0.0
  %221 = vmatpush.msra.mxu0 %v135
  %222 = vmatpush.msra.mxu0 %v133
  %223 = vmatpush.msra.mxu0 %v131
  %224 = vmatpush.msra.mxu0 %v129
  %225 = vmatpush.msra.mxu0 %v127
  %226 = vmatpush.msra.mxu0 %v125
  %227 = vmatpush.msra.mxu0 %v123
  %228 = vmatpush.msra.mxu0 %v121
  %229 = vmatpush.msra.mxu0 %v119
  %230 = vmatpush.msra.mxu0 %v117
  %231 = vmatpush.msra.mxu0 %v115
  %232 = vmatpush.msra.mxu0 %v113
  %233 = vmatmul.f32.gmra.mxu0 %v165
  %v234 = vpop.f32.mrf.mxu0
  %v235 = vadd.f32 0.0, %v234
  %236 = vmatmul.f32.gmra.mxu0 %v167
  %v237 = vpop.f32.mrf.mxu0
  %v238 = vadd.f32 0.0, %v237
  %239 = vmatmul.f32.gmra.mxu0 %v169
  %v240 = vpop.f32.mrf.mxu0
  %v241 = vadd.f32 0.0, %v240
  %242 = vmatmul.f32.gmra.mxu0 %v171
  %v243 = vpop.f32.mrf.mxu0
  %v244 = vadd.f32 0.0, %v243
  %245 = vmatmul.f32.gmra.mxu0 %v173
  %v246 = vpop.f32.mrf.mxu0
  %v247 = vadd.f32 0.0, %v246
  %248 = vmatmul.f32.gmra.mxu0 %v175
  %v249 = vpop.f32.mrf.mxu0
  %v250 = vadd.f32 0.0, %v249
  %251 = vmatmul.f32.gmra.mxu0 %v177
  %v252 = vpop.f32.mrf.mxu0
  %v253 = vadd.f32 0.0, %v252
  %254 = vdwg.mxu0
  %255 = vst [vmem:[#allocation1] ss:$2 sm:$0xff] %v16
  %s256 = scalar_lea.vmem [#allocation1], 1
  %257 = vst [vmem:[%s256] ss:$2 sm:$0xff] %v32
  %s258 = scalar_lea.vmem [#allocation1], 16
  %259 = vst [vmem:[%s258] ss:$2 sm:$0xff] %v17
  %s260 = scalar_lea.vmem [#allocation1], 17
  %261 = vst [vmem:[%s260] ss:$2 sm:$0xff] %v33
  %s262 = scalar_lea.vmem [#allocation1], 32
  %263 = vst [vmem:[%s262] ss:$2 sm:$0xff] %v18
  %s264 = scalar_lea.vmem [#allocation1], 33
  %265 = vst [vmem:[%s264] ss:$2 sm:$0xff] %v34
  %s266 = scalar_lea.vmem [#allocation1], 48
  %267 = vst [vmem:[%s266] ss:$2 sm:$0xff] %v19
  %s268 = scalar_lea.vmem [#allocation1], 49
  %269 = vst [vmem:[%s268] ss:$2 sm:$0xff] %v20
  %v270 = vld.sshfl [vmem:[#allocation1] sm:$0xff pattern:$0x75316420]
  %v271 = vld.sshfl [vmem:[#allocation1 + $0x10] sm:$0xff pattern:$0x75316420]
  %v272 = vld.sshfl [vmem:[#allocation1 + $0x20] sm:$0xff pattern:$0x75316420]
  %v273 = vld.sshfl [vmem:[#allocation1 + $0x30] sm:$0xff pattern:$0x75316420]
  %274 = vst [vmem:[#allocation1] ss:$2 sm:$0xff] %v35
  %275 = vst [vmem:[%s256] ss:$2 sm:$0xff] %v21
  %276 = vst [vmem:[%s258] ss:$2 sm:$0xff] %v36
  %277 = vst [vmem:[%s260] ss:$2 sm:$0xff] %v22
  %278 = vst [vmem:[%s262] ss:$2 sm:$0xff] %v37
  %279 = vst [vmem:[%s264] ss:$2 sm:$0xff] %v23
  %v280 = vld.sshfl [vmem:[#allocation1] sm:$0xff pattern:$0x75316420]
  %v281 = vld.sshfl [vmem:[#allocation1 + $0x10] sm:$0xff pattern:$0x75316420]
  %v282 = vld.sshfl [vmem:[#allocation1 + $0x20] sm:$0xff pattern:$0x75316420]
  %v283 = vsel %vm164, %v270, 0
  %v285 = vsel %vm164, %v271, 0
  %v287 = vsel %vm164, %v272, 0
  %v289 = vsel %vm164, %v273, 0
  %v291 = vsel %vm164, %v280, 0
  %v293 = vsel %vm164, %v281, 0
  %v295 = vsel %vm164, %v282, 0
  %297 = vmatpush.msra.mxu0 0.0
  %298 = vmatpush.msra.mxu0 0.0
  %299 = vmatpush.msra.mxu0 0.0
  %300 = vmatpush.msra.mxu0 0.0
  %301 = vmatpush.msra.mxu0 %v60
  %302 = vmatpush.msra.mxu0 %v58
  %303 = vmatpush.msra.mxu0 %v56
  %304 = vmatpush.msra.mxu0 %v54
  %305 = vmatpush.msra.mxu0 %v52
  %306 = vmatpush.msra.mxu0 %v50
  %307 = vmatpush.msra.mxu0 %v48
  %308 = vmatpush.msra.mxu0 %v46
  %309 = vmatpush.msra.mxu0 %v44
  %310 = vmatpush.msra.mxu0 %v42
  %311 = vmatpush.msra.mxu0 %v40
  %312 = vmatpush.msra.mxu0 %v38
  %313 = vmatmul.f32.gmra.mxu0 %v283
  %v314 = vpop.f32.mrf.mxu0
  %v315 = vadd.f32 %v197, %v314
  %316 = vmatmul.f32.gmra.mxu0 %v285
  %v317 = vpop.f32.mrf.mxu0
  %v318 = vadd.f32 %v200, %v317
  %319 = vmatmul.f32.gmra.mxu0 %v287
  %v320 = vpop.f32.mrf.mxu0
  %v321 = vadd.f32 %v203, %v320
  %322 = vmatmul.f32.gmra.mxu0 %v289
  %v323 = vpop.f32.mrf.mxu0
  %v324 = vadd.f32 %v206, %v323
  %325 = vmatmul.f32.gmra.mxu0 %v291
  %v326 = vpop.f32.mrf.mxu0
  %v327 = vadd.f32 %v209, %v326
  %328 = vmatmul.f32.gmra.mxu0 %v293
  %v329 = vpop.f32.mrf.mxu0
  %v330 = vadd.f32 %v212, %v329
  %331 = vmatmul.f32.gmra.mxu0 %v295
  %v332 = vpop.f32.mrf.mxu0
  %v333 = vadd.f32 %v215, %v332
  %334 = vdwg.mxu0
  %335 = vmatpush.msra.mxu0 0.0
  %336 = vmatpush.msra.mxu0 0.0
  %337 = vmatpush.msra.mxu0 0.0
  %338 = vmatpush.msra.mxu0 0.0
  %339 = vmatpush.msra.mxu0 %v61
  %340 = vmatpush.msra.mxu0 %v59
  %341 = vmatpush.msra.mxu0 %v57
  %342 = vmatpush.msra.mxu0 %v55
  %343 = vmatpush.msra.mxu0 %v53
  %344 = vmatpush.msra.mxu0 %v51
  %345 = vmatpush.msra.mxu0 %v49
  %346 = vmatpush.msra.mxu0 %v47
  %347 = vmatpush.msra.mxu0 %v45
  %348 = vmatpush.msra.mxu0 %v43
  %349 = vmatpush.msra.mxu0 %v41
  %350 = vmatpush.msra.mxu0 %v39
  %351 = vmatmul.f32.gmra.mxu0 %v283
  %v352 = vpop.f32.mrf.mxu0
  %v353 = vadd.f32 %v235, %v352
  %354 = vmatmul.f32.gmra.mxu0 %v285
  %v355 = vpop.f32.mrf.mxu0
  %v356 = vadd.f32 %v238, %v355
  %357 = vmatmul.f32.gmra.mxu0 %v287
  %v358 = vpop.f32.mrf.mxu0
  %v359 = vadd.f32 %v241, %v358
  %360 = vmatmul.f32.gmra.mxu0 %v289
  %v361 = vpop.f32.mrf.mxu0
  %v362 = vadd.f32 %v244, %v361
  %363 = vmatmul.f32.gmra.mxu0 %v291
  %v364 = vpop.f32.mrf.mxu0
  %v365 = vadd.f32 %v247, %v364
  %366 = vmatmul.f32.gmra.mxu0 %v293
  %v367 = vpop.f32.mrf.mxu0
  %v368 = vadd.f32 %v250, %v367
  %369 = vmatmul.f32.gmra.mxu0 %v295
  %v370 = vpop.f32.mrf.mxu0
  %v371 = vadd.f32 %v253, %v370
  %372 = vdwg.mxu0
  %vm373 = vcmask 1041408
  %vm374 = vcmask 1045508
  %vm375 = vmor %vm373, %vm374
  %v376 = vrot.slane %v16, 6
  %v377 = vrot.slane %v376, 4
  %v378 = vrot.slane %v32, 6
  %v379 = vsel %vm375, %v377, %v378
  %v380 = vrot.slane %v378, 4
  %v381 = vrot.slane %v17, 6
  %v382 = vsel %vm375, %v380, %v381
  %v383 = vrot.slane %v381, 4
  %v384 = vrot.slane %v33, 6
  %v385 = vsel %vm375, %v383, %v384
  %v386 = vrot.slane %v384, 4
  %v387 = vrot.slane %v18, 6
  %v388 = vsel %vm375, %v386, %v387
  %v389 = vrot.slane %v387, 4
  %v390 = vrot.slane %v34, 6
  %v391 = vsel %vm375, %v389, %v390
  %v392 = vrot.slane %v390, 4
  %v393 = vrot.slane %v19, 6
  %v394 = vsel %vm375, %v392, %v393
  %v395 = vrot.slane %v393, 4
  %v396 = vrot.slane %v62, 6
  %v397 = vsel %vm375, %v395, %v396
  %v398 = vrot.slane %v20, 6
  %v399 = vrot.slane %v398, 4
  %v400 = vrot.slane %v35, 6
  %v401 = vsel %vm375, %v399, %v400
  %v402 = vrot.slane %v400, 4
  %v403 = vrot.slane %v21, 6
  %v404 = vsel %vm375, %v402, %v403
  %v405 = vrot.slane %v403, 4
  %v406 = vrot.slane %v36, 6
  %v407 = vsel %vm375, %v405, %v406
  %v408 = vrot.slane %v406, 4
  %v409 = vrot.slane %v22, 6
  %v410 = vsel %vm375, %v408, %v409
  %v411 = vrot.slane %v409, 4
  %v412 = vrot.slane %v37, 6
  %v413 = vsel %vm375, %v411, %v412
  %v414 = vrot.slane %v412, 4
  %v415 = vrot.slane %v23, 6
  %v416 = vsel %vm375, %v414, %v415
  %v417 = vrot.slane %v415, 4
  %v418 = vrot.slane %v63, 6
  %v419 = vsel %vm375, %v417, %v418
  %s420 = scalar_lea.vmem %s1, 384
  %v421 = vld [vmem:[%s420] sm:$0xff]
  %v422 = vld [vmem:[%s420 + $0x8] sm:$0xff]
  %v423 = vld [vmem:[%s420 + $0x10] sm:$0xff]
  %v424 = vld [vmem:[%s420 + $0x18] sm:$0xff]
  %v425 = vld [vmem:[%s420 + $0x20] sm:$0xff]
  %v426 = vld [vmem:[%s420 + $0x28] sm:$0xff]
  %v427 = vld [vmem:[%s420 + $0x30] sm:$0xff]
  %v428 = vld [vmem:[%s420 + $0x38] sm:$0xff]
  %v429 = vld [vmem:[%s420 + $0x40] sm:$0xff]
  %v430 = vld [vmem:[%s420 + $0x48] sm:$0xff]
  %v431 = vld [vmem:[%s420 + $0x50] sm:$0xff]
  %v432 = vld [vmem:[%s420 + $0x58] sm:$0xff]
  %v433 = vld [vmem:[%s420 + $0x60] sm:$0xff]
  %v434 = vld [vmem:[%s420 + $0x68] sm:$0xff]
  %v435 = vld [vmem:[%s420 + $0x70] sm:$0xff]
  %v436 = vld [vmem:[%s420 + $0x78] sm:$0xff]
  %v437 = vld [vmem:[%s420 + $0x80] sm:$0xff]
  %v438 = vld [vmem:[%s420 + $0x88] sm:$0xff]
  %v439 = vld [vmem:[%s420 + $0x90] sm:$0xff]
  %v440 = vld [vmem:[%s420 + $0x98] sm:$0xff]
  %v441 = vld [vmem:[%s420 + $0xa0] sm:$0xff]
  %v442 = vld [vmem:[%s420 + $0xa8] sm:$0xff]
  %v443 = vld [vmem:[%s420 + $0xb0] sm:$0xff]
  %v444 = vld [vmem:[%s420 + $0xb8] sm:$0xff]
  %445 = vst [vmem:[#allocation1] ss:$2 sm:$0xff] %v379
  %s446 = scalar_lea.vmem [#allocation1], 1
  %447 = vst [vmem:[%s446] ss:$2 sm:$0xff] %v382
  %s448 = scalar_lea.vmem [#allocation1], 16
  %449 = vst [vmem:[%s448] ss:$2 sm:$0xff] %v385
  %s450 = scalar_lea.vmem [#allocation1], 17
  %451 = vst [vmem:[%s450] ss:$2 sm:$0xff] %v388
  %s452 = scalar_lea.vmem [#allocation1], 32
  %453 = vst [vmem:[%s452] ss:$2 sm:$0xff] %v391
  %s454 = scalar_lea.vmem [#allocation1], 33
  %455 = vst [vmem:[%s454] ss:$2 sm:$0xff] %v394
  %s456 = scalar_lea.vmem [#allocation1], 48
  %457 = vst [vmem:[%s456] ss:$2 sm:$0xff] %v397
  %s458 = scalar_lea.vmem [#allocation1], 49
  %459 = vst [vmem:[%s458] ss:$2 sm:$0xff] %v401
  %v460 = vld.sshfl [vmem:[#allocation1] sm:$0xff pattern:$0x75316420]
  %v461 = vld.sshfl [vmem:[#allocation1 + $0x10] sm:$0xff pattern:$0x75316420]
  %v462 = vld.sshfl [vmem:[#allocation1 + $0x20] sm:$0xff pattern:$0x75316420]
  %v463 = vld.sshfl [vmem:[#allocation1 + $0x30] sm:$0xff pattern:$0x75316420]
  %464 = vst [vmem:[#allocation1] ss:$2 sm:$0xff] %v404
  %465 = vst [vmem:[%s446] ss:$2 sm:$0xff] %v407
  %466 = vst [vmem:[%s448] ss:$2 sm:$0xff] %v410
  %467 = vst [vmem:[%s450] ss:$2 sm:$0xff] %v413
  %468 = vst [vmem:[%s452] ss:$2 sm:$0xff] %v416
  %469 = vst [vmem:[%s454] ss:$2 sm:$0xff] %v419
  %v470 = vld.sshfl [vmem:[#allocation1] sm:$0xff pattern:$0x75316420]
  %v471 = vld.sshfl [vmem:[#allocation1 + $0x10] sm:$0xff pattern:$0x75316420]
  %v472 = vld.sshfl [vmem:[#allocation1 + $0x20] sm:$0xff pattern:$0x75316420]
  %v473 = vsel %vm164, %v460, 0
  %v475 = vsel %vm164, %v461, 0
  %v477 = vsel %vm164, %v462, 0
  %v479 = vsel %vm164, %v463, 0
  %v481 = vsel %vm164, %v470, 0
  %v483 = vsel %vm164, %v471, 0
  %v485 = vsel %vm164, %v472, 0
  %487 = vmatpush.msra.mxu0 0.0
  %488 = vmatpush.msra.mxu0 0.0
  %489 = vmatpush.msra.mxu0 0.0
  %490 = vmatpush.msra.mxu0 0.0
  %491 = vmatpush.msra.mxu0 %v443
  %492 = vmatpush.msra.mxu0 %v441
  %493 = vmatpush.msra.mxu0 %v439
  %494 = vmatpush.msra.mxu0 %v437
  %495 = vmatpush.msra.mxu0 %v435
  %496 = vmatpush.msra.mxu0 %v433
  %497 = vmatpush.msra.mxu0 %v431
  %498 = vmatpush.msra.mxu0 %v429
  %499 = vmatpush.msra.mxu0 %v427
  %500 = vmatpush.msra.mxu0 %v425
  %501 = vmatpush.msra.mxu0 %v423
  %502 = vmatpush.msra.mxu0 %v421
  %503 = vmatmul.f32.gmra.mxu0 %v473
  %v504 = vpop.f32.mrf.mxu0
  %v505 = vadd.f32 0.0, %v504
  %506 = vmatmul.f32.gmra.mxu0 %v475
  %v507 = vpop.f32.mrf.mxu0
  %v508 = vadd.f32 0.0, %v507
  %509 = vmatmul.f32.gmra.mxu0 %v477
  %v510 = vpop.f32.mrf.mxu0
  %v511 = vadd.f32 0.0, %v510
  %512 = vmatmul.f32.gmra.mxu0 %v479
  %v513 = vpop.f32.mrf.mxu0
  %v514 = vadd.f32 0.0, %v513
  %515 = vmatmul.f32.gmra.mxu0 %v481
  %v516 = vpop.f32.mrf.mxu0
  %v517 = vadd.f32 0.0, %v516
  %518 = vmatmul.f32.gmra.mxu0 %v483
  %v519 = vpop.f32.mrf.mxu0
  %v520 = vadd.f32 0.0, %v519
  %521 = vmatmul.f32.gmra.mxu0 %v485
  %v522 = vpop.f32.mrf.mxu0
  %v523 = vadd.f32 0.0, %v522
  %524 = vdwg.mxu0
  %525 = vmatpush.msra.mxu0 0.0
  %526 = vmatpush.msra.mxu0 0.0
  %527 = vmatpush.msra.mxu0 0.0
  %528 = vmatpush.msra.mxu0 0.0
  %529 = vmatpush.msra.mxu0 %v444
  %530 = vmatpush.msra.mxu0 %v442
  %531 = vmatpush.msra.mxu0 %v440
  %532 = vmatpush.msra.mxu0 %v438
  %533 = vmatpush.msra.mxu0 %v436
  %534 = vmatpush.msra.mxu0 %v434
  %535 = vmatpush.msra.mxu0 %v432
  %536 = vmatpush.msra.mxu0 %v430
  %537 = vmatpush.msra.mxu0 %v428
  %538 = vmatpush.msra.mxu0 %v426
  %539 = vmatpush.msra.mxu0 %v424
  %540 = vmatpush.msra.mxu0 %v422
  %541 = vmatmul.f32.gmra.mxu0 %v473
  %v542 = vpop.f32.mrf.mxu0
  %v543 = vadd.f32 0.0, %v542
  %544 = vmatmul.f32.gmra.mxu0 %v475
  %v545 = vpop.f32.mrf.mxu0
  %v546 = vadd.f32 0.0, %v545
  %547 = vmatmul.f32.gmra.mxu0 %v477
  %v548 = vpop.f32.mrf.mxu0
  %v549 = vadd.f32 0.0, %v548
  %550 = vmatmul.f32.gmra.mxu0 %v479
  %v551 = vpop.f32.mrf.mxu0
  %v552 = vadd.f32 0.0, %v551
  %553 = vmatmul.f32.gmra.mxu0 %v481
  %v554 = vpop.f32.mrf.mxu0
  %v555 = vadd.f32 0.0, %v554
  %556 = vmatmul.f32.gmra.mxu0 %v483
  %v557 = vpop.f32.mrf.mxu0
  %v558 = vadd.f32 0.0, %v557
  %559 = vmatmul.f32.gmra.mxu0 %v485
  %v560 = vpop.f32.mrf.mxu0
  %v561 = vadd.f32 0.0, %v560
  %562 = vdwg.mxu0
  %v563 = vadd.f32 %v315, %v505
  %v564 = vadd.f32 %v353, %v543
  %v565 = vadd.f32 %v318, %v508
  %v566 = vadd.f32 %v356, %v546
  %v567 = vadd.f32 %v321, %v511
  %v568 = vadd.f32 %v359, %v549
  %v569 = vadd.f32 %v324, %v514
  %v570 = vadd.f32 %v362, %v552
  %v571 = vadd.f32 %v327, %v517
  %v572 = vadd.f32 %v365, %v555
  %v573 = vadd.f32 %v330, %v520
  %v574 = vadd.f32 %v368, %v558
  %v575 = vadd.f32 %v333, %v523
  %v576 = vadd.f32 %v371, %v561
  %vm577 = vcmask 1040384
  %vm578 = vcmask 1044484
  %vm579 = vmor %vm577, %vm578
  %v580 = vrot.slane %v16, 7
  %v581 = vrot.slane %v580, 4
  %v582 = vrot.slane %v32, 7
  %v583 = vsel %vm579, %v581, %v582
  %v584 = vrot.slane %v582, 4
  %v585 = vrot.slane %v17, 7
  %v586 = vsel %vm579, %v584, %v585
  %v587 = vrot.slane %v585, 4
  %v588 = vrot.slane %v33, 7
  %v589 = vsel %vm579, %v587, %v588
  %v590 = vrot.slane %v588, 4
  %v591 = vrot.slane %v18, 7
  %v592 = vsel %vm579, %v590, %v591
  %v593 = vrot.slane %v591, 4
  %v594 = vrot.slane %v34, 7
  %v595 = vsel %vm579, %v593, %v594
  %v596 = vrot.slane %v594, 4
  %v597 = vrot.slane %v19, 7
  %v598 = vsel %vm579, %v596, %v597
  %v599 = vrot.slane %v597, 4
  %v600 = vrot.slane %v62, 7
  %v601 = vsel %vm579, %v599, %v600
  %v602 = vrot.slane %v20, 7
  %v603 = vrot.slane %v602, 4
  %v604 = vrot.slane %v35, 7
  %v605 = vsel %vm579, %v603, %v604
  %v606 = vrot.slane %v604, 4
  %v607 = vrot.slane %v21, 7
  %v608 = vsel %vm579, %v606, %v607
  %v609 = vrot.slane %v607, 4
  %v610 = vrot.slane %v36, 7
  %v611 = vsel %vm579, %v609, %v610
  %v612 = vrot.slane %v610, 4
  %v613 = vrot.slane %v22, 7
  %v614 = vsel %vm579, %v612, %v613
  %v615 = vrot.slane %v613, 4
  %v616 = vrot.slane %v37, 7
  %v617 = vsel %vm579, %v615, %v616
  %v618 = vrot.slane %v616, 4
  %v619 = vrot.slane %v23, 7
  %v620 = vsel %vm579, %v618, %v619
  %v621 = vrot.slane %v619, 4
  %v622 = vrot.slane %v63, 7
  %v623 = vsel %vm579, %v621, %v622
  %s624 = scalar_lea.vmem %s1, 576
  %v625 = vld [vmem:[%s624] sm:$0xff]
  %v626 = vld [vmem:[%s624 + $0x8] sm:$0xff]
  %v627 = vld [vmem:[%s624 + $0x10] sm:$0xff]
  %v628 = vld [vmem:[%s624 + $0x18] sm:$0xff]
  %v629 = vld [vmem:[%s624 + $0x20] sm:$0xff]
  %v630 = vld [vmem:[%s624 + $0x28] sm:$0xff]
  %v631 = vld [vmem:[%s624 + $0x30] sm:$0xff]
  %v632 = vld [vmem:[%s624 + $0x38] sm:$0xff]
  %v633 = vld [vmem:[%s624 + $0x40] sm:$0xff]
  %v634 = vld [vmem:[%s624 + $0x48] sm:$0xff]
  %v635 = vld [vmem:[%s624 + $0x50] sm:$0xff]
  %v636 = vld [vmem:[%s624 + $0x58] sm:$0xff]
  %v637 = vld [vmem:[%s624 + $0x60] sm:$0xff]
  %v638 = vld [vmem:[%s624 + $0x68] sm:$0xff]
  %v639 = vld [vmem:[%s624 + $0x70] sm:$0xff]
  %v640 = vld [vmem:[%s624 + $0x78] sm:$0xff]
  %v641 = vld [vmem:[%s624 + $0x80] sm:$0xff]
  %v642 = vld [vmem:[%s624 + $0x88] sm:$0xff]
  %v643 = vld [vmem:[%s624 + $0x90] sm:$0xff]
  %v644 = vld [vmem:[%s624 + $0x98] sm:$0xff]
  %v645 = vld [vmem:[%s624 + $0xa0] sm:$0xff]
  %v646 = vld [vmem:[%s624 + $0xa8] sm:$0xff]
  %v647 = vld [vmem:[%s624 + $0xb0] sm:$0xff]
  %v648 = vld [vmem:[%s624 + $0xb8] sm:$0xff]
  %649 = vst [vmem:[#allocation1] ss:$2 sm:$0xff] %v583
  %s650 = scalar_lea.vmem [#allocation1], 1
  %651 = vst [vmem:[%s650] ss:$2 sm:$0xff] %v586
  %s652 = scalar_lea.vmem [#allocation1], 16
  %653 = vst [vmem:[%s652] ss:$2 sm:$0xff] %v589
  %s654 = scalar_lea.vmem [#allocation1], 17
  %655 = vst [vmem:[%s654] ss:$2 sm:$0xff] %v592
  %s656 = scalar_lea.vmem [#allocation1], 32
  %657 = vst [vmem:[%s656] ss:$2 sm:$0xff] %v595
  %s658 = scalar_lea.vmem [#allocation1], 33
  %659 = vst [vmem:[%s658] ss:$2 sm:$0xff] %v598
  %s660 = scalar_lea.vmem [#allocation1], 48
  %661 = vst [vmem:[%s660] ss:$2 sm:$0xff] %v601
  %s662 = scalar_lea.vmem [#allocation1], 49
  %663 = vst [vmem:[%s662] ss:$2 sm:$0xff] %v605
  %v664 = vld.sshfl [vmem:[#allocation1] sm:$0xff pattern:$0x75316420]
  %v665 = vld.sshfl [vmem:[#allocation1 + $0x10] sm:$0xff pattern:$0x75316420]
  %v666 = vld.sshfl [vmem:[#allocation1 + $0x20] sm:$0xff pattern:$0x75316420]
  %v667 = vld.sshfl [vmem:[#allocation1 + $0x30] sm:$0xff pattern:$0x75316420]
  %668 = vst [vmem:[#allocation1] ss:$2 sm:$0xff] %v608
  %669 = vst [vmem:[%s650] ss:$2 sm:$0xff] %v611
  %670 = vst [vmem:[%s652] ss:$2 sm:$0xff] %v614
  %671 = vst [vmem:[%s654] ss:$2 sm:$0xff] %v617
  %672 = vst [vmem:[%s656] ss:$2 sm:$0xff] %v620
  %673 = vst [vmem:[%s658] ss:$2 sm:$0xff] %v623
  %v674 = vld.sshfl [vmem:[#allocation1] sm:$0xff pattern:$0x75316420]
  %v675 = vld.sshfl [vmem:[#allocation1 + $0x10] sm:$0xff pattern:$0x75316420]
  %v676 = vld.sshfl [vmem:[#allocation1 + $0x20] sm:$0xff pattern:$0x75316420]
  %v677 = vsel %vm164, %v664, 0
  %v679 = vsel %vm164, %v665, 0
  %v681 = vsel %vm164, %v666, 0
  %v683 = vsel %vm164, %v667, 0
  %v685 = vsel %vm164, %v674, 0
  %v687 = vsel %vm164, %v675, 0
  %v689 = vsel %vm164, %v676, 0
  %691 = vmatpush.msra.mxu0 0.0
  %692 = vmatpush.msra.mxu0 0.0
  %693 = vmatpush.msra.mxu0 0.0
  %694 = vmatpush.msra.mxu0 0.0
  %695 = vmatpush.msra.mxu0 %v647
  %696 = vmatpush.msra.mxu0 %v645
  %697 = vmatpush.msra.mxu0 %v643
  %698 = vmatpush.msra.mxu0 %v641
  %699 = vmatpush.msra.mxu0 %v639
  %700 = vmatpush.msra.mxu0 %v637
  %701 = vmatpush.msra.mxu0 %v635
  %702 = vmatpush.msra.mxu0 %v633
  %703 = vmatpush.msra.mxu0 %v631
  %704 = vmatpush.msra.mxu0 %v629
  %705 = vmatpush.msra.mxu0 %v627
  %706 = vmatpush.msra.mxu0 %v625
  %707 = vmatmul.f32.gmra.mxu0 %v677
  %v708 = vpop.f32.mrf.mxu0
  %v709 = vadd.f32 0.0, %v708
  %710 = vmatmul.f32.gmra.mxu0 %v679
  %v711 = vpop.f32.mrf.mxu0
  %v712 = vadd.f32 0.0, %v711
  %713 = vmatmul.f32.gmra.mxu0 %v681
  %v714 = vpop.f32.mrf.mxu0
  %v715 = vadd.f32 0.0, %v714
  %716 = vmatmul.f32.gmra.mxu0 %v683
  %v717 = vpop.f32.mrf.mxu0
  %v718 = vadd.f32 0.0, %v717
  %719 = vmatmul.f32.gmra.mxu0 %v685
  %v720 = vpop.f32.mrf.mxu0
  %v721 = vadd.f32 0.0, %v720
  %722 = vmatmul.f32.gmra.mxu0 %v687
  %v723 = vpop.f32.mrf.mxu0
  %v724 = vadd.f32 0.0, %v723
  %725 = vmatmul.f32.gmra.mxu0 %v689
  %v726 = vpop.f32.mrf.mxu0
  %v727 = vadd.f32 0.0, %v726
  %728 = vdwg.mxu0
  %729 = vmatpush.msra.mxu0 0.0
  %730 = vmatpush.msra.mxu0 0.0
  %731 = vmatpush.msra.mxu0 0.0
  %732 = vmatpush.msra.mxu0 0.0
  %733 = vmatpush.msra.mxu0 %v648
  %734 = vmatpush.msra.mxu0 %v646
  %735 = vmatpush.msra.mxu0 %v644
  %736 = vmatpush.msra.mxu0 %v642
  %737 = vmatpush.msra.mxu0 %v640
  %738 = vmatpush.msra.mxu0 %v638
  %739 = vmatpush.msra.mxu0 %v636
  %740 = vmatpush.msra.mxu0 %v634
  %741 = vmatpush.msra.mxu0 %v632
  %742 = vmatpush.msra.mxu0 %v630
  %743 = vmatpush.msra.mxu0 %v628
  %744 = vmatpush.msra.mxu0 %v626
  %745 = vmatmul.f32.gmra.mxu0 %v677
  %v746 = vpop.f32.mrf.mxu0
  %v747 = vadd.f32 0.0, %v746
  %748 = vmatmul.f32.gmra.mxu0 %v679
  %v749 = vpop.f32.mrf.mxu0
  %v750 = vadd.f32 0.0, %v749
  %751 = vmatmul.f32.gmra.mxu0 %v681
  %v752 = vpop.f32.mrf.mxu0
  %v753 = vadd.f32 0.0, %v752
  %754 = vmatmul.f32.gmra.mxu0 %v683
  %v755 = vpop.f32.mrf.mxu0
  %v756 = vadd.f32 0.0, %v755
  %757 = vmatmul.f32.gmra.mxu0 %v685
  %v758 = vpop.f32.mrf.mxu0
  %v759 = vadd.f32 0.0, %v758
  %760 = vmatmul.f32.gmra.mxu0 %v687
  %v761 = vpop.f32.mrf.mxu0
  %v762 = vadd.f32 0.0, %v761
  %763 = vmatmul.f32.gmra.mxu0 %v689
  %v764 = vpop.f32.mrf.mxu0
  %v765 = vadd.f32 0.0, %v764
  %766 = vdwg.mxu0
  %v767 = vadd.f32 %v563, %v709
  %v768 = vadd.f32 %v564, %v747
  %v769 = vadd.f32 %v565, %v712
  %v770 = vadd.f32 %v566, %v750
  %v771 = vadd.f32 %v567, %v715
  %v772 = vadd.f32 %v568, %v753
  %v773 = vadd.f32 %v569, %v718
  %v774 = vadd.f32 %v570, %v756
  %v775 = vadd.f32 %v571, %v721
  %v776 = vadd.f32 %v572, %v759
  %v777 = vadd.f32 %v573, %v724
  %v778 = vadd.f32 %v574, %v762
  %v779 = vadd.f32 %v575, %v727
  %v780 = vadd.f32 %v576, %v765
  %781 = vst.sshfl [vmem:[#allocation1] sm:$0xff pattern:$0x75316420] %v16
  %782 = vst.sshfl [vmem:[#allocation1 + $0x10] sm:$0xff pattern:$0x75316420] %v17
  %783 = vst.sshfl [vmem:[#allocation1 + $0x20] sm:$0xff pattern:$0x75316420] %v18
  %784 = vst.sshfl [vmem:[#allocation1 + $0x30] sm:$0xff pattern:$0x75316420] %v19
  %s785 = scalar_lea.vmem [#allocation1], 1
  %v786 = vld [vmem:[%s785] ss:$2 sm:$0xff]
  %s787 = scalar_lea.vmem [#allocation1], 16
  %v788 = vld [vmem:[%s787] ss:$2 sm:$0xff]
  %s789 = scalar_lea.vmem [#allocation1], 17
  %v790 = vld [vmem:[%s789] ss:$2 sm:$0xff]
  %s791 = scalar_lea.vmem [#allocation1], 32
  %v792 = vld [vmem:[%s791] ss:$2 sm:$0xff]
  %s793 = scalar_lea.vmem [#allocation1], 33
  %v794 = vld [vmem:[%s793] ss:$2 sm:$0xff]
  %s795 = scalar_lea.vmem [#allocation1], 48
  %v796 = vld [vmem:[%s795] ss:$2 sm:$0xff]
  %s797 = scalar_lea.vmem [#allocation1], 49
  %v798 = vld [vmem:[%s797] ss:$2 sm:$0xff]
  %799 = vst.sshfl [vmem:[#allocation1] sm:$0xff pattern:$0x75316420] %v20
  %800 = vst.sshfl [vmem:[#allocation1 + $0x10] sm:$0xff pattern:$0x75316420] %v21
  %801 = vst.sshfl [vmem:[#allocation1 + $0x20] sm:$0xff pattern:$0x75316420] %v22
  %802 = vst.sshfl [vmem:[#allocation1 + $0x30] sm:$0xff pattern:$0x75316420] %v23
  %v803 = vld [vmem:[%s785] ss:$2 sm:$0xff]
  %v804 = vld [vmem:[%s787] ss:$2 sm:$0xff]
  %v805 = vld [vmem:[%s789] ss:$2 sm:$0xff]
  %v806 = vld [vmem:[%s791] ss:$2 sm:$0xff]
  %v807 = vld [vmem:[%s793] ss:$2 sm:$0xff]
  %v808 = vld [vmem:[%s795] ss:$2 sm:$0xff]
  %v809 = vld [vmem:[%s797] ss:$2 sm:$0xff]
  %s810 = scalar_lea.vmem %s1, 768
  %v811 = vld [vmem:[%s810] sm:$0xff]
  %v812 = vld [vmem:[%s810 + $0x8] sm:$0xff]
  %v813 = vld [vmem:[%s810 + $0x10] sm:$0xff]
  %v814 = vld [vmem:[%s810 + $0x18] sm:$0xff]
  %v815 = vld [vmem:[%s810 + $0x20] sm:$0xff]
  %v816 = vld [vmem:[%s810 + $0x28] sm:$0xff]
  %v817 = vld [vmem:[%s810 + $0x30] sm:$0xff]
  %v818 = vld [vmem:[%s810 + $0x38] sm:$0xff]
  %v819 = vld [vmem:[%s810 + $0x40] sm:$0xff]
  %v820 = vld [vmem:[%s810 + $0x48] sm:$0xff]
  %v821 = vld [vmem:[%s810 + $0x50] sm:$0xff]
  %v822 = vld [vmem:[%s810 + $0x58] sm:$0xff]
  %v823 = vld [vmem:[%s810 + $0x60] sm:$0xff]
  %v824 = vld [vmem:[%s810 + $0x68] sm:$0xff]
  %v825 = vld [vmem:[%s810 + $0x70] sm:$0xff]
  %v826 = vld [vmem:[%s810 + $0x78] sm:$0xff]
  %v827 = vld [vmem:[%s810 + $0x80] sm:$0xff]
  %v828 = vld [vmem:[%s810 + $0x88] sm:$0xff]
  %v829 = vld [vmem:[%s810 + $0x90] sm:$0xff]
  %v830 = vld [vmem:[%s810 + $0x98] sm:$0xff]
  %v831 = vld [vmem:[%s810 + $0xa0] sm:$0xff]
  %v832 = vld [vmem:[%s810 + $0xa8] sm:$0xff]
  %v833 = vld [vmem:[%s810 + $0xb0] sm:$0xff]
  %v834 = vld [vmem:[%s810 + $0xb8] sm:$0xff]
  %835 = vst [vmem:[#allocation1] ss:$2 sm:$0xff] %v786
  %s836 = scalar_lea.vmem [#allocation1], 1
  %837 = vst [vmem:[%s836] ss:$2 sm:$0xff] %v788
  %s838 = scalar_lea.vmem [#allocation1], 16
  %839 = vst [vmem:[%s838] ss:$2 sm:$0xff] %v790
  %s840 = scalar_lea.vmem [#allocation1], 17
  %841 = vst [vmem:[%s840] ss:$2 sm:$0xff] %v792
  %s842 = scalar_lea.vmem [#allocation1], 32
  %843 = vst [vmem:[%s842] ss:$2 sm:$0xff] %v794
  %s844 = scalar_lea.vmem [#allocation1], 33
  %845 = vst [vmem:[%s844] ss:$2 sm:$0xff] %v796
  %s846 = scalar_lea.vmem [#allocation1], 48
  %847 = vst [vmem:[%s846] ss:$2 sm:$0xff] %v798
  %s848 = scalar_lea.vmem [#allocation1], 49
  %849 = vst [vmem:[%s848] ss:$2 sm:$0xff] %v803
  %v850 = vld.sshfl [vmem:[#allocation1] sm:$0xff pattern:$0x75316420]
  %v851 = vld.sshfl [vmem:[#allocation1 + $0x10] sm:$0xff pattern:$0x75316420]
  %v852 = vld.sshfl [vmem:[#allocation1 + $0x20] sm:$0xff pattern:$0x75316420]
  %v853 = vld.sshfl [vmem:[#allocation1 + $0x30] sm:$0xff pattern:$0x75316420]
  %854 = vst [vmem:[#allocation1] ss:$2 sm:$0xff] %v804
  %855 = vst [vmem:[%s836] ss:$2 sm:$0xff] %v805
  %856 = vst [vmem:[%s838] ss:$2 sm:$0xff] %v806
  %857 = vst [vmem:[%s840] ss:$2 sm:$0xff] %v807
  %858 = vst [vmem:[%s842] ss:$2 sm:$0xff] %v808
  %859 = vst [vmem:[%s844] ss:$2 sm:$0xff] %v809
  %v860 = vld.sshfl [vmem:[#allocation1] sm:$0xff pattern:$0x75316420]
  %v861 = vld.sshfl [vmem:[#allocation1 + $0x10] sm:$0xff pattern:$0x75316420]
  %v862 = vld.sshfl [vmem:[#allocation1 + $0x20] sm:$0xff pattern:$0x75316420]
  %v863 = vsel %vm164, %v850, 0
  %v865 = vsel %vm164, %v851, 0
  %v867 = vsel %vm164, %v852, 0
  %v869 = vsel %vm164, %v853, 0
  %v871 = vsel %vm164, %v860, 0
  %v873 = vsel %vm164, %v861, 0
  %v875 = vsel %vm164, %v862, 0
  %877 = vmatpush.msra.mxu0 0.0
  %878 = vmatpush.msra.mxu0 0.0
  %879 = vmatpush.msra.mxu0 0.0
  %880 = vmatpush.msra.mxu0 0.0
  %881 = vmatpush.msra.mxu0 %v833
  %882 = vmatpush.msra.mxu0 %v831
  %883 = vmatpush.msra.mxu0 %v829
  %884 = vmatpush.msra.mxu0 %v827
  %885 = vmatpush.msra.mxu0 %v825
  %886 = vmatpush.msra.mxu0 %v823
  %887 = vmatpush.msra.mxu0 %v821
  %888 = vmatpush.msra.mxu0 %v819
  %889 = vmatpush.msra.mxu0 %v817
  %890 = vmatpush.msra.mxu0 %v815
  %891 = vmatpush.msra.mxu0 %v813
  %892 = vmatpush.msra.mxu0 %v811
  %893 = vmatmul.f32.gmra.mxu0 %v863
  %v894 = vpop.f32.mrf.mxu0
  %v895 = vadd.f32 0.0, %v894
  %896 = vmatmul.f32.gmra.mxu0 %v865
  %v897 = vpop.f32.mrf.mxu0
  %v898 = vadd.f32 0.0, %v897
  %899 = vmatmul.f32.gmra.mxu0 %v867
  %v900 = vpop.f32.mrf.mxu0
  %v901 = vadd.f32 0.0, %v900
  %902 = vmatmul.f32.gmra.mxu0 %v869
  %v903 = vpop.f32.mrf.mxu0
  %v904 = vadd.f32 0.0, %v903
  %905 = vmatmul.f32.gmra.mxu0 %v871
  %v906 = vpop.f32.mrf.mxu0
  %v907 = vadd.f32 0.0, %v906
  %908 = vmatmul.f32.gmra.mxu0 %v873
  %v909 = vpop.f32.mrf.mxu0
  %v910 = vadd.f32 0.0, %v909
  %911 = vmatmul.f32.gmra.mxu0 %v875
  %v912 = vpop.f32.mrf.mxu0
  %v913 = vadd.f32 0.0, %v912
  %914 = vdwg.mxu0
  %915 = vmatpush.msra.mxu0 0.0
  %916 = vmatpush.msra.mxu0 0.0
  %917 = vmatpush.msra.mxu0 0.0
  %918 = vmatpush.msra.mxu0 0.0
  %919 = vmatpush.msra.mxu0 %v834
  %920 = vmatpush.msra.mxu0 %v832
  %921 = vmatpush.msra.mxu0 %v830
  %922 = vmatpush.msra.mxu0 %v828
  %923 = vmatpush.msra.mxu0 %v826
  %924 = vmatpush.msra.mxu0 %v824
  %925 = vmatpush.msra.mxu0 %v822
  %926 = vmatpush.msra.mxu0 %v820
  %927 = vmatpush.msra.mxu0 %v818
  %928 = vmatpush.msra.mxu0 %v816
  %929 = vmatpush.msra.mxu0 %v814
  %930 = vmatpush.msra.mxu0 %v812
  %931 = vmatmul.f32.gmra.mxu0 %v863
  %v932 = vpop.f32.mrf.mxu0
  %v933 = vadd.f32 0.0, %v932
  %934 = vmatmul.f32.gmra.mxu0 %v865
  %v935 = vpop.f32.mrf.mxu0
  %v936 = vadd.f32 0.0, %v935
  %937 = vmatmul.f32.gmra.mxu0 %v867
  %v938 = vpop.f32.mrf.mxu0
  %v939 = vadd.f32 0.0, %v938
  %940 = vmatmul.f32.gmra.mxu0 %v869
  %v941 = vpop.f32.mrf.mxu0
  %v942 = vadd.f32 0.0, %v941
  %943 = vmatmul.f32.gmra.mxu0 %v871
  %v944 = vpop.f32.mrf.mxu0
  %v945 = vadd.f32 0.0, %v944
  %946 = vmatmul.f32.gmra.mxu0 %v873
  %v947 = vpop.f32.mrf.mxu0
  %v948 = vadd.f32 0.0, %v947
  %949 = vmatmul.f32.gmra.mxu0 %v875
  %v950 = vpop.f32.mrf.mxu0
  %v951 = vadd.f32 0.0, %v950
  %952 = vdwg.mxu0
  %v953 = vadd.f32 %v767, %v895
  %v954 = vadd.f32 %v768, %v933
  %v955 = vadd.f32 %v769, %v898
  %v956 = vadd.f32 %v770, %v936
  %v957 = vadd.f32 %v771, %v901
  %v958 = vadd.f32 %v772, %v939
  %v959 = vadd.f32 %v773, %v904
  %v960 = vadd.f32 %v774, %v942
  %v961 = vadd.f32 %v775, %v907
  %v962 = vadd.f32 %v776, %v945
  %v963 = vadd.f32 %v777, %v910
  %v964 = vadd.f32 %v778, %v948
  %v965 = vadd.f32 %v779, %v913
  %v966 = vadd.f32 %v780, %v951
  %v967 = vld [vmem:[%s2] sm:$0x3]
  %v969 = vperm.slane %v967, 0
  %v970 = vperm.slane %v967, 1
  %v973 = vadd.f32 %v953, %v969
  %v974 = vadd.f32 %v954, %v970
  %v975 = vadd.f32 %v955, %v969
  %v976 = vadd.f32 %v956, %v970
  %v977 = vadd.f32 %v957, %v969
  %v978 = vadd.f32 %v958, %v970
  %v979 = vadd.f32 %v959, %v969
  %v980 = vadd.f32 %v960, %v970
  %v981 = vadd.f32 %v961, %v969
  %v982 = vadd.f32 %v962, %v970
  %v983 = vadd.f32 %v963, %v969
  %v984 = vadd.f32 %v964, %v970
  %v985 = vadd.f32 %v965, %v969
  %v986 = vadd.f32 %v966, %v970
  %987 = vst [vmem:[%s3] sm:$0xff] %v973
  %vm988 = vcmask 326656
  %989 = vst.msk [vmem:[%s3 + $0x8] sm:$0xff] %vm988, %v974
  %990 = vst [vmem:[%s3 + $0x10] sm:$0xff] %v975
  %991 = vst.msk [vmem:[%s3 + $0x18] sm:$0xff] %vm988, %v976
  %992 = vst [vmem:[%s3 + $0x20] sm:$0xff] %v977
  %993 = vst.msk [vmem:[%s3 + $0x28] sm:$0xff] %vm988, %v978
  %994 = vst [vmem:[%s3 + $0x30] sm:$0xff] %v979
  %995 = vst.msk [vmem:[%s3 + $0x38] sm:$0xff] %vm988, %v980
  %996 = vst [vmem:[%s3 + $0x40] sm:$0xff] %v981
  %997 = vst.msk [vmem:[%s3 + $0x48] sm:$0xff] %vm988, %v982
  %998 = vst [vmem:[%s3 + $0x50] sm:$0xff] %v983
  %999 = vst.msk [vmem:[%s3 + $0x58] sm:$0xff] %vm988, %v984
  %1000 = vst [vmem:[%s3 + $0x60] sm:$0xff] %v985
  %1001 = vst.msk [vmem:[%s3 + $0x68] sm:$0xff] %vm988, %v986
  %v1002 = vadd.f32 %v973, %v975
  %v1003 = vadd.f32 %v1002, %v977
  %v1004 = vadd.f32 %v1003, %v979
  %v1005 = vadd.f32 %v1004, %v981
  %v1006 = vadd.f32 %v1005, %v983
  %v1007 = vadd.f32 %v1006, %v985
  %v1008 = vrot.slane %v1007, 4
  %v1009 = vadd.f32 %v1007, %v1008
  %v1010 = vrot.slane %v1009, 2
  %v1011 = vadd.f32 %v1009, %v1010
  %v1012 = vrot.slane %v1011, 1
  %v1013 = vadd.f32 %v1011, %v1012
  %v1014 = vsel %vm988, %v974, 0.0
  %v1015 = vsel %vm988, %v976, 0.0
  %v1016 = vadd.f32 %v1014, %v1015
  %v1017 = vsel %vm988, %v978, 0.0
  %v1018 = vadd.f32 %v1016, %v1017
  %v1019 = vsel %vm988, %v980, 0.0
  %v1020 = vadd.f32 %v1018, %v1019
  %v1021 = vsel %vm988, %v982, 0.0
  %v1022 = vadd.f32 %v1020, %v1021
  %v1023 = vsel %vm988, %v984, 0.0
  %v1024 = vadd.f32 %v1022, %v1023
  %v1025 = vsel %vm988, %v986, 0.0
  %v1026 = vadd.f32 %v1024, %v1025
  %v1027 = vrot.slane %v1026, 4
  %v1028 = vadd.f32 %v1026, %v1027
  %v1029 = vrot.slane %v1028, 2
  %v1030 = vadd.f32 %v1028, %v1029
  %v1031 = vrot.slane %v1030, 1
  %v1032 = vadd.f32 %v1030, %v1031
  %v1033 = vmul.f32 %v1013, 0.017857144
  %v1034 = vmul.f32 %v1032, 0.017857144
  %v1035 = vsub.f32 %v973, %v1033
  %v1036 = vsub.f32 %v974, %v1034
  %v1037 = vsub.f32 %v975, %v1033
  %v1038 = vsub.f32 %v976, %v1034
  %v1039 = vsub.f32 %v977, %v1033
  %v1040 = vsub.f32 %v978, %v1034
  %v1041 = vsub.f32 %v979, %v1033
  %v1042 = vsub.f32 %v980, %v1034
  %v1043 = vsub.f32 %v981, %v1033
  %v1044 = vsub.f32 %v982, %v1034
  %v1045 = vsub.f32 %v983, %v1033
  %v1046 = vsub.f32 %v984, %v1034
  %v1047 = vsub.f32 %v985, %v1033
  %v1048 = vsub.f32 %v986, %v1034
  %v1049 = vmul.f32 %v1035, %v1035
  %v1050 = vmul.f32 %v1036, %v1036
  %v1051 = vmul.f32 %v1037, %v1037
  %v1052 = vmul.f32 %v1038, %v1038
  %v1053 = vmul.f32 %v1039, %v1039
  %v1054 = vmul.f32 %v1040, %v1040
  %v1055 = vmul.f32 %v1041, %v1041
  %v1056 = vmul.f32 %v1042, %v1042
  %v1057 = vmul.f32 %v1043, %v1043
  %v1058 = vmul.f32 %v1044, %v1044
  %v1059 = vmul.f32 %v1045, %v1045
  %v1060 = vmul.f32 %v1046, %v1046
  %v1061 = vmul.f32 %v1047, %v1047
  %v1062 = vmul.f32 %v1048, %v1048
  %v1063 = vadd.f32 %v1049, %v1051
  %v1064 = vadd.f32 %v1063, %v1053
  %v1065 = vadd.f32 %v1064, %v1055
  %v1066 = vadd.f32 %v1065, %v1057
  %v1067 = vadd.f32 %v1066, %v1059
  %v1068 = vadd.f32 %v1067, %v1061
  %v1069 = vrot.slane %v1068, 4
  %v1070 = vadd.f32 %v1068, %v1069
  %v1071 = vrot.slane %v1070, 2
  %v1072 = vadd.f32 %v1070, %v1071
  %v1073 = vrot.slane %v1072, 1
  %v1074 = vadd.f32 %v1072, %v1073
  %v1075 = vsel %vm988, %v1050, 0.0
  %v1076 = vsel %vm988, %v1052, 0.0
  %v1077 = vadd.f32 %v1075, %v1076
  %v1078 = vsel %vm988, %v1054, 0.0
  %v1079 = vadd.f32 %v1077, %v1078
  %v1080 = vsel %vm988, %v1056, 0.0
  %v1081 = vadd.f32 %v1079, %v1080
  %v1082 = vsel %vm988, %v1058, 0.0
  %v1083 = vadd.f32 %v1081, %v1082
  %v1084 = vsel %vm988, %v1060, 0.0
  %v1085 = vadd.f32 %v1083, %v1084
  %v1086 = vsel %vm988, %v1062, 0.0
  %v1087 = vadd.f32 %v1085, %v1086
  %v1088 = vrot.slane %v1087, 4
  %v1089 = vadd.f32 %v1087, %v1088
  %v1090 = vrot.slane %v1089, 2
  %v1091 = vadd.f32 %v1089, %v1090
  %v1092 = vrot.slane %v1091, 1
  %v1093 = vadd.f32 %v1091, %v1092
  %v1094 = vsel %vm577, %v1013, %v1074
  %v1095 = vsel %vm577, %v1032, %v1093
  %v1098 = vrot.slane %v1095, 6
  %v1099 = vsel %vm373, %v1094, %v1098
  %vm1101 = vcmask 322562
  %vm1102 = vmor %vm1101, %vm373
  %1103 = vst.msk [vmem:[%s4] sm:$0xf] %vm1102, %v1099
  // Predicated region
  $region14: #{gap_lenet_forward.3} parent=0 // pred_check
    _
  $region15: #{gap_lenet_forward.3} parent=0 // pred_check_branch
    %1105 = sbr.rel (0) target = $region17
  $region16: #{gap_lenet_forward.3} parent=0 // pred_region
    _
  $region17: #{gap_lenet_forward.3} parent=0 // pred_fallthru
    _
  // Predicated region
  $region18: #{gap_lenet_forward.3} parent=0 // pred_check
    _
  $region19: #{gap_lenet_forward.3} parent=0 // pred_check_branch
    %1107 = sbr.rel (0) target = $region21
  $region20: #{gap_lenet_forward.3} parent=0 // pred_region
    _
  $region21: #{gap_lenet_forward.3} parent=0 // pred_fallthru
    _
  // Predicated region
  $region22: #{gap_lenet_forward.3} parent=0 // pred_check
    _
  $region23: #{gap_lenet_forward.3} parent=0 // pred_check_branch
    %1109 = sbr.rel (0) target = $region25
  $region24: #{gap_lenet_forward.3} parent=0 // pred_region
    _
  $region25: #{gap_lenet_forward.3} parent=0 // pred_fallthru
    _
  // Predicated region
  $region26: #{gap_lenet_forward.3} parent=0 // pred_check
    _
  $region27: #{gap_lenet_forward.3} parent=0 // pred_check_branch
    %1111 = sbr.rel (0) target = $region29
  $region28: #{gap_lenet_forward.3} parent=0 // pred_region
    _
  $region29: #{gap_lenet_forward.3} parent=0 // pred_fallthru
    _

// kernel: tile.53
$region0: #{tile.53}
  #allocation0 [shape = 's32[1]{0}', space=sflag, size = 0x4, scoped, tag = 'scoped memory for tile.53']
  %s0 = inlined_call_operand.vmem [shape: f32[16], index: 0, kind: input, shape index: {}]
  %s1 = inlined_call_operand.vmem [shape: f32[10,16], index: 1, kind: output, shape index: {}]
  // Predicated region
  $region2: #{tile.53} parent=0 // pred_check
    _
  $region3: #{tile.53} parent=0 // pred_check_branch
    %3 = sbr.rel (0) target = $region5
  $region4: #{tile.53} parent=0 // pred_region
    _
  $region5: #{tile.53} parent=0 // pred_fallthru
    _
  %v4 = vld [vmem:[%s0] ss:$0 sm:$0xff]
  %5 = vst [vmem:[%s1] sm:$0xff] %v4
  %s6 = scalar_lea.vmem %s1, 8
  %7 = vst [vmem:[%s6] sm:$0xff] %v4

// kernel: tile.54
$region0: #{tile.54}
  %s0 = inlined_call_operand.vmem [shape: f32[10,16], index: 0, kind: input, shape index: {}]
  %s1 = inlined_call_operand.vmem [shape: f32[1,160], index: 1, kind: output, shape index: {}]
  $region1: #{tile.54} parent=0
    #allocation0 [shape = 'u8[8192]{0}', space=vmem, size = 0x2000, scoped, tag = 'scoped mem for output reshape']
    %s2 = smov 3
    %v3 = vld [vmem:[%s0] ss:$8 sm:%s2]
    %vm4 = vcmask 130048
    %5 = vst.msk [vmem:[#allocation0] ss:$8 sm:$0x3] %vm4, %v3
    %s6 = scalar_lea.vmem %s0, 7
    %v7 = vld [vmem:[%s6] sm:$0x1]
    %8 = vrot.lane.b32.xlu0 %v7, 112
    %v9 = vpop.permute.xlu0 %8
    %vm10 = vcmask 1048448
    %11 = vst.msk [vmem:[#allocation0] sm:$0x1] %vm10, %v9
    %s12 = scalar_lea.vmem %s0, 6
    %v13 = vld [vmem:[%s12] sm:$0x1]
    %14 = vrot.lane.b32.xlu0 %v13, 96
    %v15 = vpop.permute.xlu0 %14
    %vm16 = vcmask 917248
    %17 = vst.msk [vmem:[#allocation0] sm:$0x1] %vm16, %v15
    %s18 = scalar_lea.vmem %s0, 5
    %v19 = vld [vmem:[%s18] sm:$0x1]
    %20 = vrot.lane.b32.xlu0 %v19, 80
    %v21 = vpop.permute.xlu0 %20
    %vm22 = vcmask 786048
    %23 = vst.msk [vmem:[#allocation0] sm:$0x1] %vm22, %v21
    %s24 = scalar_lea.vmem %s0, 4
    %v25 = vld [vmem:[%s24] sm:$0x1]
    %26 = vrot.lane.b32.xlu0 %v25, 64
    %v27 = vpop.permute.xlu0 %26
    %vm28 = vcmask 654848
    %29 = vst.msk [vmem:[#allocation0] sm:$0x1] %vm28, %v27
    %s30 = scalar_lea.vmem %s0, 3
    %v31 = vld [vmem:[%s30] sm:$0x1]
    %32 = vrot.lane.b32.xlu0 %v31, 48
    %v33 = vpop.permute.xlu0 %32
    %vm34 = vcmask 523648
    %35 = vst.msk [vmem:[#allocation0] sm:$0x1] %vm34, %v33
    %s36 = scalar_lea.vmem %s0, 2
    %v37 = vld [vmem:[%s36] sm:$0x1]
    %38 = vrot.lane.b32.xlu0 %v37, 32
    %v39 = vpop.permute.xlu0 %38
    %vm40 = vcmask 392448
    %41 = vst.msk [vmem:[#allocation0] sm:$0x1] %vm40, %v39
    %s42 = scalar_lea.vmem %s0, 1
    %s43 = smov 3
    %v44 = vld [vmem:[%s42] ss:$8 sm:%s43]
    %45 = vrot.lane.b32.xlu0 %v44, 16
    %v46 = vpop.permute.xlu0 %45
    %vm47 = vcmask 261248
    %48 = vst.msk [vmem:[#allocation0] ss:$8 sm:$0x3] %vm47, %v46
    %s50 = ssub.s32 2, 1
    %v51 = vld [vmem:[#allocation0] sm:%s50]
    %s53 = ssub.s32 2, 1
    %54 = vst [vmem:[%s1] sm:%s53] %v51
    %s55 = scalar_lea.vmem [#allocation0], 8
    %v56 = vld [vmem:[%s55] sm:%s50]
    %s58 = ssub.s32 2, 1
    %s59 = scalar_lea.vmem %s1, 1
    %60 = vst [vmem:[%s59] sm:%s58] %v56

// kernel: gap_lenet_forward.4
$region0: #{gap_lenet_forward.4}
  #allocation0 [shape = 'u32[]', space=smem, size = 0x4, offset = 0x4, fixed_abs, tag = 'smem constant byte address 0x4 - core index']
  #allocation1 [shape = 'u32[72,128]{1,0:T(1,128)}', space=vmem, size = 0x9000, scoped, tag = 'internal scratch']
  %s0 = inlined_call_operand.vmem [shape: f32[56,168], index: 0, kind: input, shape index: {}]
  %s1 = inlined_call_operand.vmem [shape: f32[1,168], index: 1, kind: input, shape index: {}]
  %s2 = inlined_call_operand.vmem [shape: f32[1,168], index: 2, kind: input, shape index: {}]
  %s3 = inlined_call_operand.vmem [shape: f32[168,84], index: 3, kind: input, shape index: {}]
  %s4 = inlined_call_operand.vmem [shape: f32[168,84], index: 4, kind: input, shape index: {}]
  %s5 = inlined_call_operand.vmem [shape: f32[5,84,160], index: 5, kind: input, shape index: {}]
  %s6 = inlined_call_operand.vmem [shape: f32[1,160], index: 6, kind: input, shape index: {}]
  %s7 = inlined_call_operand.vmem [shape: f32[20,160], index: 7, kind: output, shape index: {0}]
  %s8 = inlined_call_operand.vmem [shape: f32[1,2,160], index: 8, kind: output, shape index: {1}]
  %9 = xla_tuple %s7, %s8
  %s10 = sld [smem:[#allocation0]]
  $region46: #{gap_lenet_forward.4} parent=0
    _
  %s12 = ssub.s32 1, %s10
  %s13 = scalar_select 0, %s12, %s10
  // Predicated region
  $region2: #{gap_lenet_forward.4} parent=0 // pred_check
    _
  $region3: #{gap_lenet_forward.4} parent=0 // pred_check_branch
    %15 = sbr.rel (0) target = $region5
  $region4: #{gap_lenet_forward.4} parent=0 // pred_region
    _
  $region5: #{gap_lenet_forward.4} parent=0 // pred_fallthru
    _
  // Predicated region
  $region6: #{gap_lenet_forward.4} parent=0 // pred_check
    _
  $region7: #{gap_lenet_forward.4} parent=0 // pred_check_branch
    %17 = sbr.rel (0) target = $region9
  $region8: #{gap_lenet_forward.4} parent=0 // pred_region
    _
  $region9: #{gap_lenet_forward.4} parent=0 // pred_fallthru
    _
  // Predicated region
  $region10: #{gap_lenet_forward.4} parent=0 // pred_check
    _
  $region11: #{gap_lenet_forward.4} parent=0 // pred_check_branch
    %19 = sbr.rel (0) target = $region13
  $region12: #{gap_lenet_forward.4} parent=0 // pred_region
    _
  $region13: #{gap_lenet_forward.4} parent=0 // pred_fallthru
    _
  // Predicated region
  $region14: #{gap_lenet_forward.4} parent=0 // pred_check
    _
  $region15: #{gap_lenet_forward.4} parent=0 // pred_check_branch
    %21 = sbr.rel (0) target = $region17
  $region16: #{gap_lenet_forward.4} parent=0 // pred_region
    _
  $region17: #{gap_lenet_forward.4} parent=0 // pred_fallthru
    _
  // Predicated region
  $region18: #{gap_lenet_forward.4} parent=0 // pred_check
    _
  $region19: #{gap_lenet_forward.4} parent=0 // pred_check_branch
    %23 = sbr.rel (0) target = $region21
  $region20: #{gap_lenet_forward.4} parent=0 // pred_region
    _
  $region21: #{gap_lenet_forward.4} parent=0 // pred_fallthru
    _
  // Predicated region
  $region22: #{gap_lenet_forward.4} parent=0 // pred_check
    _
  $region23: #{gap_lenet_forward.4} parent=0 // pred_check_branch
    %25 = sbr.rel (0) target = $region25
  $region24: #{gap_lenet_forward.4} parent=0 // pred_region
    _
  $region25: #{gap_lenet_forward.4} parent=0 // pred_fallthru
    _
  // Predicated region
  $region26: #{gap_lenet_forward.4} parent=0 // pred_check
    _
  $region27: #{gap_lenet_forward.4} parent=0 // pred_check_branch
    %27 = sbr.rel (0) target = $region29
  $region28: #{gap_lenet_forward.4} parent=0 // pred_region
    _
  $region29: #{gap_lenet_forward.4} parent=0 // pred_fallthru
    _
  %v28 = vld [vmem:[%s0] sm:$0xff]
  %v29 = vld [vmem:[%s0 + $0x8] sm:$0xff]
  %v30 = vld [vmem:[%s0 + $0x10] sm:$0xff]
  %v31 = vld [vmem:[%s0 + $0x18] sm:$0xff]
  %v32 = vld [vmem:[%s0 + $0x20] sm:$0xff]
  %v33 = vld [vmem:[%s0 + $0x28] sm:$0xff]
  %v34 = vld [vmem:[%s0 + $0x30] sm:$0xff]
  %v35 = vld [vmem:[%s0 + $0x38] sm:$0xff]
  %v36 = vld [vmem:[%s0 + $0x40] sm:$0xff]
  %v37 = vld [vmem:[%s0 + $0x48] sm:$0xff]
  %v38 = vld [vmem:[%s0 + $0x50] sm:$0xff]
  %v39 = vld [vmem:[%s0 + $0x58] sm:$0xff]
  %v40 = vld [vmem:[%s0 + $0x60] sm:$0xff]
  %v41 = vld [vmem:[%s0 + $0x68] sm:$0xff]
  %v42 = vld [vmem:[%s1] sm:$0x3]
  %v44 = vperm.slane %v42, 0
  %v45 = vperm.slane %v42, 1
  %v48 = vmul.f32 %v28, %v44
  %v49 = vmul.f32 %v29, %v45
  %v50 = vmul.f32 %v30, %v44
  %v51 = vmul.f32 %v31, %v45
  %v52 = vmul.f32 %v32, %v44
  %v53 = vmul.f32 %v33, %v45
  %v54 = vmul.f32 %v34, %v44
  %v55 = vmul.f32 %v35, %v45
  %v56 = vmul.f32 %v36, %v44
  %v57 = vmul.f32 %v37, %v45
  %v58 = vmul.f32 %v38, %v44
  %v59 = vmul.f32 %v39, %v45
  %v60 = vmul.f32 %v40, %v44
  %v61 = vmul.f32 %v41, %v45
  %v62 = vld [vmem:[%s2] sm:$0x3]
  %v64 = vperm.slane %v62, 0
  %v65 = vperm.slane %v62, 1
  %v68 = vadd.f32 %v48, %v64
  %v69 = vadd.f32 %v49, %v65
  %v70 = vadd.f32 %v50, %v64
  %v71 = vadd.f32 %v51, %v65
  %v72 = vadd.f32 %v52, %v64
  %v73 = vadd.f32 %v53, %v65
  %v74 = vadd.f32 %v54, %v64
  %v75 = vadd.f32 %v55, %v65
  %v76 = vadd.f32 %v56, %v64
  %v77 = vadd.f32 %v57, %v65
  %v78 = vadd.f32 %v58, %v64
  %v79 = vadd.f32 %v59, %v65
  %v80 = vadd.f32 %v60, %v64
  %v81 = vadd.f32 %v61, %v65
  %v82 = vmax.f32 %v68, 0.0
  %v83 = vmax.f32 %v69, 0.0
  %v84 = vmax.f32 %v70, 0.0
  %v85 = vmax.f32 %v71, 0.0
  %v86 = vmax.f32 %v72, 0.0
  %v87 = vmax.f32 %v73, 0.0
  %v88 = vmax.f32 %v74, 0.0
  %v89 = vmax.f32 %v75, 0.0
  %v90 = vmax.f32 %v76, 0.0
  %v91 = vmax.f32 %v77, 0.0
  %v92 = vmax.f32 %v78, 0.0
  %v93 = vmax.f32 %v79, 0.0
  %v94 = vmax.f32 %v80, 0.0
  %v95 = vmax.f32 %v81, 0.0
  %v96 = vld [vmem:[%s3] sm:$0xff]
  %v97 = vld [vmem:[%s3 + $0x8] sm:$0xff]
  %v98 = vld [vmem:[%s3 + $0x10] sm:$0xff]
  %v99 = vld [vmem:[%s3 + $0x18] sm:$0xff]
  %v100 = vld [vmem:[%s3 + $0x20] sm:$0xff]
  %v101 = vld [vmem:[%s3 + $0x28] sm:$0xff]
  %v102 = vld [vmem:[%s3 + $0x30] sm:$0xff]
  %v103 = vld [vmem:[%s3 + $0x38] sm:$0xff]
  %v104 = vld [vmem:[%s3 + $0x40] sm:$0xff]
  %v105 = vld [vmem:[%s3 + $0x48] sm:$0xff]
  %v106 = vld [vmem:[%s3 + $0x50] sm:$0xff]
  %v107 = vld [vmem:[%s3 + $0x58] sm:$0xff]
  %v108 = vld [vmem:[%s3 + $0x60] sm:$0xff]
  %v109 = vld [vmem:[%s3 + $0x68] sm:$0xff]
  %v110 = vld [vmem:[%s3 + $0x70] sm:$0xff]
  %v111 = vld [vmem:[%s3 + $0x78] sm:$0xff]
  %v112 = vld [vmem:[%s3 + $0x80] sm:$0xff]
  %v113 = vld [vmem:[%s3 + $0x88] sm:$0xff]
  %v114 = vld [vmem:[%s3 + $0x90] sm:$0xff]
  %v115 = vld [vmem:[%s3 + $0x98] sm:$0xff]
  %v116 = vld [vmem:[%s3 + $0xa0] sm:$0xff]
  %vm117 = vcmask 326656
  %v119 = vsel %vm117, %v83, 0
  %v122 = vsel %vm117, %v85, 0
  %v125 = vsel %vm117, %v87, 0
  %v128 = vsel %vm117, %v89, 0
  %v131 = vsel %vm117, %v91, 0
  %v134 = vsel %vm117, %v93, 0
  %v137 = vsel %vm117, %v95, 0
  %139 = vmatpush.msra.mxu0 %v111
  %140 = vmatpush.msra.mxu0 %v110
  %141 = vmatpush.msra.mxu0 %v109
  %142 = vmatpush.msra.mxu0 %v108
  %143 = vmatpush.msra.mxu0 %v107
  %144 = vmatpush.msra.mxu0 %v106
  %145 = vmatpush.msra.mxu0 %v105
  %146 = vmatpush.msra.mxu0 %v104
  %147 = vmatpush.msra.mxu0 %v103
  %148 = vmatpush.msra.mxu0 %v102
  %149 = vmatpush.msra.mxu0 %v101
  %150 = vmatpush.msra.mxu0 %v100
  %151 = vmatpush.msra.mxu0 %v99
  %152 = vmatpush.msra.mxu0 %v98
  %153 = vmatpush.msra.mxu0 %v97
  %154 = vmatpush.msra.mxu0 %v96
  %155 = vmatmul.f32.gmra.mxu0 %v82
  %v156 = vpop.f32.mrf.mxu0
  %v157 = vadd.f32 0.0, %v156
  %158 = vmatmul.f32.gmra.mxu0 %v84
  %v159 = vpop.f32.mrf.mxu0
  %v160 = vadd.f32 0.0, %v159
  %161 = vmatmul.f32.gmra.mxu0 %v86
  %v162 = vpop.f32.mrf.mxu0
  %v163 = vadd.f32 0.0, %v162
  %164 = vmatmul.f32.gmra.mxu0 %v88
  %v165 = vpop.f32.mrf.mxu0
  %v166 = vadd.f32 0.0, %v165
  %167 = vmatmul.f32.gmra.mxu0 %v90
  %v168 = vpop.f32.mrf.mxu0
  %v169 = vadd.f32 0.0, %v168
  %170 = vmatmul.f32.gmra.mxu0 %v92
  %v171 = vpop.f32.mrf.mxu0
  %v172 = vadd.f32 0.0, %v171
  %173 = vmatmul.f32.gmra.mxu0 %v94
  %v174 = vpop.f32.mrf.mxu0
  %v175 = vadd.f32 0.0, %v174
  %176 = vdwg.mxu0
  %177 = vmatpush.msra.mxu0 0.0
  %178 = vmatpush.msra.mxu0 0.0
  %179 = vmatpush.msra.mxu0 0.0
  %180 = vmatpush.msra.mxu0 0.0
  %181 = vmatpush.msra.mxu0 0.0
  %182 = vmatpush.msra.mxu0 0.0
  %183 = vmatpush.msra.mxu0 0.0
  %184 = vmatpush.msra.mxu0 0.0
  %185 = vmatpush.msra.mxu0 0.0
  %186 = vmatpush.msra.mxu0 0.0
  %187 = vmatpush.msra.mxu0 0.0
  %188 = vmatpush.msra.mxu0 %v116
  %189 = vmatpush.msra.mxu0 %v115
  %190 = vmatpush.msra.mxu0 %v114
  %191 = vmatpush.msra.mxu0 %v113
  %192 = vmatpush.msra.mxu0 %v112
  %193 = vmatmul.f32.gmra.mxu0 %v119
  %v194 = vpop.f32.mrf.mxu0
  %v195 = vadd.f32 %v157, %v194
  %196 = vmatmul.f32.gmra.mxu0 %v122
  %v197 = vpop.f32.mrf.mxu0
  %v198 = vadd.f32 %v160, %v197
  %199 = vmatmul.f32.gmra.mxu0 %v125
  %v200 = vpop.f32.mrf.mxu0
  %v201 = vadd.f32 %v163, %v200
  %202 = vmatmul.f32.gmra.mxu0 %v128
  %v203 = vpop.f32.mrf.mxu0
  %v204 = vadd.f32 %v166, %v203
  %205 = vmatmul.f32.gmra.mxu0 %v131
  %v206 = vpop.f32.mrf.mxu0
  %v207 = vadd.f32 %v169, %v206
  %208 = vmatmul.f32.gmra.mxu0 %v134
  %v209 = vpop.f32.mrf.mxu0
  %v210 = vadd.f32 %v172, %v209
  %211 = vmatmul.f32.gmra.mxu0 %v137
  %v212 = vpop.f32.mrf.mxu0
  %v213 = vadd.f32 %v175, %v212
  %214 = vdwg.mxu0
  %v215 = vld [vmem:[%s4] sm:$0xff]
  %v216 = vld [vmem:[%s4 + $0x8] sm:$0xff]
  %v217 = vld [vmem:[%s4 + $0x10] sm:$0xff]
  %v218 = vld [vmem:[%s4 + $0x18] sm:$0xff]
  %v219 = vld [vmem:[%s4 + $0x20] sm:$0xff]
  %v220 = vld [vmem:[%s4 + $0x28] sm:$0xff]
  %v221 = vld [vmem:[%s4 + $0x30] sm:$0xff]
  %v222 = vld [vmem:[%s4 + $0x38] sm:$0xff]
  %v223 = vld [vmem:[%s4 + $0x40] sm:$0xff]
  %v224 = vld [vmem:[%s4 + $0x48] sm:$0xff]
  %v225 = vld [vmem:[%s4 + $0x50] sm:$0xff]
  %v226 = vld [vmem:[%s4 + $0x58] sm:$0xff]
  %v227 = vld [vmem:[%s4 + $0x60] sm:$0xff]
  %v228 = vld [vmem:[%s4 + $0x68] sm:$0xff]
  %v229 = vld [vmem:[%s4 + $0x70] sm:$0xff]
  %v230 = vld [vmem:[%s4 + $0x78] sm:$0xff]
  %v231 = vld [vmem:[%s4 + $0x80] sm:$0xff]
  %v232 = vld [vmem:[%s4 + $0x88] sm:$0xff]
  %v233 = vld [vmem:[%s4 + $0x90] sm:$0xff]
  %v234 = vld [vmem:[%s4 + $0x98] sm:$0xff]
  %v235 = vld [vmem:[%s4 + $0xa0] sm:$0xff]
  %236 = vmatpush.msra.mxu0 %v230
  %237 = vmatpush.msra.mxu0 %v229
  %238 = vmatpush.msra.mxu0 %v228
  %239 = vmatpush.msra.mxu0 %v227
  %240 = vmatpush.msra.mxu0 %v226
  %241 = vmatpush.msra.mxu0 %v225
  %242 = vmatpush.msra.mxu0 %v224
  %243 = vmatpush.msra.mxu0 %v223
  %244 = vmatpush.msra.mxu0 %v222
  %245 = vmatpush.msra.mxu0 %v221
  %246 = vmatpush.msra.mxu0 %v220
  %247 = vmatpush.msra.mxu0 %v219
  %248 = vmatpush.msra.mxu0 %v218
  %249 = vmatpush.msra.mxu0 %v217
  %250 = vmatpush.msra.mxu0 %v216
  %251 = vmatpush.msra.mxu0 %v215
  %252 = vmatmul.f32.gmra.mxu0 %v82
  %v253 = vpop.f32.mrf.mxu0
  %v254 = vadd.f32 0.0, %v253
  %255 = vmatmul.f32.gmra.mxu0 %v84
  %v256 = vpop.f32.mrf.mxu0
  %v257 = vadd.f32 0.0, %v256
  %258 = vmatmul.f32.gmra.mxu0 %v86
  %v259 = vpop.f32.mrf.mxu0
  %v260 = vadd.f32 0.0, %v259
  %261 = vmatmul.f32.gmra.mxu0 %v88
  %v262 = vpop.f32.mrf.mxu0
  %v263 = vadd.f32 0.0, %v262
  %264 = vmatmul.f32.gmra.mxu0 %v90
  %v265 = vpop.f32.mrf.mxu0
  %v266 = vadd.f32 0.0, %v265
  %267 = vmatmul.f32.gmra.mxu0 %v92
  %v268 = vpop.f32.mrf.mxu0
  %v269 = vadd.f32 0.0, %v268
  %270 = vmatmul.f32.gmra.mxu0 %v94
  %v271 = vpop.f32.mrf.mxu0
  %v272 = vadd.f32 0.0, %v271
  %273 = vdwg.mxu0
  %274 = vmatpush.msra.mxu0 0.0
  %275 = vmatpush.msra.mxu0 0.0
  %276 = vmatpush.msra.mxu0 0.0
  %277 = vmatpush.msra.mxu0 0.0
  %278 = vmatpush.msra.mxu0 0.0
  %279 = vmatpush.msra.mxu0 0.0
  %280 = vmatpush.msra.mxu0 0.0
  %281 = vmatpush.msra.mxu0 0.0
  %282 = vmatpush.msra.mxu0 0.0
  %283 = vmatpush.msra.mxu0 0.0
  %284 = vmatpush.msra.mxu0 0.0
  %285 = vmatpush.msra.mxu0 %v235
  %286 = vmatpush.msra.mxu0 %v234
  %287 = vmatpush.msra.mxu0 %v233
  %288 = vmatpush.msra.mxu0 %v232
  %289 = vmatpush.msra.mxu0 %v231
  %290 = vmatmul.f32.gmra.mxu0 %v119
  %v291 = vpop.f32.mrf.mxu0
  %v292 = vadd.f32 %v254, %v291
  %293 = vmatmul.f32.gmra.mxu0 %v122
  %v294 = vpop.f32.mrf.mxu0
  %v295 = vadd.f32 %v257, %v294
  %296 = vmatmul.f32.gmra.mxu0 %v125
  %v297 = vpop.f32.mrf.mxu0
  %v298 = vadd.f32 %v260, %v297
  %299 = vmatmul.f32.gmra.mxu0 %v128
  %v300 = vpop.f32.mrf.mxu0
  %v301 = vadd.f32 %v263, %v300
  %302 = vmatmul.f32.gmra.mxu0 %v131
  %v303 = vpop.f32.mrf.mxu0
  %v304 = vadd.f32 %v266, %v303
  %305 = vmatmul.f32.gmra.mxu0 %v134
  %v306 = vpop.f32.mrf.mxu0
  %v307 = vadd.f32 %v269, %v306
  %308 = vmatmul.f32.gmra.mxu0 %v137
  %v309 = vpop.f32.mrf.mxu0
  %v310 = vadd.f32 %v272, %v309
  %311 = vdwg.mxu0
  %v312 = vmax.f32 %v195, %v292
  %v313 = vmax.f32 %v198, %v295
  %v314 = vmax.f32 %v201, %v298
  %v315 = vmax.f32 %v204, %v301
  %v316 = vmax.f32 %v207, %v304
  %v317 = vmax.f32 %v210, %v307
  %v318 = vmax.f32 %v213, %v310
  %v326 = vrot.slane %v312, 2
  %v327 = vrot.slane %v312, 4
  %v328 = vrot.slane %v312, 6
  %v329 = vrot.slane %v313, 2
  %v330 = vrot.slane %v313, 4
  %v331 = vrot.slane %v313, 6
  %v332 = vrot.slane %v314, 2
  %v333 = vrot.slane %v314, 4
  %v334 = vrot.slane %v314, 6
  %v335 = vrot.slane %v315, 2
  %v336 = vrot.slane %v315, 4
  %v337 = vrot.slane %v315, 6
  %v338 = vrot.slane %v316, 2
  %v339 = vrot.slane %v316, 4
  %v340 = vrot.slane %v316, 6
  %v341 = vrot.slane %v317, 2
  %v342 = vrot.slane %v317, 4
  %v343 = vrot.slane %v317, 6
  %v344 = vrot.slane %v318, 2
  %v345 = vrot.slane %v318, 4
  %v346 = vrot.slane %v318, 6
  %v368 = vrot.slane %v312, 7
  %v369 = vrot.slane %v368, 2
  %v370 = vrot.slane %v326, 7
  %v371 = vrot.slane %v370, 2
  %v372 = vrot.slane %v327, 7
  %v373 = vrot.slane %v372, 2
  %v374 = vrot.slane %v328, 7
  %v375 = vrot.slane %v374, 2
  %v376 = vrot.slane %v313, 7
  %v377 = vrot.slane %v376, 2
  %v378 = vrot.slane %v329, 7
  %v379 = vrot.slane %v378, 2
  %v380 = vrot.slane %v330, 7
  %v381 = vrot.slane %v380, 2
  %v382 = vrot.slane %v331, 7
  %v383 = vrot.slane %v382, 2
  %v384 = vrot.slane %v314, 7
  %v385 = vrot.slane %v384, 2
  %v386 = vrot.slane %v332, 7
  %v387 = vrot.slane %v386, 2
  %v388 = vrot.slane %v333, 7
  %v389 = vrot.slane %v388, 2
  %v390 = vrot.slane %v334, 7
  %v391 = vrot.slane %v390, 2
  %v392 = vrot.slane %v315, 7
  %v393 = vrot.slane %v392, 2
  %v394 = vrot.slane %v335, 7
  %v395 = vrot.slane %v394, 2
  %v396 = vrot.slane %v336, 7
  %v397 = vrot.slane %v396, 2
  %v398 = vrot.slane %v337, 7
  %v399 = vrot.slane %v398, 2
  %v400 = vrot.slane %v316, 7
  %v401 = vrot.slane %v400, 2
  %v402 = vrot.slane %v338, 7
  %v403 = vrot.slane %v402, 2
  %v404 = vrot.slane %v339, 7
  %v405 = vrot.slane %v404, 2
  %v406 = vrot.slane %v340, 7
  %v407 = vrot.slane %v406, 2
  %v408 = vrot.slane %v317, 7
  %v409 = vrot.slane %v408, 2
  %v410 = vrot.slane %v341, 7
  %v411 = vrot.slane %v410, 2
  %v412 = vrot.slane %v342, 7
  %v413 = vrot.slane %v412, 2
  %v414 = vrot.slane %v343, 7
  %v415 = vrot.slane %v414, 2
  %v416 = vrot.slane %v318, 7
  %v417 = vrot.slane %v416, 2
  %v418 = vrot.slane %v344, 7
  %v419 = vrot.slane %v418, 2
  %v420 = vrot.slane %v345, 7
  %v421 = vrot.slane %v420, 2
  %v422 = vrot.slane %v346, 7
  %v423 = vrot.slane %v422, 2
  %v452 = vmax.f32 %v312, %v369
  %v453 = vmax.f32 %v326, %v371
  %v454 = vmax.f32 %v327, %v373
  %v455 = vmax.f32 %v328, %v375
  %v456 = vmax.f32 %v313, %v377
  %v457 = vmax.f32 %v329, %v379
  %v458 = vmax.f32 %v330, %v381
  %v459 = vmax.f32 %v331, %v383
  %v460 = vmax.f32 %v314, %v385
  %v461 = vmax.f32 %v332, %v387
  %v462 = vmax.f32 %v333, %v389
  %v463 = vmax.f32 %v334, %v391
  %v464 = vmax.f32 %v315, %v393
  %v465 = vmax.f32 %v335, %v395
  %v466 = vmax.f32 %v336, %v397
  %v467 = vmax.f32 %v337, %v399
  %v468 = vmax.f32 %v316, %v401
  %v469 = vmax.f32 %v338, %v403
  %v470 = vmax.f32 %v339, %v405
  %v471 = vmax.f32 %v340, %v407
  %v472 = vmax.f32 %v317, %v409
  %v473 = vmax.f32 %v341, %v411
  %v474 = vmax.f32 %v342, %v413
  %v475 = vmax.f32 %v343, %v415
  %v476 = vmax.f32 %v318, %v417
  %v477 = vmax.f32 %v344, %v419
  %v478 = vmax.f32 %v345, %v421
  %v479 = vmax.f32 %v346, %v423
  %v480 = vld [vmem:[%s5] sm:$0xff]
  %v481 = vld [vmem:[%s5 + $0x8] sm:$0xff]
  %v482 = vld [vmem:[%s5 + $0x10] sm:$0xff]
  %v483 = vld [vmem:[%s5 + $0x18] sm:$0xff]
  %v484 = vld [vmem:[%s5 + $0x20] sm:$0xff]
  %v485 = vld [vmem:[%s5 + $0x28] sm:$0xff]
  %v486 = vld [vmem:[%s5 + $0x30] sm:$0xff]
  %v487 = vld [vmem:[%s5 + $0x38] sm:$0xff]
  %v488 = vld [vmem:[%s5 + $0x40] sm:$0xff]
  %v489 = vld [vmem:[%s5 + $0x48] sm:$0xff]
  %v490 = vld [vmem:[%s5 + $0x50] sm:$0xff]
  %v491 = vld [vmem:[%s5 + $0x58] sm:$0xff]
  %v492 = vld [vmem:[%s5 + $0x60] sm:$0xff]
  %v493 = vld [vmem:[%s5 + $0x68] sm:$0xff]
  %v494 = vld [vmem:[%s5 + $0x70] sm:$0xff]
  %v495 = vld [vmem:[%s5 + $0x78] sm:$0xff]
  %v496 = vld [vmem:[%s5 + $0x80] sm:$0xff]
  %v497 = vld [vmem:[%s5 + $0x88] sm:$0xff]
  %v498 = vld [vmem:[%s5 + $0x90] sm:$0xff]
  %v499 = vld [vmem:[%s5 + $0x98] sm:$0xff]
  %v500 = vld [vmem:[%s5 + $0xa0] sm:$0xf]
  %v501 = vld [vmem:[%s5 + $0xa8] sm:$0xf]
  %s502 = scalar_lea.vmem %s5, 176
  %v503 = vld [vmem:[%s502] sm:$0xff]
  %v504 = vld [vmem:[%s502 + $0x8] sm:$0xff]
  %v505 = vld [vmem:[%s502 + $0x10] sm:$0xff]
  %v506 = vld [vmem:[%s502 + $0x18] sm:$0xff]
  %v507 = vld [vmem:[%s502 + $0x20] sm:$0xff]
  %v508 = vld [vmem:[%s502 + $0x28] sm:$0xff]
  %v509 = vld [vmem:[%s502 + $0x30] sm:$0xff]
  %v510 = vld [vmem:[%s502 + $0x38] sm:$0xff]
  %v511 = vld [vmem:[%s502 + $0x40] sm:$0xff]
  %v512 = vld [vmem:[%s502 + $0x48] sm:$0xff]
  %v513 = vld [vmem:[%s502 + $0x50] sm:$0xff]
  %v514 = vld [vmem:[%s502 + $0x58] sm:$0xff]
  %v515 = vld [vmem:[%s502 + $0x60] sm:$0xff]
  %v516 = vld [vmem:[%s502 + $0x68] sm:$0xff]
  %v517 = vld [vmem:[%s502 + $0x70] sm:$0xff]
  %v518 = vld [vmem:[%s502 + $0x78] sm:$0xff]
  %v519 = vld [vmem:[%s502 + $0x80] sm:$0xff]
  %v520 = vld [vmem:[%s502 + $0x88] sm:$0xff]
  %v521 = vld [vmem:[%s502 + $0x90] sm:$0xff]
  %v522 = vld [vmem:[%s502 + $0x98] sm:$0xff]
  %v523 = vld [vmem:[%s502 + $0xa0] sm:$0xf]
  %v524 = vld [vmem:[%s502 + $0xa8] sm:$0xf]
  %v545 = vperm.slane %v453, 0
  %v546 = vperm.slane %v454, 0
  %v547 = vperm.slane %v455, 0
  %v548 = vperm.slane %v456, 0
  %v549 = vperm.slane %v457, 0
  %v550 = vperm.slane %v458, 0
  %v551 = vperm.slane %v459, 0
  %v552 = vperm.slane %v460, 0
  %v553 = vperm.slane %v461, 0
  %v554 = vperm.slane %v462, 0
  %v555 = vperm.slane %v467, 0
  %v556 = vperm.slane %v468, 0
  %v557 = vperm.slane %v469, 0
  %v558 = vperm.slane %v470, 0
  %v559 = vperm.slane %v471, 0
  %v560 = vperm.slane %v472, 0
  %v561 = vperm.slane %v473, 0
  %v562 = vperm.slane %v474, 0
  %v563 = vperm.slane %v475, 0
  %v564 = vperm.slane %v476, 0
  %vm565 = vcmask 1041409
  %v566 = vsel %vm565, %v546, %v545
  %vm567 = vcmask 1042434
  %v568 = vsel %vm567, %v547, %v566
  %vm569 = vcmask 1043459
  %v570 = vsel %vm569, %v548, %v568
  %vm571 = vcmask 1044484
  %v572 = vsel %vm571, %v549, %v570
  %vm573 = vcmask 1045509
  %v574 = vsel %vm573, %v550, %v572
  %vm575 = vcmask 1046534
  %v576 = vsel %vm575, %v551, %v574
  %vm577 = vcmask 1047559
  %v578 = vsel %vm577, %v552, %v576
  %v579 = vsel %vm565, %v554, %v553
  %v580 = vsel %vm567, %v555, %v579
  %v581 = vsel %vm569, %v556, %v580
  %v582 = vsel %vm571, %v557, %v581
  %v583 = vsel %vm573, %v558, %v582
  %v584 = vsel %vm575, %v559, %v583
  %v585 = vsel %vm577, %v560, %v584
  %v586 = vsel %vm565, %v562, %v561
  %v587 = vsel %vm567, %v563, %v586
  %v588 = vsel %vm569, %v564, %v587
  %vm589 = vcmask 687104
  %v590 = vsel %vm589, %v578, 0
  %v592 = vsel %vm589, %v585, 0
  %v594 = vsel %vm589, %v588, 0
  %vm596 = vcmask 1043456
  %v598 = vsel %vm596, %v523, 0
  %v601 = vsel %vm596, %v524, 0
  %603 = vmatpush.msra.mxu0 0.0
  %604 = vmatpush.msra.mxu0 0.0
  %605 = vmatpush.msra.mxu0 0.0
  %606 = vmatpush.msra.mxu0 0.0
  %607 = vmatpush.msra.mxu0 0.0
  %608 = vmatpush.msra.mxu0 %v598
  %609 = vmatpush.msra.mxu0 %v521
  %610 = vmatpush.msra.mxu0 %v519
  %611 = vmatpush.msra.mxu0 %v517
  %612 = vmatpush.msra.mxu0 %v515
  %613 = vmatpush.msra.mxu0 %v513
  %614 = vmatpush.msra.mxu0 %v511
  %615 = vmatpush.msra.mxu0 %v509
  %616 = vmatpush.msra.mxu0 %v507
  %617 = vmatpush.msra.mxu0 %v505
  %618 = vmatpush.msra.mxu0 %v503
  %619 = vmatmul.f32.gmra.mxu0 %v590
  %v620 = vpop.f32.mrf.mxu0
  %v621 = vadd.f32 0.0, %v620
  %622 = vmatmul.f32.gmra.mxu0 %v592
  %v623 = vpop.f32.mrf.mxu0
  %v624 = vadd.f32 0.0, %v623
  %625 = vmatmul.f32.gmra.mxu0 %v594
  %v626 = vpop.f32.mrf.mxu0
  %v627 = vadd.f32 0.0, %v626
  %628 = vdwg.mxu0
  %629 = vmatpush.msra.mxu0 0.0
  %630 = vmatpush.msra.mxu0 0.0
  %631 = vmatpush.msra.mxu0 0.0
  %632 = vmatpush.msra.mxu0 0.0
  %633 = vmatpush.msra.mxu0 0.0
  %634 = vmatpush.msra.mxu0 %v601
  %635 = vmatpush.msra.mxu0 %v522
  %636 = vmatpush.msra.mxu0 %v520
  %637 = vmatpush.msra.mxu0 %v518
  %638 = vmatpush.msra.mxu0 %v516
  %639 = vmatpush.msra.mxu0 %v514
  %640 = vmatpush.msra.mxu0 %v512
  %641 = vmatpush.msra.mxu0 %v510
  %642 = vmatpush.msra.mxu0 %v508
  %643 = vmatpush.msra.mxu0 %v506
  %644 = vmatpush.msra.mxu0 %v504
  %645 = vmatmul.f32.gmra.mxu0 %v590
  %v646 = vpop.f32.mrf.mxu0
  %v647 = vadd.f32 0.0, %v646
  %648 = vmatmul.f32.gmra.mxu0 %v592
  %v649 = vpop.f32.mrf.mxu0
  %v650 = vadd.f32 0.0, %v649
  %651 = vmatmul.f32.gmra.mxu0 %v594
  %v652 = vpop.f32.mrf.mxu0
  %v653 = vadd.f32 0.0, %v652
  %654 = vdwg.mxu0
  %v657 = vperm.slane %v452, 0
  %v658 = vperm.slane %v466, 0
  %v659 = vsel %vm565, %v545, %v657
  %v660 = vsel %vm567, %v546, %v659
  %v661 = vsel %vm569, %v547, %v660
  %v662 = vsel %vm571, %v548, %v661
  %v663 = vsel %vm573, %v549, %v662
  %v664 = vsel %vm575, %v550, %v663
  %v665 = vsel %vm577, %v551, %v664
  %v666 = vsel %vm565, %v553, %v552
  %v667 = vsel %vm567, %v658, %v666
  %v668 = vsel %vm569, %v555, %v667
  %v669 = vsel %vm571, %v556, %v668
  %v670 = vsel %vm573, %v557, %v669
  %v671 = vsel %vm575, %v558, %v670
  %v672 = vsel %vm577, %v559, %v671
  %v673 = vsel %vm565, %v561, %v560
  %v674 = vsel %vm567, %v562, %v673
  %v675 = vsel %vm569, %v563, %v674
  %v676 = vsel %vm589, %v665, 0
  %v678 = vsel %vm589, %v672, 0
  %v680 = vsel %vm589, %v675, 0
  %v683 = vsel %vm596, %v500, 0
  %v686 = vsel %vm596, %v501, 0
  %688 = vmatpush.msra.mxu0 0.0
  %689 = vmatpush.msra.mxu0 0.0
  %690 = vmatpush.msra.mxu0 0.0
  %691 = vmatpush.msra.mxu0 0.0
  %692 = vmatpush.msra.mxu0 0.0
  %693 = vmatpush.msra.mxu0 %v683
  %694 = vmatpush.msra.mxu0 %v498
  %695 = vmatpush.msra.mxu0 %v496
  %696 = vmatpush.msra.mxu0 %v494
  %697 = vmatpush.msra.mxu0 %v492
  %698 = vmatpush.msra.mxu0 %v490
  %699 = vmatpush.msra.mxu0 %v488
  %700 = vmatpush.msra.mxu0 %v486
  %701 = vmatpush.msra.mxu0 %v484
  %702 = vmatpush.msra.mxu0 %v482
  %703 = vmatpush.msra.mxu0 %v480
  %704 = vmatmul.f32.gmra.mxu0 %v676
  %v705 = vpop.f32.mrf.mxu0
  %v706 = vadd.f32 %v621, %v705
  %707 = vmatmul.f32.gmra.mxu0 %v678
  %v708 = vpop.f32.mrf.mxu0
  %v709 = vadd.f32 %v624, %v708
  %710 = vmatmul.f32.gmra.mxu0 %v680
  %v711 = vpop.f32.mrf.mxu0
  %v712 = vadd.f32 %v627, %v711
  %713 = vdwg.mxu0
  %714 = vmatpush.msra.mxu0 0.0
  %715 = vmatpush.msra.mxu0 0.0
  %716 = vmatpush.msra.mxu0 0.0
  %717 = vmatpush.msra.mxu0 0.0
  %718 = vmatpush.msra.mxu0 0.0
  %719 = vmatpush.msra.mxu0 %v686
  %720 = vmatpush.msra.mxu0 %v499
  %721 = vmatpush.msra.mxu0 %v497
  %722 = vmatpush.msra.mxu0 %v495
  %723 = vmatpush.msra.mxu0 %v493
  %724 = vmatpush.msra.mxu0 %v491
  %725 = vmatpush.msra.mxu0 %v489
  %726 = vmatpush.msra.mxu0 %v487
  %727 = vmatpush.msra.mxu0 %v485
  %728 = vmatpush.msra.mxu0 %v483
  %729 = vmatpush.msra.mxu0 %v481
  %730 = vmatmul.f32.gmra.mxu0 %v676
  %v731 = vpop.f32.mrf.mxu0
  %v732 = vadd.f32 %v647, %v731
  %733 = vmatmul.f32.gmra.mxu0 %v678
  %v734 = vpop.f32.mrf.mxu0
  %v735 = vadd.f32 %v650, %v734
  %736 = vmatmul.f32.gmra.mxu0 %v680
  %v737 = vpop.f32.mrf.mxu0
  %v738 = vadd.f32 %v653, %v737
  %739 = vdwg.mxu0
  %s740 = scalar_lea.vmem %s5, 352
  %v741 = vld [vmem:[%s740] sm:$0xff]
  %v742 = vld [vmem:[%s740 + $0x8] sm:$0xff]
  %v743 = vld [vmem:[%s740 + $0x10] sm:$0xff]
  %v744 = vld [vmem:[%s740 + $0x18] sm:$0xff]
  %v745 = vld [vmem:[%s740 + $0x20] sm:$0xff]
  %v746 = vld [vmem:[%s740 + $0x28] sm:$0xff]
  %v747 = vld [vmem:[%s740 + $0x30] sm:$0xff]
  %v748 = vld [vmem:[%s740 + $0x38] sm:$0xff]
  %v749 = vld [vmem:[%s740 + $0x40] sm:$0xff]
  %v750 = vld [vmem:[%s740 + $0x48] sm:$0xff]
  %v751 = vld [vmem:[%s740 + $0x50] sm:$0xff]
  %v752 = vld [vmem:[%s740 + $0x58] sm:$0xff]
  %v753 = vld [vmem:[%s740 + $0x60] sm:$0xff]
  %v754 = vld [vmem:[%s740 + $0x68] sm:$0xff]
  %v755 = vld [vmem:[%s740 + $0x70] sm:$0xff]
  %v756 = vld [vmem:[%s740 + $0x78] sm:$0xff]
  %v757 = vld [vmem:[%s740 + $0x80] sm:$0xff]
  %v758 = vld [vmem:[%s740 + $0x88] sm:$0xff]
  %v759 = vld [vmem:[%s740 + $0x90] sm:$0xff]
  %v760 = vld [vmem:[%s740 + $0x98] sm:$0xff]
  %v761 = vld [vmem:[%s740 + $0xa0] sm:$0xf]
  %v762 = vld [vmem:[%s740 + $0xa8] sm:$0xf]
  %v765 = vperm.slane %v463, 0
  %v766 = vperm.slane %v477, 0
  %v767 = vsel %vm565, %v547, %v546
  %v768 = vsel %vm567, %v548, %v767
  %v769 = vsel %vm569, %v549, %v768
  %v770 = vsel %vm571, %v550, %v769
  %v771 = vsel %vm573, %v551, %v770
  %v772 = vsel %vm575, %v552, %v771
  %v773 = vsel %vm577, %v553, %v772
  %v774 = vsel %vm565, %v765, %v554
  %v775 = vsel %vm567, %v556, %v774
  %v776 = vsel %vm569, %v557, %v775
  %v777 = vsel %vm571, %v558, %v776
  %v778 = vsel %vm573, %v559, %v777
  %v779 = vsel %vm575, %v560, %v778
  %v780 = vsel %vm577, %v561, %v779
  %v781 = vsel %vm565, %v563, %v562
  %v782 = vsel %vm567, %v564, %v781
  %v783 = vsel %vm569, %v766, %v782
  %v784 = vsel %vm589, %v773, 0
  %v786 = vsel %vm589, %v780, 0
  %v788 = vsel %vm589, %v783, 0
  %v791 = vsel %vm596, %v761, 0
  %v794 = vsel %vm596, %v762, 0
  %796 = vmatpush.msra.mxu0 0.0
  %797 = vmatpush.msra.mxu0 0.0
  %798 = vmatpush.msra.mxu0 0.0
  %799 = vmatpush.msra.mxu0 0.0
  %800 = vmatpush.msra.mxu0 0.0
  %801 = vmatpush.msra.mxu0 %v791
  %802 = vmatpush.msra.mxu0 %v759
  %803 = vmatpush.msra.mxu0 %v757
  %804 = vmatpush.msra.mxu0 %v755
  %805 = vmatpush.msra.mxu0 %v753
  %806 = vmatpush.msra.mxu0 %v751
  %807 = vmatpush.msra.mxu0 %v749
  %808 = vmatpush.msra.mxu0 %v747
  %809 = vmatpush.msra.mxu0 %v745
  %810 = vmatpush.msra.mxu0 %v743
  %811 = vmatpush.msra.mxu0 %v741
  %812 = vmatmul.f32.gmra.mxu0 %v784
  %v813 = vpop.f32.mrf.mxu0
  %v814 = vadd.f32 0.0, %v813
  %815 = vmatmul.f32.gmra.mxu0 %v786
  %v816 = vpop.f32.mrf.mxu0
  %v817 = vadd.f32 0.0, %v816
  %818 = vmatmul.f32.gmra.mxu0 %v788
  %v819 = vpop.f32.mrf.mxu0
  %v820 = vadd.f32 0.0, %v819
  %821 = vdwg.mxu0
  %822 = vmatpush.msra.mxu0 0.0
  %823 = vmatpush.msra.mxu0 0.0
  %824 = vmatpush.msra.mxu0 0.0
  %825 = vmatpush.msra.mxu0 0.0
  %826 = vmatpush.msra.mxu0 0.0
  %827 = vmatpush.msra.mxu0 %v794
  %828 = vmatpush.msra.mxu0 %v760
  %829 = vmatpush.msra.mxu0 %v758
  %830 = vmatpush.msra.mxu0 %v756
  %831 = vmatpush.msra.mxu0 %v754
  %832 = vmatpush.msra.mxu0 %v752
  %833 = vmatpush.msra.mxu0 %v750
  %834 = vmatpush.msra.mxu0 %v748
  %835 = vmatpush.msra.mxu0 %v746
  %836 = vmatpush.msra.mxu0 %v744
  %837 = vmatpush.msra.mxu0 %v742
  %838 = vmatmul.f32.gmra.mxu0 %v784
  %v839 = vpop.f32.mrf.mxu0
  %v840 = vadd.f32 0.0, %v839
  %841 = vmatmul.f32.gmra.mxu0 %v786
  %v842 = vpop.f32.mrf.mxu0
  %v843 = vadd.f32 0.0, %v842
  %844 = vmatmul.f32.gmra.mxu0 %v788
  %v845 = vpop.f32.mrf.mxu0
  %v846 = vadd.f32 0.0, %v845
  %847 = vdwg.mxu0
  %v848 = vadd.f32 %v706, %v814
  %v849 = vadd.f32 %v732, %v840
  %v850 = vadd.f32 %v709, %v817
  %v851 = vadd.f32 %v735, %v843
  %v852 = vadd.f32 %v712, %v820
  %v853 = vadd.f32 %v738, %v846
  %s854 = scalar_lea.vmem %s5, 528
  %v855 = vld [vmem:[%s854] sm:$0xff]
  %v856 = vld [vmem:[%s854 + $0x8] sm:$0xff]
  %v857 = vld [vmem:[%s854 + $0x10] sm:$0xff]
  %v858 = vld [vmem:[%s854 + $0x18] sm:$0xff]
  %v859 = vld [vmem:[%s854 + $0x20] sm:$0xff]
  %v860 = vld [vmem:[%s854 + $0x28] sm:$0xff]
  %v861 = vld [vmem:[%s854 + $0x30] sm:$0xff]
  %v862 = vld [vmem:[%s854 + $0x38] sm:$0xff]
  %v863 = vld [vmem:[%s854 + $0x40] sm:$0xff]
  %v864 = vld [vmem:[%s854 + $0x48] sm:$0xff]
  %v865 = vld [vmem:[%s854 + $0x50] sm:$0xff]
  %v866 = vld [vmem:[%s854 + $0x58] sm:$0xff]
  %v867 = vld [vmem:[%s854 + $0x60] sm:$0xff]
  %v868 = vld [vmem:[%s854 + $0x68] sm:$0xff]
  %v869 = vld [vmem:[%s854 + $0x70] sm:$0xff]
  %v870 = vld [vmem:[%s854 + $0x78] sm:$0xff]
  %v871 = vld [vmem:[%s854 + $0x80] sm:$0xff]
  %v872 = vld [vmem:[%s854 + $0x88] sm:$0xff]
  %v873 = vld [vmem:[%s854 + $0x90] sm:$0xff]
  %v874 = vld [vmem:[%s854 + $0x98] sm:$0xff]
  %v875 = vld [vmem:[%s854 + $0xa0] sm:$0xf]
  %v876 = vld [vmem:[%s854 + $0xa8] sm:$0xf]
  %v879 = vperm.slane %v464, 0
  %v880 = vperm.slane %v478, 0
  %v881 = vsel %vm565, %v548, %v547
  %v882 = vsel %vm567, %v549, %v881
  %v883 = vsel %vm569, %v550, %v882
  %v884 = vsel %vm571, %v551, %v883
  %v885 = vsel %vm573, %v552, %v884
  %v886 = vsel %vm575, %v553, %v885
  %v887 = vsel %vm577, %v554, %v886
  %v888 = vsel %vm565, %v879, %v765
  %v889 = vsel %vm567, %v557, %v888
  %v890 = vsel %vm569, %v558, %v889
  %v891 = vsel %vm571, %v559, %v890
  %v892 = vsel %vm573, %v560, %v891
  %v893 = vsel %vm575, %v561, %v892
  %v894 = vsel %vm577, %v562, %v893
  %v895 = vsel %vm565, %v564, %v563
  %v896 = vsel %vm567, %v766, %v895
  %v897 = vsel %vm569, %v880, %v896
  %v898 = vsel %vm589, %v887, 0
  %v900 = vsel %vm589, %v894, 0
  %v902 = vsel %vm589, %v897, 0
  %v905 = vsel %vm596, %v875, 0
  %v908 = vsel %vm596, %v876, 0
  %910 = vmatpush.msra.mxu0 0.0
  %911 = vmatpush.msra.mxu0 0.0
  %912 = vmatpush.msra.mxu0 0.0
  %913 = vmatpush.msra.mxu0 0.0
  %914 = vmatpush.msra.mxu0 0.0
  %915 = vmatpush.msra.mxu0 %v905
  %916 = vmatpush.msra.mxu0 %v873
  %917 = vmatpush.msra.mxu0 %v871
  %918 = vmatpush.msra.mxu0 %v869
  %919 = vmatpush.msra.mxu0 %v867
  %920 = vmatpush.msra.mxu0 %v865
  %921 = vmatpush.msra.mxu0 %v863
  %922 = vmatpush.msra.mxu0 %v861
  %923 = vmatpush.msra.mxu0 %v859
  %924 = vmatpush.msra.mxu0 %v857
  %925 = vmatpush.msra.mxu0 %v855
  %926 = vmatmul.f32.gmra.mxu0 %v898
  %v927 = vpop.f32.mrf.mxu0
  %v928 = vadd.f32 0.0, %v927
  %929 = vmatmul.f32.gmra.mxu0 %v900
  %v930 = vpop.f32.mrf.mxu0
  %v931 = vadd.f32 0.0, %v930
  %932 = vmatmul.f32.gmra.mxu0 %v902
  %v933 = vpop.f32.mrf.mxu0
  %v934 = vadd.f32 0.0, %v933
  %935 = vdwg.mxu0
  %936 = vmatpush.msra.mxu0 0.0
  %937 = vmatpush.msra.mxu0 0.0
  %938 = vmatpush.msra.mxu0 0.0
  %939 = vmatpush.msra.mxu0 0.0
  %940 = vmatpush.msra.mxu0 0.0
  %941 = vmatpush.msra.mxu0 %v908
  %942 = vmatpush.msra.mxu0 %v874
  %943 = vmatpush.msra.mxu0 %v872
  %944 = vmatpush.msra.mxu0 %v870
  %945 = vmatpush.msra.mxu0 %v868
  %946 = vmatpush.msra.mxu0 %v866
  %947 = vmatpush.msra.mxu0 %v864
  %948 = vmatpush.msra.mxu0 %v862
  %949 = vmatpush.msra.mxu0 %v860
  %950 = vmatpush.msra.mxu0 %v858
  %951 = vmatpush.msra.mxu0 %v856
  %952 = vmatmul.f32.gmra.mxu0 %v898
  %v953 = vpop.f32.mrf.mxu0
  %v954 = vadd.f32 0.0, %v953
  %955 = vmatmul.f32.gmra.mxu0 %v900
  %v956 = vpop.f32.mrf.mxu0
  %v957 = vadd.f32 0.0, %v956
  %958 = vmatmul.f32.gmra.mxu0 %v902
  %v959 = vpop.f32.mrf.mxu0
  %v960 = vadd.f32 0.0, %v959
  %961 = vdwg.mxu0
  %v962 = vadd.f32 %v848, %v928
  %v963 = vadd.f32 %v849, %v954
  %v964 = vadd.f32 %v850, %v931
  %v965 = vadd.f32 %v851, %v957
  %v966 = vadd.f32 %v852, %v934
  %v967 = vadd.f32 %v853, %v960
  %s968 = scalar_lea.vmem %s5, 704
  %v969 = vld [vmem:[%s968] sm:$0xff]
  %v970 = vld [vmem:[%s968 + $0x8] sm:$0xff]
  %v971 = vld [vmem:[%s968 + $0x10] sm:$0xff]
  %v972 = vld [vmem:[%s968 + $0x18] sm:$0xff]
  %v973 = vld [vmem:[%s968 + $0x20] sm:$0xff]
  %v974 = vld [vmem:[%s968 + $0x28] sm:$0xff]
  %v975 = vld [vmem:[%s968 + $0x30] sm:$0xff]
  %v976 = vld [vmem:[%s968 + $0x38] sm:$0xff]
  %v977 = vld [vmem:[%s968 + $0x40] sm:$0xff]
  %v978 = vld [vmem:[%s968 + $0x48] sm:$0xff]
  %v979 = vld [vmem:[%s968 + $0x50] sm:$0xff]
  %v980 = vld [vmem:[%s968 + $0x58] sm:$0xff]
  %v981 = vld [vmem:[%s968 + $0x60] sm:$0xff]
  %v982 = vld [vmem:[%s968 + $0x68] sm:$0xff]
  %v983 = vld [vmem:[%s968 + $0x70] sm:$0xff]
  %v984 = vld [vmem:[%s968 + $0x78] sm:$0xff]
  %v985 = vld [vmem:[%s968 + $0x80] sm:$0xff]
  %v986 = vld [vmem:[%s968 + $0x88] sm:$0xff]
  %v987 = vld [vmem:[%s968 + $0x90] sm:$0xff]
  %v988 = vld [vmem:[%s968 + $0x98] sm:$0xff]
  %v989 = vld [vmem:[%s968 + $0xa0] sm:$0xf]
  %v990 = vld [vmem:[%s968 + $0xa8] sm:$0xf]
  %v993 = vperm.slane %v465, 0
  %v994 = vperm.slane %v479, 0
  %v995 = vsel %vm565, %v549, %v548
  %v996 = vsel %vm567, %v550, %v995
  %v997 = vsel %vm569, %v551, %v996
  %v998 = vsel %vm571, %v552, %v997
  %v999 = vsel %vm573, %v553, %v998
  %v1000 = vsel %vm575, %v554, %v999
  %v1001 = vsel %vm577, %v765, %v1000
  %v1002 = vsel %vm565, %v993, %v879
  %v1003 = vsel %vm567, %v558, %v1002
  %v1004 = vsel %vm569, %v559, %v1003
  %v1005 = vsel %vm571, %v560, %v1004
  %v1006 = vsel %vm573, %v561, %v1005
  %v1007 = vsel %vm575, %v562, %v1006
  %v1008 = vsel %vm577, %v563, %v1007
  %v1009 = vsel %vm565, %v766, %v564
  %v1010 = vsel %vm567, %v880, %v1009
  %v1011 = vsel %vm569, %v994, %v1010
  %v1012 = vsel %vm589, %v1001, 0
  %v1014 = vsel %vm589, %v1008, 0
  %v1016 = vsel %vm589, %v1011, 0
  %v1019 = vsel %vm596, %v989, 0
  %v1022 = vsel %vm596, %v990, 0
  %1024 = vmatpush.msra.mxu0 0.0
  %1025 = vmatpush.msra.mxu0 0.0
  %1026 = vmatpush.msra.mxu0 0.0
  %1027 = vmatpush.msra.mxu0 0.0
  %1028 = vmatpush.msra.mxu0 0.0
  %1029 = vmatpush.msra.mxu0 %v1019
  %1030 = vmatpush.msra.mxu0 %v987
  %1031 = vmatpush.msra.mxu0 %v985
  %1032 = vmatpush.msra.mxu0 %v983
  %1033 = vmatpush.msra.mxu0 %v981
  %1034 = vmatpush.msra.mxu0 %v979
  %1035 = vmatpush.msra.mxu0 %v977
  %1036 = vmatpush.msra.mxu0 %v975
  %1037 = vmatpush.msra.mxu0 %v973
  %1038 = vmatpush.msra.mxu0 %v971
  %1039 = vmatpush.msra.mxu0 %v969
  %1040 = vmatmul.f32.gmra.mxu0 %v1012
  %v1041 = vpop.f32.mrf.mxu0
  %v1042 = vadd.f32 0.0, %v1041
  %1043 = vmatmul.f32.gmra.mxu0 %v1014
  %v1044 = vpop.f32.mrf.mxu0
  %v1045 = vadd.f32 0.0, %v1044
  %1046 = vmatmul.f32.gmra.mxu0 %v1016
  %v1047 = vpop.f32.mrf.mxu0
  %v1048 = vadd.f32 0.0, %v1047
  %1049 = vdwg.mxu0
  %1050 = vmatpush.msra.mxu0 0.0
  %1051 = vmatpush.msra.mxu0 0.0
  %1052 = vmatpush.msra.mxu0 0.0
  %1053 = vmatpush.msra.mxu0 0.0
  %1054 = vmatpush.msra.mxu0 0.0
  %1055 = vmatpush.msra.mxu0 %v1022
  %1056 = vmatpush.msra.mxu0 %v988
  %1057 = vmatpush.msra.mxu0 %v986
  %1058 = vmatpush.msra.mxu0 %v984
  %1059 = vmatpush.msra.mxu0 %v982
  %1060 = vmatpush.msra.mxu0 %v980
  %1061 = vmatpush.msra.mxu0 %v978
  %1062 = vmatpush.msra.mxu0 %v976
  %1063 = vmatpush.msra.mxu0 %v974
  %1064 = vmatpush.msra.mxu0 %v972
  %1065 = vmatpush.msra.mxu0 %v970
  %1066 = vmatmul.f32.gmra.mxu0 %v1012
  %v1067 = vpop.f32.mrf.mxu0
  %v1068 = vadd.f32 0.0, %v1067
  %1069 = vmatmul.f32.gmra.mxu0 %v1014
  %v1070 = vpop.f32.mrf.mxu0
  %v1071 = vadd.f32 0.0, %v1070
  %1072 = vmatmul.f32.gmra.mxu0 %v1016
  %v1073 = vpop.f32.mrf.mxu0
  %v1074 = vadd.f32 0.0, %v1073
  %1075 = vdwg.mxu0
  %v1076 = vadd.f32 %v962, %v1042
  %v1077 = vadd.f32 %v963, %v1068
  %v1078 = vadd.f32 %v964, %v1045
  %v1079 = vadd.f32 %v965, %v1071
  %v1080 = vadd.f32 %v966, %v1048
  %v1081 = vadd.f32 %v967, %v1074
  %v1082 = vld [vmem:[%s6] sm:$0x3]
  %v1084 = vperm.slane %v1082, 0
  %v1085 = vperm.slane %v1082, 1
  %v1088 = vadd.f32 %v1076, %v1084
  %v1089 = vadd.f32 %v1077, %v1085
  %v1090 = vadd.f32 %v1078, %v1084
  %v1091 = vadd.f32 %v1079, %v1085
  %v1092 = vadd.f32 %v1080, %v1084
  %v1093 = vadd.f32 %v1081, %v1085
  %1094 = vst [vmem:[%s7] sm:$0xff] %v1088
  %vm1095 = vcmask 261120
  %1096 = vst.msk [vmem:[%s7 + $0x8] sm:$0xff] %vm1095, %v1089
  %1097 = vst [vmem:[%s7 + $0x10] sm:$0xff] %v1090
  %1098 = vst.msk [vmem:[%s7 + $0x18] sm:$0xff] %vm1095, %v1091
  %1099 = vst [vmem:[%s7 + $0x20] sm:$0xf] %v1092
  %vm1100 = vcmask 257024
  %1101 = vst.msk [vmem:[%s7 + $0x28] sm:$0xf] %vm1100, %v1093
  %v1102 = vadd.f32 %v1088, %v1090
  %v1103 = vsel %vm596, %v1092, 0.0
  %v1104 = vadd.f32 %v1102, %v1103
  %v1105 = vrot.slane %v1104, 4
  %v1106 = vadd.f32 %v1104, %v1105
  %v1107 = vrot.slane %v1106, 2
  %v1108 = vadd.f32 %v1106, %v1107
  %v1109 = vrot.slane %v1108, 1
  %v1110 = vadd.f32 %v1108, %v1109
  %v1111 = vsel %vm1095, %v1089, 0.0
  %v1112 = vsel %vm1095, %v1091, 0.0
  %v1113 = vadd.f32 %v1111, %v1112
  %v1114 = vsel %vm1100, %v1093, 0.0
  %v1115 = vadd.f32 %v1113, %v1114
  %v1116 = vrot.slane %v1115, 4
  %v1117 = vadd.f32 %v1115, %v1116
  %v1118 = vrot.slane %v1117, 2
  %v1119 = vadd.f32 %v1117, %v1118
  %v1120 = vrot.slane %v1119, 1
  %v1121 = vadd.f32 %v1119, %v1120
  %v1122 = vmul.f32 %v1110, 0.05
  %v1123 = vmul.f32 %v1121, 0.05
  %v1124 = vsub.f32 %v1088, %v1122
  %v1125 = vsub.f32 %v1089, %v1123
  %v1126 = vsub.f32 %v1090, %v1122
  %v1127 = vsub.f32 %v1091, %v1123
  %v1128 = vsub.f32 %v1092, %v1122
  %v1129 = vsub.f32 %v1093, %v1123
  %v1130 = vmul.f32 %v1124, %v1124
  %v1131 = vmul.f32 %v1125, %v1125
  %v1132 = vmul.f32 %v1126, %v1126
  %v1133 = vmul.f32 %v1127, %v1127
  %v1134 = vmul.f32 %v1128, %v1128
  %v1135 = vmul.f32 %v1129, %v1129
  %v1136 = vadd.f32 %v1130, %v1132
  %v1137 = vsel %vm596, %v1134, 0.0
  %v1138 = vadd.f32 %v1136, %v1137
  %v1139 = vrot.slane %v1138, 4
  %v1140 = vadd.f32 %v1138, %v1139
  %v1141 = vrot.slane %v1140, 2
  %v1142 = vadd.f32 %v1140, %v1141
  %v1143 = vrot.slane %v1142, 1
  %v1144 = vadd.f32 %v1142, %v1143
  %v1145 = vsel %vm1095, %v1131, 0.0
  %v1146 = vsel %vm1095, %v1133, 0.0
  %v1147 = vadd.f32 %v1145, %v1146
  %v1148 = vsel %vm1100, %v1135, 0.0
  %v1149 = vadd.f32 %v1147, %v1148
  %v1150 = vrot.slane %v1149, 4
  %v1151 = vadd.f32 %v1149, %v1150
  %v1152 = vrot.slane %v1151, 2
  %v1153 = vadd.f32 %v1151, %v1152
  %v1154 = vrot.slane %v1153, 1
  %v1155 = vadd.f32 %v1153, %v1154
  %vm1156 = vcmask 1040384
  %v1157 = vsel %vm1156, %v1110, %v1144
  %v1158 = vsel %vm1156, %v1121, %v1155
  %v1161 = vrot.slane %v1158, 6
  %vm1162 = vcmask 1041408
  %v1163 = vsel %vm1162, %v1157, %v1161
  %vm1165 = vcmask 257026
  %vm1166 = vmor %vm1165, %vm1162
  %1167 = vst.msk [vmem:[%s8] sm:$0xf] %vm1166, %v1163
  // Predicated region
  $region30: #{gap_lenet_forward.4} parent=0 // pred_check
    _
  $region31: #{gap_lenet_forward.4} parent=0 // pred_check_branch
    %1169 = sbr.rel (0) target = $region33
  $region32: #{gap_lenet_forward.4} parent=0 // pred_region
    _
  $region33: #{gap_lenet_forward.4} parent=0 // pred_fallthru
    _
  // Predicated region
  $region34: #{gap_lenet_forward.4} parent=0 // pred_check
    _
  $region35: #{gap_lenet_forward.4} parent=0 // pred_check_branch
    %1171 = sbr.rel (0) target = $region37
  $region36: #{gap_lenet_forward.4} parent=0 // pred_region
    _
  $region37: #{gap_lenet_forward.4} parent=0 // pred_fallthru
    _
  // Predicated region
  $region38: #{gap_lenet_forward.4} parent=0 // pred_check
    _
  $region39: #{gap_lenet_forward.4} parent=0 // pred_check_branch
    %1173 = sbr.rel (0) target = $region41
  $region40: #{gap_lenet_forward.4} parent=0 // pred_region
    _
  $region41: #{gap_lenet_forward.4} parent=0 // pred_fallthru
    _
  // Predicated region
  $region42: #{gap_lenet_forward.4} parent=0 // pred_check
    _
  $region43: #{gap_lenet_forward.4} parent=0 // pred_check_branch
    %1175 = sbr.rel (0) target = $region45
  $region44: #{gap_lenet_forward.4} parent=0 // pred_region
    _
  $region45: #{gap_lenet_forward.4} parent=0 // pred_fallthru
    _

// kernel: squeeze.11
$region0: #{squeeze.11}
  %s0 = inlined_call_operand.vmem [shape: f32[160], index: 0, kind: input, shape index: {}]
  %s1 = inlined_call_operand.vmem [shape: f32[10,16], index: 1, kind: output, shape index: {}]
  $region1: #{squeeze.11} parent=0
    #allocation0 [shape = 'u8[4096]{0}', space=vmem, size = 0x1000, scoped, tag = 'scoped mem for input reshape']
    %s3 = ssub.s32 4, 1
    %v4 = vld [vmem:[%s0] sm:%s3]
    %5 = vst [vmem:[#allocation0] sm:%s3] %v4
    %v6 = vld [vmem:[#allocation0] sm:$0x3]
    %vm7 = vcmask 130048
    %8 = vst.msk [vmem:[%s1] ss:$8 sm:$0x3] %vm7, %v6
    %v9 = vld [vmem:[#allocation0] sm:$0x3]
    %10 = vrot.lane.b32.xlu0 %v9, 112
    %v11 = vpop.permute.xlu0 %10
    %vm12 = vcmask 130048
    %s13 = scalar_lea.vmem %s1, 1
    %14 = vst.msk [vmem:[%s13] ss:$8 sm:$0x3] %vm12, %v11
    %v15 = vld [vmem:[#allocation0] sm:$0x1]
    %16 = vrot.lane.b32.xlu0 %v15, 96
    %v17 = vpop.permute.xlu0 %16
    %vm18 = vcmask 130048
    %s19 = scalar_lea.vmem %s1, 2
    %20 = vst.msk [vmem:[%s19] sm:$0x1] %vm18, %v17
    %v21 = vld [vmem:[#allocation0] sm:$0x1]
    %22 = vrot.lane.b32.xlu0 %v21, 80
    %v23 = vpop.permute.xlu0 %22
    %vm24 = vcmask 130048
    %s25 = scalar_lea.vmem %s1, 3
    %26 = vst.msk [vmem:[%s25] sm:$0x1] %vm24, %v23
    %v27 = vld [vmem:[#allocation0] sm:$0x1]
    %28 = vrot.lane.b32.xlu0 %v27, 64
    %v29 = vpop.permute.xlu0 %28
    %vm30 = vcmask 130048
    %s31 = scalar_lea.vmem %s1, 4
    %32 = vst.msk [vmem:[%s31] sm:$0x1] %vm30, %v29
    %v33 = vld [vmem:[#allocation0] sm:$0x1]
    %34 = vrot.lane.b32.xlu0 %v33, 48
    %v35 = vpop.permute.xlu0 %34
    %vm36 = vcmask 130048
    %s37 = scalar_lea.vmem %s1, 5
    %38 = vst.msk [vmem:[%s37] sm:$0x1] %vm36, %v35
    %v39 = vld [vmem:[#allocation0] sm:$0x1]
    %40 = vrot.lane.b32.xlu0 %v39, 32
    %v41 = vpop.permute.xlu0 %40
    %vm42 = vcmask 130048
    %s43 = scalar_lea.vmem %s1, 6
    %44 = vst.msk [vmem:[%s43] sm:$0x1] %vm42, %v41
    %v45 = vld [vmem:[#allocation0] sm:$0x1]
    %46 = vrot.lane.b32.xlu0 %v45, 16
    %v47 = vpop.permute.xlu0 %46
    %vm48 = vcmask 130048
    %s49 = scalar_lea.vmem %s1, 7
    %50 = vst.msk [vmem:[%s49] sm:$0x1] %vm48, %v47

// kernel: tile.58
$region0: #{tile.58}
  #allocation0 [shape = 's32[1]{0}', space=sflag, size = 0x4, scoped, tag = 'scoped memory for tile.58']
  %s0 = inlined_call_operand.vmem [shape: f32[10], index: 0, kind: input, shape index: {}]
  %s1 = inlined_call_operand.vmem [shape: f32[5,10], index: 1, kind: output, shape index: {}]
  // Predicated region
  $region2: #{tile.58} parent=0 // pred_check
    _
  $region3: #{tile.58} parent=0 // pred_check_branch
    %3 = sbr.rel (0) target = $region5
  $region4: #{tile.58} parent=0 // pred_region
    _
  $region5: #{tile.58} parent=0 // pred_fallthru
    _
  %v4 = vld [vmem:[%s0] ss:$0 sm:$0xff]
  %5 = vst [vmem:[%s1] sm:$0xff] %v4

// kernel: tile.59
$region0: #{tile.59}
  %s0 = inlined_call_operand.vmem [shape: f32[5,10], index: 0, kind: input, shape index: {}]
  %s1 = inlined_call_operand.vmem [shape: f32[1,50], index: 1, kind: output, shape index: {}]
  $region1: #{tile.59} parent=0
    #allocation0 [shape = 'u8[4096]{0}', space=vmem, size = 0x1000, scoped, tag = 'scoped mem for output reshape']
    %v2 = vld [vmem:[%s0] sm:$0x1]
    %vm3 = vcmask 80896
    %4 = vst.msk [vmem:[#allocation0] sm:$0x1] %vm3, %v2
    %s5 = scalar_lea.vmem %s0, 4
    %v6 = vld [vmem:[%s5] sm:$0x1]
    %7 = vrot.lane.b32.xlu0 %v6, 40
    %v8 = vpop.permute.xlu0 %7
    %vm9 = vcmask 408896
    %10 = vst.msk [vmem:[#allocation0] sm:$0x1] %vm9, %v8
    %s11 = scalar_lea.vmem %s0, 3
    %v12 = vld [vmem:[%s11] sm:$0x1]
    %13 = vrot.lane.b32.xlu0 %v12, 30
    %v14 = vpop.permute.xlu0 %13
    %vm15 = vcmask 326896
    %16 = vst.msk [vmem:[#allocation0] sm:$0x1] %vm15, %v14
    %s17 = scalar_lea.vmem %s0, 2
    %v18 = vld [vmem:[%s17] sm:$0x1]
    %19 = vrot.lane.b32.xlu0 %v18, 20
    %v20 = vpop.permute.xlu0 %19
    %vm21 = vcmask 244896
    %22 = vst.msk [vmem:[#allocation0] sm:$0x1] %vm21, %v20
    %s23 = scalar_lea.vmem %s0, 1
    %v24 = vld [vmem:[%s23] sm:$0x1]
    %25 = vrot.lane.b32.xlu0 %v24, 10
    %v26 = vpop.permute.xlu0 %25
    %vm27 = vcmask 162896
    %28 = vst.msk [vmem:[#allocation0] sm:$0x1] %vm27, %v26
    %s30 = ssub.s32 2, 1
    %v31 = vld [vmem:[#allocation0] sm:%s30]
    %s33 = ssub.s32 2, 1
    %34 = vst [vmem:[%s1] sm:%s33] %v31

// kernel: gap_lenet_forward.5
$region0: #{gap_lenet_forward.5}
  #allocation0 [shape = 'u32[]', space=smem, size = 0x4, offset = 0x4, fixed_abs, tag = 'smem constant byte address 0x4 - core index']
  #allocation1 [shape = 'u32[72,128]{1,0:T(1,128)}', space=vmem, size = 0x9000, scoped, tag = 'internal scratch']
  %s0 = inlined_call_operand.vmem [shape: f32[20,160], index: 0, kind: input, shape index: {}]
  %s1 = inlined_call_operand.vmem [shape: f32[1,160], index: 1, kind: input, shape index: {}]
  %s2 = inlined_call_operand.vmem [shape: f32[1,160], index: 2, kind: input, shape index: {}]
  %s3 = inlined_call_operand.vmem [shape: f32[160,80], index: 3, kind: input, shape index: {}]
  %s4 = inlined_call_operand.vmem [shape: f32[160,80], index: 4, kind: input, shape index: {}]
  %s5 = inlined_call_operand.vmem [shape: f32[80,50], index: 5, kind: input, shape index: {}]
  %s6 = inlined_call_operand.vmem [shape: f32[1,50], index: 6, kind: input, shape index: {}]
  %s7 = inlined_call_operand.vmem [shape: f32[50,10], index: 7, kind: input, shape index: {}]
  %s8 = inlined_call_operand.hbm [shape: f32[2,10], index: 8, kind: output, shape index: {}]
  %s9 = sld [smem:[#allocation0]]
  $region42: #{gap_lenet_forward.5} parent=0
    _
  %s11 = ssub.s32 1, %s9
  %s12 = scalar_select 0, %s11, %s9
  $region1: #{gap_lenet_forward.5} parent=0
    #allocation2 [shape = 'u8[1024]{0}', space=vmem, size = 0x400, scoped, tag = 'output window, operand 0, single buffered']
    #allocation3 [shape = 's32[1]{0}', space=sflag, size = 0x4, scoped, tag = 'scoped memory for gap_lenet_forward.5']
    %13 = vsyncpa [#allocation3], 0
    // Predicated region
    $region2: #{gap_lenet_forward.5} parent=1 // pred_check
      _
    $region3: #{gap_lenet_forward.5} parent=1 // pred_check_branch
      %15 = sbr.rel (0) target = $region5
    $region4: #{gap_lenet_forward.5} parent=1 // pred_region
      _
    $region5: #{gap_lenet_forward.5} parent=1 // pred_fallthru
      _
    // Predicated region
    $region6: #{gap_lenet_forward.5} parent=1 // pred_check
      _
    $region7: #{gap_lenet_forward.5} parent=1 // pred_check_branch
      %17 = sbr.rel (0) target = $region9
    $region8: #{gap_lenet_forward.5} parent=1 // pred_region
      _
    $region9: #{gap_lenet_forward.5} parent=1 // pred_fallthru
      _
    // Predicated region
    $region10: #{gap_lenet_forward.5} parent=1 // pred_check
      _
    $region11: #{gap_lenet_forward.5} parent=1 // pred_check_branch
      %19 = sbr.rel (0) target = $region13
    $region12: #{gap_lenet_forward.5} parent=1 // pred_region
      _
    $region13: #{gap_lenet_forward.5} parent=1 // pred_fallthru
      _
    // Predicated region
    $region14: #{gap_lenet_forward.5} parent=1 // pred_check
      _
    $region15: #{gap_lenet_forward.5} parent=1 // pred_check_branch
      %21 = sbr.rel (0) target = $region17
    $region16: #{gap_lenet_forward.5} parent=1 // pred_region
      _
    $region17: #{gap_lenet_forward.5} parent=1 // pred_fallthru
      _
    // Predicated region
    $region18: #{gap_lenet_forward.5} parent=1 // pred_check
      _
    $region19: #{gap_lenet_forward.5} parent=1 // pred_check_branch
      %23 = sbr.rel (0) target = $region21
    $region20: #{gap_lenet_forward.5} parent=1 // pred_region
      _
    $region21: #{gap_lenet_forward.5} parent=1 // pred_fallthru
      _
    // Predicated region
    $region22: #{gap_lenet_forward.5} parent=1 // pred_check
      _
    $region23: #{gap_lenet_forward.5} parent=1 // pred_check_branch
      %25 = sbr.rel (0) target = $region25
    $region24: #{gap_lenet_forward.5} parent=1 // pred_region
      _
    $region25: #{gap_lenet_forward.5} parent=1 // pred_fallthru
      _
    // Predicated region
    $region26: #{gap_lenet_forward.5} parent=1 // pred_check
      _
    $region27: #{gap_lenet_forward.5} parent=1 // pred_check_branch
      %27 = sbr.rel (0) target = $region29
    $region28: #{gap_lenet_forward.5} parent=1 // pred_region
      _
    $region29: #{gap_lenet_forward.5} parent=1 // pred_fallthru
      _
    // Predicated region
    $region30: #{gap_lenet_forward.5} parent=1 // pred_check
      _
    $region31: #{gap_lenet_forward.5} parent=1 // pred_check_branch
      %29 = sbr.rel (0) target = $region33
    $region32: #{gap_lenet_forward.5} parent=1 // pred_region
      _
    $region33: #{gap_lenet_forward.5} parent=1 // pred_fallthru
      _
    %v30 = vld [vmem:[%s0] sm:$0xff]
    %v31 = vld [vmem:[%s0 + $0x8] sm:$0xff]
    %v32 = vld [vmem:[%s0 + $0x10] sm:$0xff]
    %v33 = vld [vmem:[%s0 + $0x18] sm:$0xff]
    %v34 = vld [vmem:[%s0 + $0x20] sm:$0xf]
    %v35 = vld [vmem:[%s0 + $0x28] sm:$0xf]
    %v36 = vld [vmem:[%s1] sm:$0x3]
    %v38 = vperm.slane %v36, 0
    %v39 = vperm.slane %v36, 1
    %v42 = vmul.f32 %v30, %v38
    %v43 = vmul.f32 %v31, %v39
    %v44 = vmul.f32 %v32, %v38
    %v45 = vmul.f32 %v33, %v39
    %v46 = vmul.f32 %v34, %v38
    %v47 = vmul.f32 %v35, %v39
    %v48 = vld [vmem:[%s2] sm:$0x3]
    %v50 = vperm.slane %v48, 0
    %v51 = vperm.slane %v48, 1
    %v54 = vadd.f32 %v42, %v50
    %v55 = vadd.f32 %v43, %v51
    %v56 = vadd.f32 %v44, %v50
    %v57 = vadd.f32 %v45, %v51
    %v58 = vadd.f32 %v46, %v50
    %v59 = vadd.f32 %v47, %v51
    %v60 = vmax.f32 %v54, 0.0
    %v61 = vmax.f32 %v55, 0.0
    %v62 = vmax.f32 %v56, 0.0
    %v63 = vmax.f32 %v57, 0.0
    %v64 = vmax.f32 %v58, 0.0
    %v65 = vmax.f32 %v59, 0.0
    %v66 = vld [vmem:[%s3] sm:$0xff]
    %v67 = vld [vmem:[%s3 + $0x8] sm:$0xff]
    %v68 = vld [vmem:[%s3 + $0x10] sm:$0xff]
    %v69 = vld [vmem:[%s3 + $0x18] sm:$0xff]
    %v70 = vld [vmem:[%s3 + $0x20] sm:$0xff]
    %v71 = vld [vmem:[%s3 + $0x28] sm:$0xff]
    %v72 = vld [vmem:[%s3 + $0x30] sm:$0xff]
    %v73 = vld [vmem:[%s3 + $0x38] sm:$0xff]
    %v74 = vld [vmem:[%s3 + $0x40] sm:$0xff]
    %v75 = vld [vmem:[%s3 + $0x48] sm:$0xff]
    %v76 = vld [vmem:[%s3 + $0x50] sm:$0xff]
    %v77 = vld [vmem:[%s3 + $0x58] sm:$0xff]
    %v78 = vld [vmem:[%s3 + $0x60] sm:$0xff]
    %v79 = vld [vmem:[%s3 + $0x68] sm:$0xff]
    %v80 = vld [vmem:[%s3 + $0x70] sm:$0xff]
    %v81 = vld [vmem:[%s3 + $0x78] sm:$0xff]
    %v82 = vld [vmem:[%s3 + $0x80] sm:$0xff]
    %v83 = vld [vmem:[%s3 + $0x88] sm:$0xff]
    %v84 = vld [vmem:[%s3 + $0x90] sm:$0xff]
    %v85 = vld [vmem:[%s3 + $0x98] sm:$0xff]
    %vm86 = vcmask 261120
    %v88 = vsel %vm86, %v61, 0
    %v91 = vsel %vm86, %v63, 0
    %v94 = vsel %vm86, %v65, 0
    %96 = vmatpush.msra.mxu0 %v81
    %97 = vmatpush.msra.mxu0 %v80
    %98 = vmatpush.msra.mxu0 %v79
    %99 = vmatpush.msra.mxu0 %v78
    %100 = vmatpush.msra.mxu0 %v77
    %101 = vmatpush.msra.mxu0 %v76
    %102 = vmatpush.msra.mxu0 %v75
    %103 = vmatpush.msra.mxu0 %v74
    %104 = vmatpush.msra.mxu0 %v73
    %105 = vmatpush.msra.mxu0 %v72
    %106 = vmatpush.msra.mxu0 %v71
    %107 = vmatpush.msra.mxu0 %v70
    %108 = vmatpush.msra.mxu0 %v69
    %109 = vmatpush.msra.mxu0 %v68
    %110 = vmatpush.msra.mxu0 %v67
    %111 = vmatpush.msra.mxu0 %v66
    %112 = vmatmul.f32.gmra.mxu0 %v60
    %v113 = vpop.f32.mrf.mxu0
    %v114 = vadd.f32 0.0, %v113
    %115 = vmatmul.f32.gmra.mxu0 %v62
    %v116 = vpop.f32.mrf.mxu0
    %v117 = vadd.f32 0.0, %v116
    %118 = vmatmul.f32.gmra.mxu0 %v64
    %v119 = vpop.f32.mrf.mxu0
    %v120 = vadd.f32 0.0, %v119
    %121 = vdwg.mxu0
    %122 = vmatpush.msra.mxu0 0.0
    %123 = vmatpush.msra.mxu0 0.0
    %124 = vmatpush.msra.mxu0 0.0
    %125 = vmatpush.msra.mxu0 0.0
    %126 = vmatpush.msra.mxu0 0.0
    %127 = vmatpush.msra.mxu0 0.0
    %128 = vmatpush.msra.mxu0 0.0
    %129 = vmatpush.msra.mxu0 0.0
    %130 = vmatpush.msra.mxu0 0.0
    %131 = vmatpush.msra.mxu0 0.0
    %132 = vmatpush.msra.mxu0 0.0
    %133 = vmatpush.msra.mxu0 0.0
    %134 = vmatpush.msra.mxu0 %v85
    %135 = vmatpush.msra.mxu0 %v84
    %136 = vmatpush.msra.mxu0 %v83
    %137 = vmatpush.msra.mxu0 %v82
    %138 = vmatmul.f32.gmra.mxu0 %v88
    %v139 = vpop.f32.mrf.mxu0
    %v140 = vadd.f32 %v114, %v139
    %141 = vmatmul.f32.gmra.mxu0 %v91
    %v142 = vpop.f32.mrf.mxu0
    %v143 = vadd.f32 %v117, %v142
    %144 = vmatmul.f32.gmra.mxu0 %v94
    %v145 = vpop.f32.mrf.mxu0
    %v146 = vadd.f32 %v120, %v145
    %147 = vdwg.mxu0
    %v148 = vld [vmem:[%s4] sm:$0xff]
    %v149 = vld [vmem:[%s4 + $0x8] sm:$0xff]
    %v150 = vld [vmem:[%s4 + $0x10] sm:$0xff]
    %v151 = vld [vmem:[%s4 + $0x18] sm:$0xff]
    %v152 = vld [vmem:[%s4 + $0x20] sm:$0xff]
    %v153 = vld [vmem:[%s4 + $0x28] sm:$0xff]
    %v154 = vld [vmem:[%s4 + $0x30] sm:$0xff]
    %v155 = vld [vmem:[%s4 + $0x38] sm:$0xff]
    %v156 = vld [vmem:[%s4 + $0x40] sm:$0xff]
    %v157 = vld [vmem:[%s4 + $0x48] sm:$0xff]
    %v158 = vld [vmem:[%s4 + $0x50] sm:$0xff]
    %v159 = vld [vmem:[%s4 + $0x58] sm:$0xff]
    %v160 = vld [vmem:[%s4 + $0x60] sm:$0xff]
    %v161 = vld [vmem:[%s4 + $0x68] sm:$0xff]
    %v162 = vld [vmem:[%s4 + $0x70] sm:$0xff]
    %v163 = vld [vmem:[%s4 + $0x78] sm:$0xff]
    %v164 = vld [vmem:[%s4 + $0x80] sm:$0xff]
    %v165 = vld [vmem:[%s4 + $0x88] sm:$0xff]
    %v166 = vld [vmem:[%s4 + $0x90] sm:$0xff]
    %v167 = vld [vmem:[%s4 + $0x98] sm:$0xff]
    %168 = vmatpush.msra.mxu0 %v163
    %169 = vmatpush.msra.mxu0 %v162
    %170 = vmatpush.msra.mxu0 %v161
    %171 = vmatpush.msra.mxu0 %v160
    %172 = vmatpush.msra.mxu0 %v159
    %173 = vmatpush.msra.mxu0 %v158
    %174 = vmatpush.msra.mxu0 %v157
    %175 = vmatpush.msra.mxu0 %v156
    %176 = vmatpush.msra.mxu0 %v155
    %177 = vmatpush.msra.mxu0 %v154
    %178 = vmatpush.msra.mxu0 %v153
    %179 = vmatpush.msra.mxu0 %v152
    %180 = vmatpush.msra.mxu0 %v151
    %181 = vmatpush.msra.mxu0 %v150
    %182 = vmatpush.msra.mxu0 %v149
    %183 = vmatpush.msra.mxu0 %v148
    %184 = vmatmul.f32.gmra.mxu0 %v60
    %v185 = vpop.f32.mrf.mxu0
    %v186 = vadd.f32 0.0, %v185
    %187 = vmatmul.f32.gmra.mxu0 %v62
    %v188 = vpop.f32.mrf.mxu0
    %v189 = vadd.f32 0.0, %v188
    %190 = vmatmul.f32.gmra.mxu0 %v64
    %v191 = vpop.f32.mrf.mxu0
    %v192 = vadd.f32 0.0, %v191
    %193 = vdwg.mxu0
    %194 = vmatpush.msra.mxu0 0.0
    %195 = vmatpush.msra.mxu0 0.0
    %196 = vmatpush.msra.mxu0 0.0
    %197 = vmatpush.msra.mxu0 0.0
    %198 = vmatpush.msra.mxu0 0.0
    %199 = vmatpush.msra.mxu0 0.0
    %200 = vmatpush.msra.mxu0 0.0
    %201 = vmatpush.msra.mxu0 0.0
    %202 = vmatpush.msra.mxu0 0.0
    %203 = vmatpush.msra.mxu0 0.0
    %204 = vmatpush.msra.mxu0 0.0
    %205 = vmatpush.msra.mxu0 0.0
    %206 = vmatpush.msra.mxu0 %v167
    %207 = vmatpush.msra.mxu0 %v166
    %208 = vmatpush.msra.mxu0 %v165
    %209 = vmatpush.msra.mxu0 %v164
    %210 = vmatmul.f32.gmra.mxu0 %v88
    %v211 = vpop.f32.mrf.mxu0
    %v212 = vadd.f32 %v186, %v211
    %213 = vmatmul.f32.gmra.mxu0 %v91
    %v214 = vpop.f32.mrf.mxu0
    %v215 = vadd.f32 %v189, %v214
    %216 = vmatmul.f32.gmra.mxu0 %v94
    %v217 = vpop.f32.mrf.mxu0
    %v218 = vadd.f32 %v192, %v217
    %219 = vdwg.mxu0
    %v220 = vmax.f32 %v140, %v212
    %v221 = vmax.f32 %v143, %v215
    %v222 = vmax.f32 %v146, %v218
    %v226 = vrot.slane %v220, 2
    %v227 = vrot.slane %v220, 4
    %v228 = vrot.slane %v220, 6
    %v229 = vrot.slane %v221, 2
    %v230 = vrot.slane %v221, 4
    %v231 = vrot.slane %v221, 6
    %v232 = vrot.slane %v222, 2
    %v240 = vrot.slane %v220, 7
    %v241 = vrot.slane %v240, 2
    %v242 = vrot.slane %v226, 7
    %v243 = vrot.slane %v242, 2
    %v244 = vrot.slane %v227, 7
    %v245 = vrot.slane %v244, 2
    %v246 = vrot.slane %v228, 7
    %v247 = vrot.slane %v246, 2
    %v248 = vrot.slane %v221, 7
    %v249 = vrot.slane %v248, 2
    %v250 = vrot.slane %v229, 7
    %v251 = vrot.slane %v250, 2
    %v252 = vrot.slane %v230, 7
    %v253 = vrot.slane %v252, 2
    %v254 = vrot.slane %v231, 7
    %v255 = vrot.slane %v254, 2
    %v256 = vrot.slane %v222, 7
    %v257 = vrot.slane %v256, 2
    %v258 = vrot.slane %v232, 7
    %v259 = vrot.slane %v258, 2
    %v270 = vmax.f32 %v220, %v241
    %v271 = vmax.f32 %v226, %v243
    %v272 = vmax.f32 %v227, %v245
    %v273 = vmax.f32 %v228, %v247
    %v274 = vmax.f32 %v221, %v249
    %v275 = vmax.f32 %v229, %v251
    %v276 = vmax.f32 %v230, %v253
    %v277 = vmax.f32 %v231, %v255
    %v278 = vmax.f32 %v222, %v257
    %v279 = vmax.f32 %v232, %v259
    %v280 = vld [vmem:[%s5] sm:$0xff]
    %v281 = vld [vmem:[%s5 + $0x8] sm:$0xff]
    %v282 = vld [vmem:[%s5 + $0x10] sm:$0xff]
    %v283 = vld [vmem:[%s5 + $0x18] sm:$0xff]
    %v284 = vld [vmem:[%s5 + $0x20] sm:$0xff]
    %v285 = vld [vmem:[%s5 + $0x28] sm:$0xff]
    %v286 = vld [vmem:[%s5 + $0x30] sm:$0xff]
    %v287 = vld [vmem:[%s5 + $0x38] sm:$0xff]
    %v288 = vld [vmem:[%s5 + $0x40] sm:$0xff]
    %v289 = vld [vmem:[%s5 + $0x48] sm:$0xff]
    %v290 = vld [vmem:[%s6] sm:$0x1]
    %v292 = vperm.slane %v290, 0
    %v304 = vperm.slane %v270, 0
    %v305 = vperm.slane %v271, 0
    %v306 = vperm.slane %v272, 0
    %v307 = vperm.slane %v273, 0
    %v308 = vperm.slane %v274, 0
    %v309 = vperm.slane %v275, 0
    %v310 = vperm.slane %v276, 0
    %v311 = vperm.slane %v277, 0
    %v312 = vperm.slane %v278, 0
    %v313 = vperm.slane %v279, 0
    %vm314 = vcmask 1041409
    %v315 = vsel %vm314, %v305, %v304
    %vm316 = vcmask 1042434
    %v317 = vsel %vm316, %v306, %v315
    %vm318 = vcmask 1043459
    %v319 = vsel %vm318, %v307, %v317
    %vm320 = vcmask 1044484
    %v321 = vsel %vm320, %v308, %v319
    %vm322 = vcmask 1045509
    %v323 = vsel %vm322, %v309, %v321
    %vm324 = vcmask 1046534
    %v325 = vsel %vm324, %v310, %v323
    %vm326 = vcmask 1047559
    %v327 = vsel %vm326, %v311, %v325
    %v328 = vsel %vm314, %v313, %v312
    %vm329 = vcmask 654336
    %v330 = vsel %vm329, %v327, 0
    %v332 = vsel %vm329, %v328, 0
    %334 = vmatpush.msra.mxu0 0.0
    %335 = vmatpush.msra.mxu0 0.0
    %336 = vmatpush.msra.mxu0 0.0
    %337 = vmatpush.msra.mxu0 0.0
    %338 = vmatpush.msra.mxu0 0.0
    %339 = vmatpush.msra.mxu0 0.0
    %340 = vmatpush.msra.mxu0 %v289
    %341 = vmatpush.msra.mxu0 %v288
    %342 = vmatpush.msra.mxu0 %v287
    %343 = vmatpush.msra.mxu0 %v286
    %344 = vmatpush.msra.mxu0 %v285
    %345 = vmatpush.msra.mxu0 %v284
    %346 = vmatpush.msra.mxu0 %v283
    %347 = vmatpush.msra.mxu0 %v282
    %348 = vmatpush.msra.mxu0 %v281
    %349 = vmatpush.msra.mxu0 %v280
    %350 = vmatmul.f32.gmra.mxu0 %v330
    %v351 = vpop.f32.mrf.mxu0
    %v352 = vadd.f32 %v292, %v351
    %353 = vmatmul.f32.gmra.mxu0 %v332
    %v354 = vpop.f32.mrf.mxu0
    %v355 = vadd.f32 %v292, %v354
    %356 = vdwg.mxu0
    %v357 = vmax.f32 %v352, 0.0
    %v358 = vmax.f32 %v355, 0.0
    %v361 = vrot.slane %v357, 1
    %v362 = vrot.slane %v357, 2
    %v363 = vrot.slane %v357, 3
    %v364 = vrot.slane %v357, 4
    %v365 = vrot.slane %v357, 5
    %v366 = vrot.slane %v357, 6
    %v367 = vrot.slane %v357, 7
    %v368 = vrot.slane %v358, 1
    %369 = vst [vmem:[#allocation1] ss:$9 sm:$0xff] %v357
    %s370 = scalar_lea.vmem [#allocation1], 1
    %371 = vst [vmem:[%s370] ss:$9 sm:$0xff] %v361
    %s372 = scalar_lea.vmem [#allocation1], 2
    %373 = vst [vmem:[%s372] ss:$9 sm:$0xff] %v362
    %s374 = scalar_lea.vmem [#allocation1], 3
    %375 = vst [vmem:[%s374] ss:$9 sm:$0xff] %v363
    %s376 = scalar_lea.vmem [#allocation1], 4
    %377 = vst [vmem:[%s376] ss:$9 sm:$0xff] %v364
    %v378 = vld [vmem:[#allocation1] sm:$0xff]
    %379 = vst [vmem:[#allocation1] ss:$9 sm:$0xff] %v365
    %380 = vst [vmem:[%s370] ss:$9 sm:$0xff] %v366
    %381 = vst [vmem:[%s372] ss:$9 sm:$0xff] %v367
    %382 = vst [vmem:[%s374] ss:$9 sm:$0xff] %v358
    %383 = vst [vmem:[%s376] ss:$9 sm:$0xff] %v368
    %v384 = vld [vmem:[#allocation1] sm:$0xff]
    %vm387 = vcmask 405504
    %v388 = vsel %vm387, %v378, 0.0
    %v389 = vrot.slane %v388, 4
    %v390 = vadd.f32 %v388, %v389
    %v391 = vrot.slane %v390, 2
    %v392 = vadd.f32 %v390, %v391
    %v393 = vrot.slane %v392, 1
    %v394 = vadd.f32 %v392, %v393
    %v395 = vsel %vm387, %v384, 0.0
    %v396 = vrot.slane %v395, 4
    %v397 = vadd.f32 %v395, %v396
    %v398 = vrot.slane %v397, 2
    %v399 = vadd.f32 %v397, %v398
    %v400 = vrot.slane %v399, 1
    %v401 = vadd.f32 %v399, %v400
    %v402 = vld [vmem:[%s7] sm:$0xff]
    %v403 = vld [vmem:[%s7 + $0x8] sm:$0xff]
    %v404 = vld [vmem:[%s7 + $0x10] sm:$0xff]
    %v405 = vld [vmem:[%s7 + $0x18] sm:$0xff]
    %v406 = vld [vmem:[%s7 + $0x20] sm:$0xff]
    %v407 = vld [vmem:[%s7 + $0x28] sm:$0xff]
    %v408 = vld [vmem:[%s7 + $0x30] sm:$0x3]
    %v411 = vsel %vm314, %v401, %v394
    %vm412 = vcmask 408576
    %v413 = vsel %vm412, %v411, 0
    %vm415 = vcmask 1041408
    %v417 = vsel %vm415, %v408, 0
    %419 = vmatpush.msra.mxu0 0.0
    %420 = vmatpush.msra.mxu0 0.0
    %421 = vmatpush.msra.mxu0 0.0
    %422 = vmatpush.msra.mxu0 0.0
    %423 = vmatpush.msra.mxu0 0.0
    %424 = vmatpush.msra.mxu0 0.0
    %425 = vmatpush.msra.mxu0 0.0
    %426 = vmatpush.msra.mxu0 0.0
    %427 = vmatpush.msra.mxu0 0.0
    %428 = vmatpush.msra.mxu0 %v417
    %429 = vmatpush.msra.mxu0 %v407
    %430 = vmatpush.msra.mxu0 %v406
    %431 = vmatpush.msra.mxu0 %v405
    %432 = vmatpush.msra.mxu0 %v404
    %433 = vmatpush.msra.mxu0 %v403
    %434 = vmatpush.msra.mxu0 %v402
    %435 = vmatmul.f32.gmra.mxu0 %v413
    %v436 = vpop.f32.mrf.mxu0
    %v437 = vadd.f32 0.0, %v436
    %438 = vdwg.mxu0
    %v439 = vmul.f32 %v437, 0.04
    %vm440 = vcmask 74752
    %441 = vst.msk [vmem:[#allocation2] sm:$0x3] %vm440, %v439
    // Predicated region
    $region34: #{gap_lenet_forward.5} parent=1 // pred_check
      _
    $region35: #{gap_lenet_forward.5} parent=1 // pred_check_branch
      %443 = sbr.rel (0) target = $region37
    $region36: #{gap_lenet_forward.5} parent=1 // pred_region
      %445 = vsyncadd [#allocation3], 0
      %s447 = sshll.u32 [#allocation2], 4
      %s448 = int_to_ptr.vmem [resolvable:$true] %s447
      %s449 = sshll.u32 %s8, 4
      %s450 = int_to_ptr.hbm [resolvable:$true] %s449
      %452 = dma.vmem_to_hbm [thread:$0]  %s448, 32, %s450, [#allocation3]
    $region37: #{gap_lenet_forward.5} parent=1 // pred_fallthru
      _
    // Predicated region
    $region38: #{gap_lenet_forward.5} parent=1 // pred_check
      _
    $region39: #{gap_lenet_forward.5} parent=1 // pred_check_branch
      %454 = sbr.rel (0) target = $region41
    $region40: #{gap_lenet_forward.5} parent=1 // pred_region
      %456 = dma.done [#allocation3], 32
    $region41: #{gap_lenet_forward.5} parent=1 // pred_fallthru
      _
    %457 = vsyncpa [#allocation3], 1

</llo_original>
